<compile_context>
chip_gen: v5e
topology: v5e:2x2
jax: 0.10.0
libtpu: 0.0.40
codegen_flags: <defaults>
</compile_context>

<pallas_src>
import functools

import jax
import jax.numpy as jnp
from jax.experimental import pallas as pl
from jax.experimental.pallas import tpu as pltpu

_VMEM_LIMIT = 64 * 1024 * 1024  # fits v7x physical VMEM; above v5e/v6e scoped defaults


def _round_up(x, m):
    return (x + m - 1) // m * m


def _largest_divisor(n, cap):
    cap = min(cap, n)
    for d in range(cap, 0, -1):
        if n % d == 0:
            return d
    return 1


def fold_bn(gamma, beta, mean, var, eps=1e-5):
    scale = gamma / jnp.sqrt(var + eps)
    bias = beta - mean * scale
    return scale.astype(jnp.float32), bias.astype(jnp.float32)


# ----------------------------------------------------------------------------
# Kernel 1: fused (X @ W_foldedBN) + bias [+ ReLU]   (conv1 1x1)
# ----------------------------------------------------------------------------
def _matmul_bias_act_kernel(x_ref, w_ref, b_ref, o_ref, *, act):
    y = jnp.dot(x_ref[...], w_ref[...], preferred_element_type=jnp.float32)
    y = y + b_ref[...]
    if act == "relu":
        y = jnp.maximum(y, 0.0)
    o_ref[...] = y.astype(o_ref.dtype)


def fused_matmul(x2d, w, bias, act="none", out_dtype=None, block_m=512):
    M, K = x2d.shape
    Kw, Nc = w.shape
    assert K == Kw
    out_dtype = out_dtype or x2d.dtype
    if M <= block_m:
        bm, Mp = M, M
    else:
        bm = block_m
        Mp = _round_up(M, bm)
        if Mp != M:
            x2d = jnp.pad(x2d, ((0, Mp - M), (0, 0)))
    out = pl.pallas_call(
        functools.partial(_matmul_bias_act_kernel, act=act),
        out_shape=jax.ShapeDtypeStruct((Mp, Nc), out_dtype),
        grid_spec=pltpu.PrefetchScalarGridSpec(
            num_scalar_prefetch=0,
            grid=(Mp // bm,),
            in_specs=[
                pl.BlockSpec((bm, K), lambda i: (i, 0)),
                pl.BlockSpec((K, Nc), lambda i: (0, 0)),
                pl.BlockSpec((1, Nc), lambda i: (0, 0)),
            ],
            out_specs=pl.BlockSpec((bm, Nc), lambda i: (i, 0)),
        ),
        compiler_params=pltpu.CompilerParams(
            dimension_semantics=("parallel",),
            vmem_limit_bytes=_VMEM_LIMIT,
        ),
    )(x2d, w, bias.reshape(1, Nc).astype(jnp.float32))
    return out[:M] if Mp != M else out


# ----------------------------------------------------------------------------
# Kernel 2: depthwise 3x3 conv (BN folded into weights) + ReLU, with the SE
#           global-average-pool fused into the epilogue (accumulator output
#           revisited across the row-tile axis).
# ----------------------------------------------------------------------------
def _dw_epilogue(acc, b_ref, out_ref, pool_ref, inv_area):
    y = jnp.maximum(acc + b_ref[0], 0.0)
    out_ref[0] = y.astype(out_ref.dtype)
    t = pl.program_id(1)

    @pl.when(t == 0)
    def _():
        pool_ref[...] = jnp.zeros_like(pool_ref)

    pool_ref[...] = pool_ref[...] + jnp.sum(y, axis=(0, 1))[None, None, :]

    @pl.when(t == pl.num_programs(1) - 1)
    def _():
        pool_ref[...] = pool_ref[...] * inv_area


def _dw_s1_kernel(win_ref, w_ref, b_ref, out_ref, pool_ref, *, d, TH, Wo, inv_area):
    # win_ref: (1, TH + 2d, Wp, C) row window with halo; stride 1.
    C = w_ref.shape[-1]
    w = w_ref[...].astype(jnp.float32)                      # (3, 3, C)
    acc = jnp.zeros((TH, Wo, C), jnp.float32)
    for ky in range(3):
        for kx in range(3):
            tap = win_ref[0, ky * d: ky * d + TH, kx * d: kx * d + Wo, :]
            acc = acc + tap.astype(jnp.float32) * w[ky, kx]
    _dw_epilogue(acc, b_ref, out_ref, pool_ref, inv_area)


def _dw_s2_kernel(e_ref, od_ref, w_ref, b_ref, out_ref, pool_ref, *, Wo, inv_area):
    # stride 2: e_ref = even-column phase (3, TH, Wo+1, C),
    #           od_ref = odd-column phase (3, TH, Wo, C); rows pre-strided per ky.
    TH = e_ref.shape[1]
    C = w_ref.shape[-1]
    w = w_ref[...].astype(jnp.float32)
    acc = jnp.zeros((TH, Wo, C), jnp.float32)
    for ky in range(3):
        acc = acc + e_ref[ky, :, 0:Wo, :].astype(jnp.float32) * w[ky, 0]
        acc = acc + od_ref[ky].astype(jnp.float32) * w[ky, 1]
        acc = acc + e_ref[ky, :, 1:Wo + 1, :].astype(jnp.float32) * w[ky, 2]
    _dw_epilogue(acc, b_ref, out_ref, pool_ref, inv_area)


def depthwise3x3_bn_relu_pool(x, w_dw, bias, stride, dilation, out_dtype, h_tile=32):
    """Returns (conv2 output (N,Ho,Wo,C), SE global-average pool (N,C) f32)."""
    N, H, W, C = x.shape
    d = dilation
    pad = ((stride - 1) + d * 2) // 2          # timm get_padding for k=3
    xp = jnp.pad(x, ((0, 0), (pad, pad), (pad, pad), (0, 0)))

    if stride == 1:
        Ho, Wo = H, W
        TH = _largest_divisor(Ho, h_tile)
        nT = Ho // TH
        # Overlapping row windows (halo of 2d rows) — only ~(TH+2d)/TH duplication,
        # no 9x tap materialization.
        win = jnp.stack([xp[:, t * TH: t * TH + TH + 2 * d] for t in range(nT)], axis=1)
        win = win.reshape(N * nT, TH + 2 * d, W + 2 * d, C)
        kern = functools.partial(_dw_s1_kernel, d=d, TH=TH, Wo=Wo,
                                 inv_area=1.0 / float(Ho * Wo))
        in_specs = [
            pl.BlockSpec((1, TH + 2 * d, W + 2 * d, C),
                         lambda n, t, _nT=nT: (n * _nT + t, 0, 0, 0)),
            pl.BlockSpec((3, 3, C), lambda n, t: (0, 0, 0)),
            pl.BlockSpec((1, 1, C), lambda n, t: (0, 0, 0)),
        ]
        args = (win, w_dw, bias.reshape(1, 1, C))
    else:
        if stride != 2 or d != 1:
            # TODO(synk): stride>2 or dilated strided depthwise not implemented
            raise NotImplementedError("depthwise path supports stride in (1,2), dilation=1 for stride 2")
        Ho = (H + 2 * pad - 3) // 2 + 1
        Wo = (W + 2 * pad - 3) // 2 + 1
        # Even/odd column phases + 3 row-plane strided views: the kernel then only
        # needs static contiguous slices (no in-kernel strided access).
        xe = xp[:, :, 0::2, :]
        xo = xp[:, :, 1::2, :]
        ev = jnp.stack([xe[:, ky: ky + 2 * Ho - 1: 2, : Wo + 1] for ky in range(3)], axis=1)
        od = jnp.stack([xo[:, ky: ky + 2 * Ho - 1: 2, : Wo] for ky in range(3)], axis=1)
        ev = ev.reshape(N * 3, Ho, Wo + 1, C)
        od = od.reshape(N * 3, Ho, Wo, C)
        TH = _largest_divisor(Ho, h_tile)
        nT = Ho // TH
        kern = functools.partial(_dw_s2_kernel, Wo=Wo, inv_area=1.0 / float(Ho * Wo))
        in_specs = [
            pl.BlockSpec((3, TH, Wo + 1, C), lambda n, t: (n, t, 0, 0)),
            pl.BlockSpec((3, TH, Wo, C), lambda n, t: (n, t, 0, 0)),
            pl.BlockSpec((3, 3, C), lambda n, t: (0, 0, 0)),
            pl.BlockSpec((1, 1, C), lambda n, t: (0, 0, 0)),
        ]
        args = (ev, od, w_dw, bias.reshape(1, 1, C))

    out, pooled = pl.pallas_call(
        kern,
        out_shape=(jax.ShapeDtypeStruct((N, Ho, Wo, C), out_dtype),
                   jax.ShapeDtypeStruct((N, 1, C), jnp.float32)),
        grid_spec=pltpu.PrefetchScalarGridSpec(
            num_scalar_prefetch=0,
            grid=(N, nT),
            in_specs=in_specs,
            out_specs=(pl.BlockSpec((1, TH, Wo, C), lambda n, t: (n, t, 0, 0)),
                       pl.BlockSpec((1, 1, C), lambda n, t: (n, 0, 0))),
        ),
        compiler_params=pltpu.CompilerParams(
            dimension_semantics=("parallel", "arbitrary"),
            vmem_limit_bytes=_VMEM_LIMIT,
        ),
    )(*args)
    return out, pooled.reshape(N, C)


# ----------------------------------------------------------------------------
# Kernel 3: SE gate — fc1 + ReLU + fc2 + sigmoid, fused into one tiny kernel.
# ----------------------------------------------------------------------------
def _se_kernel(p_ref, w1_ref, b1_ref, w2_ref, b2_ref, g_ref):
    h = jnp.dot(p_ref[...], w1_ref[...], preferred_element_type=jnp.float32) + b1_ref[...]
    h = jnp.maximum(h, 0.0)
    g = jnp.dot(h, w2_ref[...], preferred_element_type=jnp.float32) + b2_ref[...]
    g_ref[...] = jax.nn.sigmoid(g)


def se_gate(pooled, w1, b1, w2, b2):
    N, Cmid = pooled.shape
    rd = w1.shape[1]
    return pl.pallas_call(
        _se_kernel,
        out_shape=jax.ShapeDtypeStruct((N, Cmid), jnp.float32),
        grid_spec=pltpu.PrefetchScalarGridSpec(
            num_scalar_prefetch=0,
            grid=(1,),
            in_specs=[
                pl.BlockSpec((N, Cmid), lambda i: (0, 0)),
                pl.BlockSpec((Cmid, rd), lambda i: (0, 0)),
                pl.BlockSpec((1, rd), lambda i: (0, 0)),
                pl.BlockSpec((rd, Cmid), lambda i: (0, 0)),
                pl.BlockSpec((1, Cmid), lambda i: (0, 0)),
            ],
            out_specs=pl.BlockSpec((N, Cmid), lambda i: (0, 0)),
        ),
        compiler_params=pltpu.CompilerParams(vmem_limit_bytes=_VMEM_LIMIT),
    )(pooled, w1, b1.reshape(1, rd), w2, b2.reshape(1, Cmid))


# ----------------------------------------------------------------------------
# Kernel 4: SE-gate * x -> conv3 (1x1, folded BN) -> + residual (downsample
#           1x1 conv computed in-kernel, or identity) -> final ReLU.
# ----------------------------------------------------------------------------
def _conv3_ds_kernel(x_ref, g_ref, w3_ref, b3_ref, sc_ref, wd_ref, bd_ref, out_ref):
    xg = x_ref[0].astype(jnp.float32) * g_ref[0].astype(jnp.float32)
    y = jnp.dot(xg.astype(w3_ref.dtype), w3_ref[...],
                preferred_element_type=jnp.float32) + b3_ref[...]
    r = jnp.dot(sc_ref[0], wd_ref[...],
                preferred_element_type=jnp.float32) + bd_ref[...]
    out_ref[0] = jnp.maximum(y + r, 0.0).astype(out_ref.dtype)


def _conv3_id_kernel(x_ref, g_ref, w3_ref, b3_ref, res_ref, out_ref):
    xg = x_ref[0].astype(jnp.float32) * g_ref[0].astype(jnp.float32)
    y = jnp.dot(xg.astype(w3_ref.dtype), w3_ref[...],
                preferred_element_type=jnp.float32) + b3_ref[...]
    out_ref[0] = jnp.maximum(y + res_ref[0].astype(jnp.float32), 0.0).astype(out_ref.dtype)


def conv3_gate_residual(x2f, gate, w3, b3, res, ds_w=None, ds_b=None,
                        out_dtype=None, block_s=512):
    N, S, Cmid = x2f.shape
    Cout = w3.shape[1]
    out_dtype = out_dtype or x2f.dtype
    if S <= block_s:
        ts, Sp = S, S
    else:
        ts = block_s
        Sp = _round_up(S, ts)
    if Sp != S:
        x2f = jnp.pad(x2f, ((0, 0), (0, Sp - S), (0, 0)))
        res = jnp.pad(res, ((0, 0), (0, Sp - S), (0, 0)))
    gate3 = gate.reshape(N, 1, Cmid).astype(jnp.float32)
    b3r = b3.reshape(1, Cout).astype(jnp.float32)
    common_specs = [
        pl.BlockSpec((1, ts, Cmid), lambda n, t: (n, t, 0)),
        pl.BlockSpec((1, 1, Cmid), lambda n, t: (n, 0, 0)),
        pl.BlockSpec((Cmid, Cout), lambda n, t: (0, 0)),
        pl.BlockSpec((1, Cout), lambda n, t: (0, 0)),
    ]
    if ds_w is not None:
        Cin = res.shape[-1]
        kern = _conv3_ds_kernel
        in_specs = common_specs + [
            pl.BlockSpec((1, ts, Cin), lambda n, t: (n, t, 0)),
            pl.BlockSpec((Cin, Cout), lambda n, t: (0, 0)),
            pl.BlockSpec((1, Cout), lambda n, t: (0, 0)),
        ]
        args = (x2f, gate3, w3, b3r, res, ds_w,
                ds_b.reshape(1, Cout).astype(jnp.float32))
    else:
        kern = _conv3_id_kernel
        in_specs = common_specs + [
            pl.BlockSpec((1, ts, Cout), lambda n, t: (n, t, 0)),
        ]
        args = (x2f, gate3, w3, b3r, res)
    out = pl.pallas_call(
        kern,
        out_shape=jax.ShapeDtypeStruct((N, Sp, Cout), out_dtype),
        grid_spec=pltpu.PrefetchScalarGridSpec(
            num_scalar_prefetch=0,
            grid=(N, Sp // ts),
            in_specs=in_specs,
            out_specs=pl.BlockSpec((1, ts, Cout), lambda n, t: (n, t, 0)),
        ),
        compiler_params=pltpu.CompilerParams(
            dimension_semantics=("parallel", "parallel"),
            vmem_limit_bytes=_VMEM_LIMIT,
        ),
    )(*args)
    return out[:, :S] if Sp != S else out


# ----------------------------------------------------------------------------
# Bottleneck block and RegStage forward (glue).
# ----------------------------------------------------------------------------
def prepare_block_params(p, cdtype):
    """Fold BN scale into weights, cast matmul weights to the compute dtype."""
    q = {
        "conv1_w": (p["conv1_w"] * p["bn1_scale"][None, :]).astype(cdtype),
        "conv1_b": p["bn1_bias"].reshape(1, -1).astype(jnp.float32),
        "conv2_w": (p["conv2_w"] * p["bn2_scale"][None, None, :]).astype(jnp.float32),
        "conv2_b": p["bn2_bias"].astype(jnp.float32),
        "se_fc1_w": p["se_fc1_w"].astype(jnp.float32),
        "se_fc1_b": p["se_fc1_b"].astype(jnp.float32),
        "se_fc2_w": p["se_fc2_w"].astype(jnp.float32),
        "se_fc2_b": p["se_fc2_b"].astype(jnp.float32),
        "conv3_w": (p["conv3_w"] * p["bn3_scale"][None, :]).astype(cdtype),
        "conv3_b": p["bn3_bias"].reshape(1, -1).astype(jnp.float32),
    }
    if "ds_w" in p:
        q["ds_w"] = (p["ds_w"] * p["ds_bn_scale"][None, :]).astype(cdtype)
        q["ds_b"] = p["ds_bn_bias"].reshape(1, -1).astype(jnp.float32)
    return q


def bottleneck_forward(x, q, *, stride, dilation, cdtype):
    N, H, W, Cin = x.shape
    Cmid = q["conv1_w"].shape[1]
    Cout = q["conv3_w"].shape[1]

    # conv1: 1x1 conv + folded BN + ReLU (MXU, bf16 operands / f32 accumulate)
    x1 = fused_matmul(x.reshape(N * H * W, Cin), q["conv1_w"], q["conv1_b"],
                      act="relu", out_dtype=cdtype)
    x1 = x1.reshape(N, H, W, Cmid)

    # conv2: depthwise 3x3 + folded BN + ReLU, with fused SE average pool
    x2, pooled = depthwise3x3_bn_relu_pool(x1, q["conv2_w"], q["conv2_b"],
                                           stride, dilation, out_dtype=cdtype)
    _, Ho, Wo, _ = x2.shape
    S = Ho * Wo
    x2f = x2.reshape(N, S, Cmid)

    # SE gate (fc1 + ReLU + fc2 + sigmoid)
    gate = se_gate(pooled, q["se_fc1_w"], q["se_fc1_b"], q["se_fc2_w"], q["se_fc2_b"])

    # conv3 + folded BN, gated input, fused residual (downsample conv or identity),
    # final ReLU.  drop_path_rate=0 -> identity.
    if "ds_w" in q:
        sc = x[:, ::stride, ::stride, :].reshape(N, S, Cin)
        out = conv3_gate_residual(x2f, gate, q["conv3_w"], q["conv3_b"], sc,
                                  ds_w=q["ds_w"], ds_b=q["ds_b"], out_dtype=cdtype)
    else:
        assert stride == 1 and Cin == Cout
        out = conv3_gate_residual(x2f, gate, q["conv3_w"], q["conv3_b"],
                                  x.reshape(N, S, Cout), out_dtype=cdtype)
    return out.reshape(N, Ho, Wo, Cout)


def regstage_forward(x_nchw, stage_params, *, stride=2, dilation=1,
                     compute_dtype=jnp.bfloat16):
    x = jnp.transpose(x_nchw, (0, 2, 3, 1)).astype(compute_dtype)  # NCHW -> NHWC
    first_dilation = 1 if dilation in (1, 2) else 2
    for i, p in enumerate(stage_params):
        q = prepare_block_params(p, compute_dtype)
        block_stride = stride if i == 0 else 1
        x = bottleneck_forward(x, q, stride=block_stride,
                               dilation=first_dilation, cdtype=compute_dtype)
        first_dilation = dilation
    return jnp.transpose(x, (0, 3, 1, 2)).astype(x_nchw.dtype)


# ----------------------------------------------------------------------------
# Deterministic parameter construction (inference: BN uses running stats).
# ----------------------------------------------------------------------------
def make_stage_params(key, depth, in_chs, out_chs, stride,
                      bottle_ratio=1.0, group_size=1, se_ratio=0.25):
    assert group_size == 1, "kernels implement the default depthwise (group_size=1) case"
    bott = int(round(out_chs * bottle_ratio))
    blocks = []
    for i in range(depth):
        block_in = in_chs if i == 0 else out_chs
        block_stride = stride if i == 0 else 1
        key, sub = jax.random.split(key)
        keys = iter(jax.random.split(sub, 32))

        def w(shape, scale=0.1):
            return (scale * jax.random.normal(next(keys), shape)).astype(jnp.float32)

        def bn(c):
            gamma = 1.0 + 0.1 * jax.random.normal(next(keys), (c,))
            beta = 0.1 * jax.random.normal(next(keys), (c,))
            mean = 0.05 * jax.random.normal(next(keys), (c,))
            var = 0.5 + jax.random.uniform(next(keys), (c,))
            return fold_bn(gamma, beta, mean, var)

        se_chs = int(round(block_in * se_ratio))
        p = {
            "conv1_w": w((block_in, bott)),            # 1x1 conv, stored (Cin, Cmid)
            "conv2_w": w((3, 3, bott)),                # depthwise 3x3, (kh, kw, C)
            "se_fc1_w": w((bott, se_chs)),
            "se_fc1_b": w((se_chs,), 0.05),
            "se_fc2_w": w((se_chs, bott)),
            "se_fc2_b": w((bott,), 0.05),
            "conv3_w": w((bott, out_chs)),
        }
        p["bn1_scale"], p["bn1_bias"] = bn(bott)
        p["bn2_scale"], p["bn2_bias"] = bn(bott)
        p["bn3_scale"], p["bn3_bias"] = bn(out_chs)
        if block_in != out_chs or block_stride != 1:   # create_shortcut('conv1x1')
            p["ds_w"] = w((block_in, out_chs))
            p["ds_bn_scale"], p["ds_bn_bias"] = bn(out_chs)
        blocks.append(p)
    return blocks


if __name__ == "__main__":
    # Small deterministic config: depth=2 (first block stride-2 + conv1x1
    # downsample, second block stride-1 + identity shortcut).
    key = jax.random.PRNGKey(0)
    kx, kp = jax.random.split(key)
    N, Cin, H, W = 2, 8, 16, 16
    Cout, stride, depth = 16, 2, 2

    x = jax.random.normal(kx, (N, Cin, H, W), dtype=jnp.float32)  # NCHW like PyTorch
    params = make_stage_params(kp, depth, Cin, Cout, stride=stride)

    fwd = jax.jit(functools.partial(regstage_forward, stride=stride, dilation=1))
    y = jax.block_until_ready(fwd(x, params))

    assert y.shape == (N, Cout, H // stride, W // stride), y.shape
    assert bool(jnp.all(jnp.isfinite(y)))
    assert bool(jnp.all(y >= 0.0))  # final ReLU of the last block
    print("KERNEL_OK")
</pallas_src>

<mosaic_0001>
module attributes {stable_mosaic.version = 11 : i64} {
  func.func @_matmul_bias_act_kernel(%arg0: i32, %arg1: memref<512x8xbf16, #tpu.memory_space<vmem>>, %arg2: memref<8x16xbf16, #tpu.memory_space<vmem>>, %arg3: memref<1x16xf32, #tpu.memory_space<vmem>>, %arg4: memref<512x16xbf16, #tpu.memory_space<vmem>>) attributes {dimension_semantics = [#tpu.dimension_semantics<parallel>], iteration_bounds = array<i64: 1>, scalar_prefetch = 0 : i64, scratch_operands = 0 : i64, tpu.core_type = #tpu.core_type<tc>, window_params = [{transform_indices = @transform_0, window_bounds = array<i64: 512, 8>}, {pipeline_mode = #tpu.pipeline_mode<synchronous>, transform_indices = @transform_1, window_bounds = array<i64: 8, 16>}, {pipeline_mode = #tpu.pipeline_mode<synchronous>, transform_indices = @transform_2, window_bounds = array<i64: 1, 16>}, {transform_indices = @transform_3, window_bounds = array<i64: 512, 16>}]} {
    %c0 = arith.constant 0 : index
    %c0_0 = arith.constant 0 : index
    %0 = vector.load %arg1[%c0, %c0_0] : memref<512x8xbf16, #tpu.memory_space<vmem>>, vector<512x8xbf16>
    %c0_1 = arith.constant 0 : index
    %c0_2 = arith.constant 0 : index
    %1 = vector.load %arg2[%c0_1, %c0_2] : memref<8x16xbf16, #tpu.memory_space<vmem>>, vector<8x16xbf16>
    %cst = arith.constant dense<0.000000e+00> : vector<512x16xf32>
    %2 = tpu.matmul %0, %1, %cst {dimension_numbers = #tpu.dot_dimension_numbers<[1], [0], [0], [1], [0, 0, 1, 1], [], []>} : vector<512x8xbf16>, vector<8x16xbf16>, vector<512x16xf32> -> vector<512x16xf32>
    %c0_3 = arith.constant 0 : index
    %c0_4 = arith.constant 0 : index
    %3 = vector.load %arg3[%c0_3, %c0_4] : memref<1x16xf32, #tpu.memory_space<vmem>>, vector<1x16xf32>
    %4 = vector.broadcast %3 : vector<1x16xf32> to vector<512x16xf32>
    %5 = arith.addf %2, %4 : vector<512x16xf32>
    %cst_5 = arith.constant 0.000000e+00 : f32
    %6 = vector.broadcast %cst_5 : f32 to vector<512x16xf32>
    %7 = arith.maximumf %5, %6 : vector<512x16xf32>
    %8 = arith.truncf %7 : vector<512x16xf32> to vector<512x16xbf16>
    %c0_6 = arith.constant 0 : index
    %c0_7 = arith.constant 0 : index
    %9 = vector.load %arg4[%c0_6, %c0_7] : memref<512x16xbf16, #tpu.memory_space<vmem>>, vector<512x16xbf16>
    tpu.vector_store %arg4[%c0_6, %c0_7], %8 {strides = array<i32>} : memref<512x16xbf16, #tpu.memory_space<vmem>>, vector<512x16xbf16>,
    return
  }
  func.func @transform_0(%arg0: i32) -> (i32, i32) {
    %c0_i32 = arith.constant 0 : i32
    %c0_i32_0 = arith.constant 0 : i32
    return %arg0, %c0_i32 : i32, i32
  }
  func.func @transform_1(%arg0: i32) -> (i32, i32) {
    %c0_i32 = arith.constant 0 : i32
    %c0_i32_0 = arith.constant 0 : i32
    %c0_i32_1 = arith.constant 0 : i32
    return %c0_i32, %c0_i32_0 : i32, i32
  }
  func.func @transform_2(%arg0: i32) -> (i32, i32) {
    %c0_i32 = arith.constant 0 : i32
    %c0_i32_0 = arith.constant 0 : i32
    %c0_i32_1 = arith.constant 0 : i32
    return %c0_i32, %c0_i32_0 : i32, i32
  }
  func.func @transform_3(%arg0: i32) -> (i32, i32) {
    %c0_i32 = arith.constant 0 : i32
    %c0_i32_0 = arith.constant 0 : i32
    return %arg0, %c0_i32 : i32, i32
  }
}

module attributes {stable_mosaic.version = 11 : i64} {
  func.func @_dw_s2_kernel(%arg0: i32, %arg1: i32, %arg2: memref<3x8x9x16xbf16, #tpu.memory_space<vmem>>, %arg3: memref<3x8x8x16xbf16, #tpu.memory_space<vmem>>, %arg4: memref<3x3x16xf32, #tpu.memory_space<vmem>>, %arg5: memref<1x1x16xf32, #tpu.memory_space<vmem>>, %arg6: memref<1x8x8x16xbf16, #tpu.memory_space<vmem>>, %arg7: memref<1x1x16xf32, #tpu.memory_space<vmem>>) attributes {dimension_semantics = [#tpu.dimension_semantics<parallel>, #tpu.dimension_semantics<arbitrary>], iteration_bounds = array<i64: 2, 1>, scalar_prefetch = 0 : i64, scratch_operands = 0 : i64, tpu.core_type = #tpu.core_type<tc>, window_params = [{transform_indices = @transform_0, window_bounds = array<i64: 3, 8, 9, 16>}, {transform_indices = @transform_1, window_bounds = array<i64: 3, 8, 8, 16>}, {pipeline_mode = #tpu.pipeline_mode<synchronous>, transform_indices = @transform_2, window_bounds = array<i64: 3, 3, 16>}, {pipeline_mode = #tpu.pipeline_mode<synchronous>, transform_indices = @transform_3, window_bounds = array<i64: 1, 1, 16>}, {transform_indices = @transform_4, window_bounds = array<i64: 1, 8, 8, 16>}, {transform_indices = @transform_5, window_bounds = array<i64: 1, 1, 16>}]} {
    %c0 = arith.constant 0 : index
    %c0_0 = arith.constant 0 : index
    %c0_1 = arith.constant 0 : index
    %0 = vector.load %arg4[%c0, %c0_0, %c0_1] : memref<3x3x16xf32, #tpu.memory_space<vmem>>, vector<3x3x16xf32>
    %cst = arith.constant 0.000000e+00 : f32
    %1 = vector.broadcast %cst : f32 to vector<8x8x16xf32>
    %c0_2 = arith.constant 0 : index
    %c0_3 = arith.constant 0 : index
    %c0_4 = arith.constant 0 : index
    %c0_5 = arith.constant 0 : index
    %2 = vector.load %arg2[%c0_2, %c0_3, %c0_4, %c0_5] : memref<3x8x9x16xbf16, #tpu.memory_space<vmem>>, vector<1x8x8x16xbf16>
    %3 = vector.shape_cast %2 : vector<1x8x8x16xbf16> to vector<8x8x16xbf16>
    %4 = arith.extf %3 : vector<8x8x16xbf16> to vector<8x8x16xf32>
    %5 = vector.extract_strided_slice %0 {offsets = [0, 0, 0], sizes = [1, 1, 16], strides = [1, 1, 1]} : vector<3x3x16xf32> to vector<1x1x16xf32>
    %6 = vector.shape_cast %5 : vector<1x1x16xf32> to vector<16xf32>
    %7 = vector.shape_cast %6 : vector<16xf32> to vector<1x1x16xf32>
    %8 = vector.broadcast %7 : vector<1x1x16xf32> to vector<8x8x16xf32>
    %9 = arith.mulf %4, %8 : vector<8x8x16xf32>
    %10 = arith.addf %1, %9 : vector<8x8x16xf32>
    %c0_6 = arith.constant 0 : index
    %c0_7 = arith.constant 0 : index
    %c0_8 = arith.constant 0 : index
    %c0_9 = arith.constant 0 : index
    %11 = vector.load %arg3[%c0_6, %c0_7, %c0_8, %c0_9] : memref<3x8x8x16xbf16, #tpu.memory_space<vmem>>, vector<1x8x8x16xbf16>
    %12 = vector.shape_cast %11 : vector<1x8x8x16xbf16> to vector<8x8x16xbf16>
    %13 = arith.extf %12 : vector<8x8x16xbf16> to vector<8x8x16xf32>
    %14 = vector.extract_strided_slice %0 {offsets = [0, 1, 0], sizes = [1, 1, 16], strides = [1, 1, 1]} : vector<3x3x16xf32> to vector<1x1x16xf32>
    %15 = vector.shape_cast %14 : vector<1x1x16xf32> to vector<16xf32>
    %16 = vector.shape_cast %15 : vector<16xf32> to vector<1x1x16xf32>
    %17 = vector.broadcast %16 : vector<1x1x16xf32> to vector<8x8x16xf32>
    %18 = arith.mulf %13, %17 : vector<8x8x16xf32>
    %19 = arith.addf %10, %18 : vector<8x8x16xf32>
    %c0_10 = arith.constant 0 : index
    %c0_11 = arith.constant 0 : index
    %c1 = arith.constant 1 : index
    %c0_12 = arith.constant 0 : index
    %20 = vector.load %arg2[%c0_10, %c0_11, %c1, %c0_12] : memref<3x8x9x16xbf16, #tpu.memory_space<vmem>>, vector<1x8x8x16xbf16>
    %21 = vector.shape_cast %20 : vector<1x8x8x16xbf16> to vector<8x8x16xbf16>
    %22 = arith.extf %21 : vector<8x8x16xbf16> to vector<8x8x16xf32>
    %23 = vector.extract_strided_slice %0 {offsets = [0, 2, 0], sizes = [1, 1, 16], strides = [1, 1, 1]} : vector<3x3x16xf32> to vector<1x1x16xf32>
    %24 = vector.shape_cast %23 : vector<1x1x16xf32> to vector<16xf32>
    %25 = vector.shape_cast %24 : vector<16xf32> to vector<1x1x16xf32>
    %26 = vector.broadcast %25 : vector<1x1x16xf32> to vector<8x8x16xf32>
    %27 = arith.mulf %22, %26 : vector<8x8x16xf32>
    %28 = arith.addf %19, %27 : vector<8x8x16xf32>
    %c1_13 = arith.constant 1 : index
    %c0_14 = arith.constant 0 : index
    %c0_15 = arith.constant 0 : index
    %c0_16 = arith.constant 0 : index
    %29 = vector.load %arg2[%c1_13, %c0_14, %c0_15, %c0_16] : memref<3x8x9x16xbf16, #tpu.memory_space<vmem>>, vector<1x8x8x16xbf16>
    %30 = vector.shape_cast %29 : vector<1x8x8x16xbf16> to vector<8x8x16xbf16>
    %31 = arith.extf %30 : vector<8x8x16xbf16> to vector<8x8x16xf32>
    %32 = vector.extract_strided_slice %0 {offsets = [1, 0, 0], sizes = [1, 1, 16], strides = [1, 1, 1]} : vector<3x3x16xf32> to vector<1x1x16xf32>
    %33 = vector.shape_cast %32 : vector<1x1x16xf32> to vector<16xf32>
    %34 = vector.shape_cast %33 : vector<16xf32> to vector<1x1x16xf32>
    %35 = vector.broadcast %34 : vector<1x1x16xf32> to vector<8x8x16xf32>
    %36 = arith.mulf %31, %35 : vector<8x8x16xf32>
    %37 = arith.addf %28, %36 : vector<8x8x16xf32>
    %c1_17 = arith.constant 1 : index
    %c0_18 = arith.constant 0 : index
    %c0_19 = arith.constant 0 : index
    %c0_20 = arith.constant 0 : index
    %38 = vector.load %arg3[%c1_17, %c0_18, %c0_19, %c0_20] : memref<3x8x8x16xbf16, #tpu.memory_space<vmem>>, vector<1x8x8x16xbf16>
    %39 = vector.shape_cast %38 : vector<1x8x8x16xbf16> to vector<8x8x16xbf16>
    %40 = arith.extf %39 : vector<8x8x16xbf16> to vector<8x8x16xf32>
    %41 = vector.extract_strided_slice %0 {offsets = [1, 1, 0], sizes = [1, 1, 16], strides = [1, 1, 1]} : vector<3x3x16xf32> to vector<1x1x16xf32>
    %42 = vector.shape_cast %41 : vector<1x1x16xf32> to vector<16xf32>
    %43 = vector.shape_cast %42 : vector<16xf32> to vector<1x1x16xf32>
    %44 = vector.broadcast %43 : vector<1x1x16xf32> to vector<8x8x16xf32>
    %45 = arith.mulf %40, %44 : vector<8x8x16xf32>
    %46 = arith.addf %37, %45 : vector<8x8x16xf32>
    %c1_21 = arith.constant 1 : index
    %c0_22 = arith.constant 0 : index
    %c1_23 = arith.constant 1 : index
    %c0_24 = arith.constant 0 : index
    %47 = vector.load %arg2[%c1_21, %c0_22, %c1_23, %c0_24] : memref<3x8x9x16xbf16, #tpu.memory_space<vmem>>, vector<1x8x8x16xbf16>
    %48 = vector.shape_cast %47 : vector<1x8x8x16xbf16> to vector<8x8x16xbf16>
    %49 = arith.extf %48 : vector<8x8x16xbf16> to vector<8x8x16xf32>
    %50 = vector.extract_strided_slice %0 {offsets = [1, 2, 0], sizes = [1, 1, 16], strides = [1, 1, 1]} : vector<3x3x16xf32> to vector<1x1x16xf32>
    %51 = vector.shape_cast %50 : vector<1x1x16xf32> to vector<16xf32>
    %52 = vector.shape_cast %51 : vector<16xf32> to vector<1x1x16xf32>
    %53 = vector.broadcast %52 : vector<1x1x16xf32> to vector<8x8x16xf32>
    %54 = arith.mulf %49, %53 : vector<8x8x16xf32>
    %55 = arith.addf %46, %54 : vector<8x8x16xf32>
    %c2 = arith.constant 2 : index
    %c0_25 = arith.constant 0 : index
    %c0_26 = arith.constant 0 : index
    %c0_27 = arith.constant 0 : index
    %56 = vector.load %arg2[%c2, %c0_25, %c0_26, %c0_27] : memref<3x8x9x16xbf16, #tpu.memory_space<vmem>>, vector<1x8x8x16xbf16>
    %57 = vector.shape_cast %56 : vector<1x8x8x16xbf16> to vector<8x8x16xbf16>
    %58 = arith.extf %57 : vector<8x8x16xbf16> to vector<8x8x16xf32>
    %59 = vector.extract_strided_slice %0 {offsets = [2, 0, 0], sizes = [1, 1, 16], strides = [1, 1, 1]} : vector<3x3x16xf32> to vector<1x1x16xf32>
    %60 = vector.shape_cast %59 : vector<1x1x16xf32> to vector<16xf32>
    %61 = vector.shape_cast %60 : vector<16xf32> to vector<1x1x16xf32>
    %62 = vector.broadcast %61 : vector<1x1x16xf32> to vector<8x8x16xf32>
    %63 = arith.mulf %58, %62 : vector<8x8x16xf32>
    %64 = arith.addf %55, %63 : vector<8x8x16xf32>
    %c2_28 = arith.constant 2 : index
    %c0_29 = arith.constant 0 : index
    %c0_30 = arith.constant 0 : index
    %c0_31 = arith.constant 0 : index
    %65 = vector.load %arg3[%c2_28, %c0_29, %c0_30, %c0_31] : memref<3x8x8x16xbf16, #tpu.memory_space<vmem>>, vector<1x8x8x16xbf16>
    %66 = vector.shape_cast %65 : vector<1x8x8x16xbf16> to vector<8x8x16xbf16>
    %67 = arith.extf %66 : vector<8x8x16xbf16> to vector<8x8x16xf32>
    %68 = vector.extract_strided_slice %0 {offsets = [2, 1, 0], sizes = [1, 1, 16], strides = [1, 1, 1]} : vector<3x3x16xf32> to vector<1x1x16xf32>
    %69 = vector.shape_cast %68 : vector<1x1x16xf32> to vector<16xf32>
    %70 = vector.shape_cast %69 : vector<16xf32> to vector<1x1x16xf32>
    %71 = vector.broadcast %70 : vector<1x1x16xf32> to vector<8x8x16xf32>
    %72 = arith.mulf %67, %71 : vector<8x8x16xf32>
    %73 = arith.addf %64, %72 : vector<8x8x16xf32>
    %c2_32 = arith.constant 2 : index
    %c0_33 = arith.constant 0 : index
    %c1_34 = arith.constant 1 : index
    %c0_35 = arith.constant 0 : index
    %74 = vector.load %arg2[%c2_32, %c0_33, %c1_34, %c0_35] : memref<3x8x9x16xbf16, #tpu.memory_space<vmem>>, vector<1x8x8x16xbf16>
    %75 = vector.shape_cast %74 : vector<1x8x8x16xbf16> to vector<8x8x16xbf16>
    %76 = arith.extf %75 : vector<8x8x16xbf16> to vector<8x8x16xf32>
    %77 = vector.extract_strided_slice %0 {offsets = [2, 2, 0], sizes = [1, 1, 16], strides = [1, 1, 1]} : vector<3x3x16xf32> to vector<1x1x16xf32>
    %78 = vector.shape_cast %77 : vector<1x1x16xf32> to vector<16xf32>
    %79 = vector.shape_cast %78 : vector<16xf32> to vector<1x1x16xf32>
    %80 = vector.broadcast %79 : vector<1x1x16xf32> to vector<8x8x16xf32>
    %81 = arith.mulf %76, %80 : vector<8x8x16xf32>
    %82 = arith.addf %73, %81 : vector<8x8x16xf32>
    %c0_36 = arith.constant 0 : index
    %c0_37 = arith.constant 0 : index
    %c0_38 = arith.constant 0 : index
    %83 = vector.load %arg5[%c0_36, %c0_37, %c0_38] : memref<1x1x16xf32, #tpu.memory_space<vmem>>, vector<1x1x16xf32>
    %84 = vector.shape_cast %83 : vector<1x1x16xf32> to vector<1x16xf32>
    %85 = vector.shape_cast %84 : vector<1x16xf32> to vector<1x1x16xf32>
    %86 = vector.broadcast %85 : vector<1x1x16xf32> to vector<8x8x16xf32>
    %87 = arith.addf %82, %86 : vector<8x8x16xf32>
    %cst_39 = arith.constant 0.000000e+00 : f32
    %88 = vector.broadcast %cst_39 : f32 to vector<8x8x16xf32>
    %89 = arith.maximumf %87, %88 : vector<8x8x16xf32>
    %90 = arith.truncf %89 : vector<8x8x16xf32> to vector<8x8x16xbf16>
    %c0_40 = arith.constant 0 : index
    %c0_41 = arith.constant 0 : index
    %c0_42 = arith.constant 0 : index
    %c0_43 = arith.constant 0 : index
    %91 = vector.load %arg6[%c0_40, %c0_41, %c0_42, %c0_43] : memref<1x8x8x16xbf16, #tpu.memory_space<vmem>>, vector<1x8x8x16xbf16>
    %92 = vector.shape_cast %91 : vector<1x8x8x16xbf16> to vector<8x8x16xbf16>
    %93 = vector.shape_cast %90 : vector<8x8x16xbf16> to vector<1x8x8x16xbf16>
    tpu.vector_store %arg6[%c0_40, %c0_41, %c0_42, %c0_43], %93 {strides = array<i32>} : memref<1x8x8x16xbf16, #tpu.memory_space<vmem>>, vector<1x8x8x16xbf16>,
    %c0_i32 = arith.constant 0 : i32
    %94 = arith.cmpi eq, %arg1, %c0_i32 : i32
    %95 = arith.extui %94 : i1 to i32
    %c0_i32_44 = arith.constant 0 : i32
    %96 = arith.cmpi ne, %95, %c0_i32_44 : i32
    scf.if %96 {
      %cst_54 = arith.constant 0.000000e+00 : f32
      %105 = vector.broadcast %cst_54 : f32 to vector<1x1x16xf32>
      %c0_55 = arith.constant 0 : index
      %c0_56 = arith.constant 0 : index
      %c0_57 = arith.constant 0 : index
      %106 = vector.load %arg7[%c0_55, %c0_56, %c0_57] : memref<1x1x16xf32, #tpu.memory_space<vmem>>, vector<1x1x16xf32>
      tpu.vector_store %arg7[%c0_55, %c0_56, %c0_57], %105 {strides = array<i32>} : memref<1x1x16xf32, #tpu.memory_space<vmem>>, vector<1x1x16xf32>,
    } else {
    }
    %c0_45 = arith.constant 0 : index
    %c0_46 = arith.constant 0 : index
    %c0_47 = arith.constant 0 : index
    %97 = vector.load %arg7[%c0_45, %c0_46, %c0_47] : memref<1x1x16xf32, #tpu.memory_space<vmem>>, vector<1x1x16xf32>
    %cst_48 = arith.constant dense<0.000000e+00> : vector<16xf32>
    %98 = vector.multi_reduction <add>, %89, %cst_48 [0, 1] : vector<8x8x16xf32> to vector<16xf32>
    %99 = vector.shape_cast %98 : vector<16xf32> to vector<1x1x16xf32>
    %100 = arith.addf %97, %99 : vector<1x1x16xf32>
    %c0_49 = arith.constant 0 : index
    %c0_50 = arith.constant 0 : index
    %c0_51 = arith.constant 0 : index
    %101 = vector.load %arg7[%c0_49, %c0_50, %c0_51] : memref<1x1x16xf32, #tpu.memory_space<vmem>>, vector<1x1x16xf32>
    tpu.vector_store %arg7[%c0_49, %c0_50, %c0_51], %100 {strides = array<i32>} : memref<1x1x16xf32, #tpu.memory_space<vmem>>, vector<1x1x16xf32>,
    %c0_i32_52 = arith.constant 0 : i32
    %102 = arith.cmpi eq, %arg1, %c0_i32_52 : i32
    %103 = arith.extui %102 : i1 to i32
    %c0_i32_53 = arith.constant 0 : i32
    %104 = arith.cmpi ne, %103, %c0_i32_53 : i32
    scf.if %104 {
      %c0_54 = arith.constant 0 : index
      %c0_55 = arith.constant 0 : index
      %c0_56 = arith.constant 0 : index
      %105 = vector.load %arg7[%c0_54, %c0_55, %c0_56] : memref<1x1x16xf32, #tpu.memory_space<vmem>>, vector<1x1x16xf32>
      %cst_57 = arith.constant 1.562500e-02 : f32
      %106 = vector.broadcast %cst_57 : f32 to vector<1x1x16xf32>
      %107 = arith.mulf %105, %106 : vector<1x1x16xf32>
      %c0_58 = arith.constant 0 : index
      %c0_59 = arith.constant 0 : index
      %c0_60 = arith.constant 0 : index
      %108 = vector.load %arg7[%c0_58, %c0_59, %c0_60] : memref<1x1x16xf32, #tpu.memory_space<vmem>>, vector<1x1x16xf32>
      tpu.vector_store %arg7[%c0_58, %c0_59, %c0_60], %107 {strides = array<i32>} : memref<1x1x16xf32, #tpu.memory_space<vmem>>, vector<1x1x16xf32>,
    } else {
    }
    return
  }
  func.func @transform_0(%arg0: i32, %arg1: i32) -> (i32, i32, i32, i32) {
    %c0_i32 = arith.constant 0 : i32
    %c0_i32_0 = arith.constant 0 : i32
    %c0_i32_1 = arith.constant 0 : i32
    return %arg0, %arg1, %c0_i32, %c0_i32_0 : i32, i32, i32, i32
  }
  func.func @transform_1(%arg0: i32, %arg1: i32) -> (i32, i32, i32, i32) {
    %c0_i32 = arith.constant 0 : i32
    %c0_i32_0 = arith.constant 0 : i32
    %c0_i32_1 = arith.constant 0 : i32
    return %arg0, %arg1, %c0_i32, %c0_i32_0 : i32, i32, i32, i32
  }
  func.func @transform_2(%arg0: i32, %arg1: i32) -> (i32, i32, i32) {
    %c0_i32 = arith.constant 0 : i32
    %c0_i32_0 = arith.constant 0 : i32
    %c0_i32_1 = arith.constant 0 : i32
    %c0_i32_2 = arith.constant 0 : i32
    return %c0_i32, %c0_i32_0, %c0_i32_1 : i32, i32, i32
  }
  func.func @transform_3(%arg0: i32, %arg1: i32) -> (i32, i32, i32) {
    %c0_i32 = arith.constant 0 : i32
    %c0_i32_0 = arith.constant 0 : i32
    %c0_i32_1 = arith.constant 0 : i32
    %c0_i32_2 = arith.constant 0 : i32
    return %c0_i32, %c0_i32_0, %c0_i32_1 : i32, i32, i32
  }
  func.func @transform_4(%arg0: i32, %arg1: i32) -> (i32, i32, i32, i32) {
    %c0_i32 = arith.constant 0 : i32
    %c0_i32_0 = arith.constant 0 : i32
    %c0_i32_1 = arith.constant 0 : i32
    return %arg0, %arg1, %c0_i32, %c0_i32_0 : i32, i32, i32, i32
  }
  func.func @transform_5(%arg0: i32, %arg1: i32) -> (i32, i32, i32) {
    %c0_i32 = arith.constant 0 : i32
    %c0_i32_0 = arith.constant 0 : i32
    %c0_i32_1 = arith.constant 0 : i32
    return %arg0, %c0_i32, %c0_i32_0 : i32, i32, i32
  }
}

module attributes {stable_mosaic.version = 11 : i64} {
  func.func @_se_kernel(%arg0: i32, %arg1: memref<2x16xf32, #tpu.memory_space<vmem>>, %arg2: memref<16x2xf32, #tpu.memory_space<vmem>>, %arg3: memref<1x2xf32, #tpu.memory_space<vmem>>, %arg4: memref<2x16xf32, #tpu.memory_space<vmem>>, %arg5: memref<1x16xf32, #tpu.memory_space<vmem>>, %arg6: memref<2x16xf32, #tpu.memory_space<vmem>>) attributes {dimension_semantics = [#tpu.dimension_semantics<arbitrary>], iteration_bounds = array<i64: 1>, scalar_prefetch = 0 : i64, scratch_operands = 0 : i64, tpu.core_type = #tpu.core_type<tc>, window_params = [{pipeline_mode = #tpu.pipeline_mode<synchronous>, transform_indices = @transform_0, window_bounds = array<i64: 2, 16>}, {pipeline_mode = #tpu.pipeline_mode<synchronous>, transform_indices = @transform_1, window_bounds = array<i64: 16, 2>}, {pipeline_mode = #tpu.pipeline_mode<synchronous>, transform_indices = @transform_2, window_bounds = array<i64: 1, 2>}, {pipeline_mode = #tpu.pipeline_mode<synchronous>, transform_indices = @transform_3, window_bounds = array<i64: 2, 16>}, {pipeline_mode = #tpu.pipeline_mode<synchronous>, transform_indices = @transform_4, window_bounds = array<i64: 1, 16>}, {pipeline_mode = #tpu.pipeline_mode<synchronous>, transform_indices = @transform_5, window_bounds = array<i64: 2, 16>}]} {
    %c0 = arith.constant 0 : index
    %c0_0 = arith.constant 0 : index
    %0 = vector.load %arg1[%c0, %c0_0] : memref<2x16xf32, #tpu.memory_space<vmem>>, vector<2x16xf32>
    %c0_1 = arith.constant 0 : index
    %c0_2 = arith.constant 0 : index
    %1 = vector.load %arg2[%c0_1, %c0_2] : memref<16x2xf32, #tpu.memory_space<vmem>>, vector<16x2xf32>
    %cst = arith.constant dense<0.000000e+00> : vector<2x2xf32>
    %2 = tpu.matmul %0, %1, %cst {dimension_numbers = #tpu.dot_dimension_numbers<[1], [0], [0], [1], [0, 0, 1, 1], [], []>} : vector<2x16xf32>, vector<16x2xf32>, vector<2x2xf32> -> vector<2x2xf32>
    %c0_3 = arith.constant 0 : index
    %c0_4 = arith.constant 0 : index
    %3 = vector.load %arg3[%c0_3, %c0_4] : memref<1x2xf32, #tpu.memory_space<vmem>>, vector<1x2xf32>
    %4 = vector.broadcast %3 : vector<1x2xf32> to vector<2x2xf32>
    %5 = arith.addf %2, %4 : vector<2x2xf32>
    %cst_5 = arith.constant 0.000000e+00 : f32
    %6 = vector.broadcast %cst_5 : f32 to vector<2x2xf32>
    %7 = arith.maximumf %5, %6 : vector<2x2xf32>
    %c0_6 = arith.constant 0 : index
    %c0_7 = arith.constant 0 : index
    %8 = vector.load %arg4[%c0_6, %c0_7] : memref<2x16xf32, #tpu.memory_space<vmem>>, vector<2x16xf32>
    %cst_8 = arith.constant dense<0.000000e+00> : vector<2x16xf32>
    %9 = tpu.matmul %7, %8, %cst_8 {dimension_numbers = #tpu.dot_dimension_numbers<[1], [0], [0], [1], [0, 0, 1, 1], [], []>} : vector<2x2xf32>, vector<2x16xf32>, vector<2x16xf32> -> vector<2x16xf32>
    %c0_9 = arith.constant 0 : index
    %c0_10 = arith.constant 0 : index
    %10 = vector.load %arg5[%c0_9, %c0_10] : memref<1x16xf32, #tpu.memory_space<vmem>>, vector<1x16xf32>
    %11 = vector.broadcast %10 : vector<1x16xf32> to vector<2x16xf32>
    %12 = arith.addf %9, %11 : vector<2x16xf32>
    %13 = arith.negf %12 : vector<2x16xf32>
    %14 = math.exp %13 : vector<2x16xf32>
    %cst_11 = arith.constant 1.000000e+00 : f32
    %15 = vector.broadcast %cst_11 : f32 to vector<2x16xf32>
    %16 = arith.addf %15, %14 : vector<2x16xf32>
    %17 = arith.divf %15, %16 : vector<2x16xf32>
    %c0_12 = arith.constant 0 : index
    %c0_13 = arith.constant 0 : index
    %18 = vector.load %arg6[%c0_12, %c0_13] : memref<2x16xf32, #tpu.memory_space<vmem>>, vector<2x16xf32>
    tpu.vector_store %arg6[%c0_12, %c0_13], %17 {strides = array<i32>} : memref<2x16xf32, #tpu.memory_space<vmem>>, vector<2x16xf32>,
    return
  }
  func.func @transform_0(%arg0: i32) -> (i32, i32) {
    %c0_i32 = arith.constant 0 : i32
    %c0_i32_0 = arith.constant 0 : i32
    %c0_i32_1 = arith.constant 0 : i32
    return %c0_i32, %c0_i32_0 : i32, i32
  }
  func.func @transform_1(%arg0: i32) -> (i32, i32) {
    %c0_i32 = arith.constant 0 : i32
    %c0_i32_0 = arith.constant 0 : i32
    %c0_i32_1 = arith.constant 0 : i32
    return %c0_i32, %c0_i32_0 : i32, i32
  }
  func.func @transform_2(%arg0: i32) -> (i32, i32) {
    %c0_i32 = arith.constant 0 : i32
    %c0_i32_0 = arith.constant 0 : i32
    %c0_i32_1 = arith.constant 0 : i32
    return %c0_i32, %c0_i32_0 : i32, i32
  }
  func.func @transform_3(%arg0: i32) -> (i32, i32) {
    %c0_i32 = arith.constant 0 : i32
    %c0_i32_0 = arith.constant 0 : i32
    %c0_i32_1 = arith.constant 0 : i32
    return %c0_i32, %c0_i32_0 : i32, i32
  }
  func.func @transform_4(%arg0: i32) -> (i32, i32) {
    %c0_i32 = arith.constant 0 : i32
    %c0_i32_0 = arith.constant 0 : i32
    %c0_i32_1 = arith.constant 0 : i32
    return %c0_i32, %c0_i32_0 : i32, i32
  }
  func.func @transform_5(%arg0: i32) -> (i32, i32) {
    %c0_i32 = arith.constant 0 : i32
    %c0_i32_0 = arith.constant 0 : i32
    %c0_i32_1 = arith.constant 0 : i32
    return %c0_i32, %c0_i32_0 : i32, i32
  }
}

module attributes {stable_mosaic.version = 11 : i64} {
  func.func @_conv3_ds_kernel(%arg0: i32, %arg1: i32, %arg2: memref<1x64x16xbf16, #tpu.memory_space<vmem>>, %arg3: memref<1x1x16xf32, #tpu.memory_space<vmem>>, %arg4: memref<16x16xbf16, #tpu.memory_space<vmem>>, %arg5: memref<1x16xf32, #tpu.memory_space<vmem>>, %arg6: memref<1x64x8xbf16, #tpu.memory_space<vmem>>, %arg7: memref<8x16xbf16, #tpu.memory_space<vmem>>, %arg8: memref<1x16xf32, #tpu.memory_space<vmem>>, %arg9: memref<1x64x16xbf16, #tpu.memory_space<vmem>>) attributes {dimension_semantics = [#tpu.dimension_semantics<parallel>, #tpu.dimension_semantics<parallel>], iteration_bounds = array<i64: 2, 1>, scalar_prefetch = 0 : i64, scratch_operands = 0 : i64, tpu.core_type = #tpu.core_type<tc>, window_params = [{transform_indices = @transform_0, window_bounds = array<i64: 1, 64, 16>}, {transform_indices = @transform_1, window_bounds = array<i64: 1, 1, 16>}, {pipeline_mode = #tpu.pipeline_mode<synchronous>, transform_indices = @transform_2, window_bounds = array<i64: 16, 16>}, {pipeline_mode = #tpu.pipeline_mode<synchronous>, transform_indices = @transform_3, window_bounds = array<i64: 1, 16>}, {transform_indices = @transform_4, window_bounds = array<i64: 1, 64, 8>}, {pipeline_mode = #tpu.pipeline_mode<synchronous>, transform_indices = @transform_5, window_bounds = array<i64: 8, 16>}, {pipeline_mode = #tpu.pipeline_mode<synchronous>, transform_indices = @transform_6, window_bounds = array<i64: 1, 16>}, {transform_indices = @transform_7, window_bounds = array<i64: 1, 64, 16>}]} {
    %c0 = arith.constant 0 : index
    %c0_0 = arith.constant 0 : index
    %c0_1 = arith.constant 0 : index
    %0 = vector.load %arg2[%c0, %c0_0, %c0_1] : memref<1x64x16xbf16, #tpu.memory_space<vmem>>, vector<1x64x16xbf16>
    %1 = vector.shape_cast %0 : vector<1x64x16xbf16> to vector<64x16xbf16>
    %2 = arith.extf %1 : vector<64x16xbf16> to vector<64x16xf32>
    %c0_2 = arith.constant 0 : index
    %c0_3 = arith.constant 0 : index
    %c0_4 = arith.constant 0 : index
    %3 = vector.load %arg3[%c0_2, %c0_3, %c0_4] : memref<1x1x16xf32, #tpu.memory_space<vmem>>, vector<1x1x16xf32>
    %4 = vector.shape_cast %3 : vector<1x1x16xf32> to vector<1x16xf32>
    %5 = vector.broadcast %4 : vector<1x16xf32> to vector<64x16xf32>
    %6 = arith.mulf %2, %5 : vector<64x16xf32>
    %7 = arith.truncf %6 : vector<64x16xf32> to vector<64x16xbf16>
    %c0_5 = arith.constant 0 : index
    %c0_6 = arith.constant 0 : index
    %8 = vector.load %arg4[%c0_5, %c0_6] : memref<16x16xbf16, #tpu.memory_space<vmem>>, vector<16x16xbf16>
    %cst = arith.constant dense<0.000000e+00> : vector<64x16xf32>
    %9 = tpu.matmul %7, %8, %cst {dimension_numbers = #tpu.dot_dimension_numbers<[1], [0], [0], [1], [0, 0, 1, 1], [], []>} : vector<64x16xbf16>, vector<16x16xbf16>, vector<64x16xf32> -> vector<64x16xf32>
    %c0_7 = arith.constant 0 : index
    %c0_8 = arith.constant 0 : index
    %10 = vector.load %arg5[%c0_7, %c0_8] : memref<1x16xf32, #tpu.memory_space<vmem>>, vector<1x16xf32>
    %11 = vector.broadcast %10 : vector<1x16xf32> to vector<64x16xf32>
    %12 = arith.addf %9, %11 : vector<64x16xf32>
    %c0_9 = arith.constant 0 : index
    %c0_10 = arith.constant 0 : index
    %c0_11 = arith.constant 0 : index
    %13 = vector.load %arg6[%c0_9, %c0_10, %c0_11] : memref<1x64x8xbf16, #tpu.memory_space<vmem>>, vector<1x64x8xbf16>
    %14 = vector.shape_cast %13 : vector<1x64x8xbf16> to vector<64x8xbf16>
    %c0_12 = arith.constant 0 : index
    %c0_13 = arith.constant 0 : index
    %15 = vector.load %arg7[%c0_12, %c0_13] : memref<8x16xbf16, #tpu.memory_space<vmem>>, vector<8x16xbf16>
    %cst_14 = arith.constant dense<0.000000e+00> : vector<64x16xf32>
    %16 = tpu.matmul %14, %15, %cst_14 {dimension_numbers = #tpu.dot_dimension_numbers<[1], [0], [0], [1], [0, 0, 1, 1], [], []>} : vector<64x8xbf16>, vector<8x16xbf16>, vector<64x16xf32> -> vector<64x16xf32>
    %c0_15 = arith.constant 0 : index
    %c0_16 = arith.constant 0 : index
    %17 = vector.load %arg8[%c0_15, %c0_16] : memref<1x16xf32, #tpu.memory_space<vmem>>, vector<1x16xf32>
    %18 = vector.broadcast %17 : vector<1x16xf32> to vector<64x16xf32>
    %19 = arith.addf %16, %18 : vector<64x16xf32>
    %20 = arith.addf %12, %19 : vector<64x16xf32>
    %cst_17 = arith.constant 0.000000e+00 : f32
    %21 = vector.broadcast %cst_17 : f32 to vector<64x16xf32>
    %22 = arith.maximumf %20, %21 : vector<64x16xf32>
    %23 = arith.truncf %22 : vector<64x16xf32> to vector<64x16xbf16>
    %c0_18 = arith.constant 0 : index
    %c0_19 = arith.constant 0 : index
    %c0_20 = arith.constant 0 : index
    %24 = vector.load %arg9[%c0_18, %c0_19, %c0_20] : memref<1x64x16xbf16, #tpu.memory_space<vmem>>, vector<1x64x16xbf16>
    %25 = vector.shape_cast %24 : vector<1x64x16xbf16> to vector<64x16xbf16>
    %26 = vector.shape_cast %23 : vector<64x16xbf16> to vector<1x64x16xbf16>
    tpu.vector_store %arg9[%c0_18, %c0_19, %c0_20], %26 {strides = array<i32>} : memref<1x64x16xbf16, #tpu.memory_space<vmem>>, vector<1x64x16xbf16>,
    return
  }
  func.func @transform_0(%arg0: i32, %arg1: i32) -> (i32, i32, i32) {
    %c0_i32 = arith.constant 0 : i32
    %c0_i32_0 = arith.constant 0 : i32
    return %arg0, %arg1, %c0_i32 : i32, i32, i32
  }
  func.func @transform_1(%arg0: i32, %arg1: i32) -> (i32, i32, i32) {
    %c0_i32 = arith.constant 0 : i32
    %c0_i32_0 = arith.constant 0 : i32
    %c0_i32_1 = arith.constant 0 : i32
    return %arg0, %c0_i32, %c0_i32_0 : i32, i32, i32
  }
  func.func @transform_2(%arg0: i32, %arg1: i32) -> (i32, i32) {
    %c0_i32 = arith.constant 0 : i32
    %c0_i32_0 = arith.constant 0 : i32
    %c0_i32_1 = arith.constant 0 : i32
    return %c0_i32, %c0_i32_0 : i32, i32
  }
  func.func @transform_3(%arg0: i32, %arg1: i32) -> (i32, i32) {
    %c0_i32 = arith.constant 0 : i32
    %c0_i32_0 = arith.constant 0 : i32
    %c0_i32_1 = arith.constant 0 : i32
    return %c0_i32, %c0_i32_0 : i32, i32
  }
  func.func @transform_4(%arg0: i32, %arg1: i32) -> (i32, i32, i32) {
    %c0_i32 = arith.constant 0 : i32
    %c0_i32_0 = arith.constant 0 : i32
    return %arg0, %arg1, %c0_i32 : i32, i32, i32
  }
  func.func @transform_5(%arg0: i32, %arg1: i32) -> (i32, i32) {
    %c0_i32 = arith.constant 0 : i32
    %c0_i32_0 = arith.constant 0 : i32
    %c0_i32_1 = arith.constant 0 : i32
    return %c0_i32, %c0_i32_0 : i32, i32
  }
  func.func @transform_6(%arg0: i32, %arg1: i32) -> (i32, i32) {
    %c0_i32 = arith.constant 0 : i32
    %c0_i32_0 = arith.constant 0 : i32
    %c0_i32_1 = arith.constant 0 : i32
    return %c0_i32, %c0_i32_0 : i32, i32
  }
  func.func @transform_7(%arg0: i32, %arg1: i32) -> (i32, i32, i32) {
    %c0_i32 = arith.constant 0 : i32
    %c0_i32_0 = arith.constant 0 : i32
    return %arg0, %arg1, %c0_i32 : i32, i32, i32
  }
}

module attributes {stable_mosaic.version = 11 : i64} {
  func.func @_matmul_bias_act_kernel(%arg0: i32, %arg1: memref<128x16xbf16, #tpu.memory_space<vmem>>, %arg2: memref<16x16xbf16, #tpu.memory_space<vmem>>, %arg3: memref<1x16xf32, #tpu.memory_space<vmem>>, %arg4: memref<128x16xbf16, #tpu.memory_space<vmem>>) attributes {dimension_semantics = [#tpu.dimension_semantics<parallel>], iteration_bounds = array<i64: 1>, scalar_prefetch = 0 : i64, scratch_operands = 0 : i64, tpu.core_type = #tpu.core_type<tc>, window_params = [{transform_indices = @transform_0, window_bounds = array<i64: 128, 16>}, {pipeline_mode = #tpu.pipeline_mode<synchronous>, transform_indices = @transform_1, window_bounds = array<i64: 16, 16>}, {pipeline_mode = #tpu.pipeline_mode<synchronous>, transform_indices = @transform_2, window_bounds = array<i64: 1, 16>}, {transform_indices = @transform_3, window_bounds = array<i64: 128, 16>}]} {
    %c0 = arith.constant 0 : index
    %c0_0 = arith.constant 0 : index
    %0 = vector.load %arg1[%c0, %c0_0] : memref<128x16xbf16, #tpu.memory_space<vmem>>, vector<128x16xbf16>
    %c0_1 = arith.constant 0 : index
    %c0_2 = arith.constant 0 : index
    %1 = vector.load %arg2[%c0_1, %c0_2] : memref<16x16xbf16, #tpu.memory_space<vmem>>, vector<16x16xbf16>
    %cst = arith.constant dense<0.000000e+00> : vector<128x16xf32>
    %2 = tpu.matmul %0, %1, %cst {dimension_numbers = #tpu.dot_dimension_numbers<[1], [0], [0], [1], [0, 0, 1, 1], [], []>} : vector<128x16xbf16>, vector<16x16xbf16>, vector<128x16xf32> -> vector<128x16xf32>
    %c0_3 = arith.constant 0 : index
    %c0_4 = arith.constant 0 : index
    %3 = vector.load %arg3[%c0_3, %c0_4] : memref<1x16xf32, #tpu.memory_space<vmem>>, vector<1x16xf32>
    %4 = vector.broadcast %3 : vector<1x16xf32> to vector<128x16xf32>
    %5 = arith.addf %2, %4 : vector<128x16xf32>
    %cst_5 = arith.constant 0.000000e+00 : f32
    %6 = vector.broadcast %cst_5 : f32 to vector<128x16xf32>
    %7 = arith.maximumf %5, %6 : vector<128x16xf32>
    %8 = arith.truncf %7 : vector<128x16xf32> to vector<128x16xbf16>
    %c0_6 = arith.constant 0 : index
    %c0_7 = arith.constant 0 : index
    %9 = vector.load %arg4[%c0_6, %c0_7] : memref<128x16xbf16, #tpu.memory_space<vmem>>, vector<128x16xbf16>
    tpu.vector_store %arg4[%c0_6, %c0_7], %8 {strides = array<i32>} : memref<128x16xbf16, #tpu.memory_space<vmem>>, vector<128x16xbf16>,
    return
  }
  func.func @transform_0(%arg0: i32) -> (i32, i32) {
    %c0_i32 = arith.constant 0 : i32
    %c0_i32_0 = arith.constant 0 : i32
    return %arg0, %c0_i32 : i32, i32
  }
  func.func @transform_1(%arg0: i32) -> (i32, i32) {
    %c0_i32 = arith.constant 0 : i32
    %c0_i32_0 = arith.constant 0 : i32
    %c0_i32_1 = arith.constant 0 : i32
    return %c0_i32, %c0_i32_0 : i32, i32
  }
  func.func @transform_2(%arg0: i32) -> (i32, i32) {
    %c0_i32 = arith.constant 0 : i32
    %c0_i32_0 = arith.constant 0 : i32
    %c0_i32_1 = arith.constant 0 : i32
    return %c0_i32, %c0_i32_0 : i32, i32
  }
  func.func @transform_3(%arg0: i32) -> (i32, i32) {
    %c0_i32 = arith.constant 0 : i32
    %c0_i32_0 = arith.constant 0 : i32
    return %arg0, %c0_i32 : i32, i32
  }
}

module attributes {stable_mosaic.version = 11 : i64} {
  func.func @_dw_s1_kernel(%arg0: i32, %arg1: i32, %arg2: memref<1x10x10x16xbf16, #tpu.memory_space<vmem>>, %arg3: memref<3x3x16xf32, #tpu.memory_space<vmem>>, %arg4: memref<1x1x16xf32, #tpu.memory_space<vmem>>, %arg5: memref<1x8x8x16xbf16, #tpu.memory_space<vmem>>, %arg6: memref<1x1x16xf32, #tpu.memory_space<vmem>>) attributes {dimension_semantics = [#tpu.dimension_semantics<parallel>, #tpu.dimension_semantics<arbitrary>], iteration_bounds = array<i64: 2, 1>, scalar_prefetch = 0 : i64, scratch_operands = 0 : i64, tpu.core_type = #tpu.core_type<tc>, window_params = [{transform_indices = @transform_0, window_bounds = array<i64: 1, 10, 10, 16>}, {pipeline_mode = #tpu.pipeline_mode<synchronous>, transform_indices = @transform_1, window_bounds = array<i64: 3, 3, 16>}, {pipeline_mode = #tpu.pipeline_mode<synchronous>, transform_indices = @transform_2, window_bounds = array<i64: 1, 1, 16>}, {transform_indices = @transform_3, window_bounds = array<i64: 1, 8, 8, 16>}, {transform_indices = @transform_4, window_bounds = array<i64: 1, 1, 16>}]} {
    %c0 = arith.constant 0 : index
    %c0_0 = arith.constant 0 : index
    %c0_1 = arith.constant 0 : index
    %0 = vector.load %arg3[%c0, %c0_0, %c0_1] : memref<3x3x16xf32, #tpu.memory_space<vmem>>, vector<3x3x16xf32>
    %cst = arith.constant 0.000000e+00 : f32
    %1 = vector.broadcast %cst : f32 to vector<8x8x16xf32>
    %c0_2 = arith.constant 0 : index
    %c0_3 = arith.constant 0 : index
    %c0_4 = arith.constant 0 : index
    %c0_5 = arith.constant 0 : index
    %2 = vector.load %arg2[%c0_2, %c0_3, %c0_4, %c0_5] : memref<1x10x10x16xbf16, #tpu.memory_space<vmem>>, vector<1x8x8x16xbf16>
    %3 = vector.shape_cast %2 : vector<1x8x8x16xbf16> to vector<8x8x16xbf16>
    %4 = arith.extf %3 : vector<8x8x16xbf16> to vector<8x8x16xf32>
    %5 = vector.extract_strided_slice %0 {offsets = [0, 0, 0], sizes = [1, 1, 16], strides = [1, 1, 1]} : vector<3x3x16xf32> to vector<1x1x16xf32>
    %6 = vector.shape_cast %5 : vector<1x1x16xf32> to vector<16xf32>
    %7 = vector.shape_cast %6 : vector<16xf32> to vector<1x1x16xf32>
    %8 = vector.broadcast %7 : vector<1x1x16xf32> to vector<8x8x16xf32>
    %9 = arith.mulf %4, %8 : vector<8x8x16xf32>
    %10 = arith.addf %1, %9 : vector<8x8x16xf32>
    %c0_6 = arith.constant 0 : index
    %c0_7 = arith.constant 0 : index
    %c1 = arith.constant 1 : index
    %c0_8 = arith.constant 0 : index
    %11 = vector.load %arg2[%c0_6, %c0_7, %c1, %c0_8] : memref<1x10x10x16xbf16, #tpu.memory_space<vmem>>, vector<1x8x8x16xbf16>
    %12 = vector.shape_cast %11 : vector<1x8x8x16xbf16> to vector<8x8x16xbf16>
    %13 = arith.extf %12 : vector<8x8x16xbf16> to vector<8x8x16xf32>
    %14 = vector.extract_strided_slice %0 {offsets = [0, 1, 0], sizes = [1, 1, 16], strides = [1, 1, 1]} : vector<3x3x16xf32> to vector<1x1x16xf32>
    %15 = vector.shape_cast %14 : vector<1x1x16xf32> to vector<16xf32>
    %16 = vector.shape_cast %15 : vector<16xf32> to vector<1x1x16xf32>
    %17 = vector.broadcast %16 : vector<1x1x16xf32> to vector<8x8x16xf32>
    %18 = arith.mulf %13, %17 : vector<8x8x16xf32>
    %19 = arith.addf %10, %18 : vector<8x8x16xf32>
    %c0_9 = arith.constant 0 : index
    %c0_10 = arith.constant 0 : index
    %c2 = arith.constant 2 : index
    %c0_11 = arith.constant 0 : index
    %20 = vector.load %arg2[%c0_9, %c0_10, %c2, %c0_11] : memref<1x10x10x16xbf16, #tpu.memory_space<vmem>>, vector<1x8x8x16xbf16>
    %21 = vector.shape_cast %20 : vector<1x8x8x16xbf16> to vector<8x8x16xbf16>
    %22 = arith.extf %21 : vector<8x8x16xbf16> to vector<8x8x16xf32>
    %23 = vector.extract_strided_slice %0 {offsets = [0, 2, 0], sizes = [1, 1, 16], strides = [1, 1, 1]} : vector<3x3x16xf32> to vector<1x1x16xf32>
    %24 = vector.shape_cast %23 : vector<1x1x16xf32> to vector<16xf32>
    %25 = vector.shape_cast %24 : vector<16xf32> to vector<1x1x16xf32>
    %26 = vector.broadcast %25 : vector<1x1x16xf32> to vector<8x8x16xf32>
    %27 = arith.mulf %22, %26 : vector<8x8x16xf32>
    %28 = arith.addf %19, %27 : vector<8x8x16xf32>
    %c0_12 = arith.constant 0 : index
    %c1_13 = arith.constant 1 : index
    %c0_14 = arith.constant 0 : index
    %c0_15 = arith.constant 0 : index
    %29 = vector.load %arg2[%c0_12, %c1_13, %c0_14, %c0_15] : memref<1x10x10x16xbf16, #tpu.memory_space<vmem>>, vector<1x8x8x16xbf16>
    %30 = vector.shape_cast %29 : vector<1x8x8x16xbf16> to vector<8x8x16xbf16>
    %31 = arith.extf %30 : vector<8x8x16xbf16> to vector<8x8x16xf32>
    %32 = vector.extract_strided_slice %0 {offsets = [1, 0, 0], sizes = [1, 1, 16], strides = [1, 1, 1]} : vector<3x3x16xf32> to vector<1x1x16xf32>
    %33 = vector.shape_cast %32 : vector<1x1x16xf32> to vector<16xf32>
    %34 = vector.shape_cast %33 : vector<16xf32> to vector<1x1x16xf32>
    %35 = vector.broadcast %34 : vector<1x1x16xf32> to vector<8x8x16xf32>
    %36 = arith.mulf %31, %35 : vector<8x8x16xf32>
    %37 = arith.addf %28, %36 : vector<8x8x16xf32>
    %c0_16 = arith.constant 0 : index
    %c1_17 = arith.constant 1 : index
    %c1_18 = arith.constant 1 : index
    %c0_19 = arith.constant 0 : index
    %38 = vector.load %arg2[%c0_16, %c1_17, %c1_18, %c0_19] : memref<1x10x10x16xbf16, #tpu.memory_space<vmem>>, vector<1x8x8x16xbf16>
    %39 = vector.shape_cast %38 : vector<1x8x8x16xbf16> to vector<8x8x16xbf16>
    %40 = arith.extf %39 : vector<8x8x16xbf16> to vector<8x8x16xf32>
    %41 = vector.extract_strided_slice %0 {offsets = [1, 1, 0], sizes = [1, 1, 16], strides = [1, 1, 1]} : vector<3x3x16xf32> to vector<1x1x16xf32>
    %42 = vector.shape_cast %41 : vector<1x1x16xf32> to vector<16xf32>
    %43 = vector.shape_cast %42 : vector<16xf32> to vector<1x1x16xf32>
    %44 = vector.broadcast %43 : vector<1x1x16xf32> to vector<8x8x16xf32>
    %45 = arith.mulf %40, %44 : vector<8x8x16xf32>
    %46 = arith.addf %37, %45 : vector<8x8x16xf32>
    %c0_20 = arith.constant 0 : index
    %c1_21 = arith.constant 1 : index
    %c2_22 = arith.constant 2 : index
    %c0_23 = arith.constant 0 : index
    %47 = vector.load %arg2[%c0_20, %c1_21, %c2_22, %c0_23] : memref<1x10x10x16xbf16, #tpu.memory_space<vmem>>, vector<1x8x8x16xbf16>
    %48 = vector.shape_cast %47 : vector<1x8x8x16xbf16> to vector<8x8x16xbf16>
    %49 = arith.extf %48 : vector<8x8x16xbf16> to vector<8x8x16xf32>
    %50 = vector.extract_strided_slice %0 {offsets = [1, 2, 0], sizes = [1, 1, 16], strides = [1, 1, 1]} : vector<3x3x16xf32> to vector<1x1x16xf32>
    %51 = vector.shape_cast %50 : vector<1x1x16xf32> to vector<16xf32>
    %52 = vector.shape_cast %51 : vector<16xf32> to vector<1x1x16xf32>
    %53 = vector.broadcast %52 : vector<1x1x16xf32> to vector<8x8x16xf32>
    %54 = arith.mulf %49, %53 : vector<8x8x16xf32>
    %55 = arith.addf %46, %54 : vector<8x8x16xf32>
    %c0_24 = arith.constant 0 : index
    %c2_25 = arith.constant 2 : index
    %c0_26 = arith.constant 0 : index
    %c0_27 = arith.constant 0 : index
    %56 = vector.load %arg2[%c0_24, %c2_25, %c0_26, %c0_27] : memref<1x10x10x16xbf16, #tpu.memory_space<vmem>>, vector<1x8x8x16xbf16>
    %57 = vector.shape_cast %56 : vector<1x8x8x16xbf16> to vector<8x8x16xbf16>
    %58 = arith.extf %57 : vector<8x8x16xbf16> to vector<8x8x16xf32>
    %59 = vector.extract_strided_slice %0 {offsets = [2, 0, 0], sizes = [1, 1, 16], strides = [1, 1, 1]} : vector<3x3x16xf32> to vector<1x1x16xf32>
    %60 = vector.shape_cast %59 : vector<1x1x16xf32> to vector<16xf32>
    %61 = vector.shape_cast %60 : vector<16xf32> to vector<1x1x16xf32>
    %62 = vector.broadcast %61 : vector<1x1x16xf32> to vector<8x8x16xf32>
    %63 = arith.mulf %58, %62 : vector<8x8x16xf32>
    %64 = arith.addf %55, %63 : vector<8x8x16xf32>
    %c0_28 = arith.constant 0 : index
    %c2_29 = arith.constant 2 : index
    %c1_30 = arith.constant 1 : index
    %c0_31 = arith.constant 0 : index
    %65 = vector.load %arg2[%c0_28, %c2_29, %c1_30, %c0_31] : memref<1x10x10x16xbf16, #tpu.memory_space<vmem>>, vector<1x8x8x16xbf16>
    %66 = vector.shape_cast %65 : vector<1x8x8x16xbf16> to vector<8x8x16xbf16>
    %67 = arith.extf %66 : vector<8x8x16xbf16> to vector<8x8x16xf32>
    %68 = vector.extract_strided_slice %0 {offsets = [2, 1, 0], sizes = [1, 1, 16], strides = [1, 1, 1]} : vector<3x3x16xf32> to vector<1x1x16xf32>
    %69 = vector.shape_cast %68 : vector<1x1x16xf32> to vector<16xf32>
    %70 = vector.shape_cast %69 : vector<16xf32> to vector<1x1x16xf32>
    %71 = vector.broadcast %70 : vector<1x1x16xf32> to vector<8x8x16xf32>
    %72 = arith.mulf %67, %71 : vector<8x8x16xf32>
    %73 = arith.addf %64, %72 : vector<8x8x16xf32>
    %c0_32 = arith.constant 0 : index
    %c2_33 = arith.constant 2 : index
    %c2_34 = arith.constant 2 : index
    %c0_35 = arith.constant 0 : index
    %74 = vector.load %arg2[%c0_32, %c2_33, %c2_34, %c0_35] : memref<1x10x10x16xbf16, #tpu.memory_space<vmem>>, vector<1x8x8x16xbf16>
    %75 = vector.shape_cast %74 : vector<1x8x8x16xbf16> to vector<8x8x16xbf16>
    %76 = arith.extf %75 : vector<8x8x16xbf16> to vector<8x8x16xf32>
    %77 = vector.extract_strided_slice %0 {offsets = [2, 2, 0], sizes = [1, 1, 16], strides = [1, 1, 1]} : vector<3x3x16xf32> to vector<1x1x16xf32>
    %78 = vector.shape_cast %77 : vector<1x1x16xf32> to vector<16xf32>
    %79 = vector.shape_cast %78 : vector<16xf32> to vector<1x1x16xf32>
    %80 = vector.broadcast %79 : vector<1x1x16xf32> to vector<8x8x16xf32>
    %81 = arith.mulf %76, %80 : vector<8x8x16xf32>
    %82 = arith.addf %73, %81 : vector<8x8x16xf32>
    %c0_36 = arith.constant 0 : index
    %c0_37 = arith.constant 0 : index
    %c0_38 = arith.constant 0 : index
    %83 = vector.load %arg4[%c0_36, %c0_37, %c0_38] : memref<1x1x16xf32, #tpu.memory_space<vmem>>, vector<1x1x16xf32>
    %84 = vector.shape_cast %83 : vector<1x1x16xf32> to vector<1x16xf32>
    %85 = vector.shape_cast %84 : vector<1x16xf32> to vector<1x1x16xf32>
    %86 = vector.broadcast %85 : vector<1x1x16xf32> to vector<8x8x16xf32>
    %87 = arith.addf %82, %86 : vector<8x8x16xf32>
    %cst_39 = arith.constant 0.000000e+00 : f32
    %88 = vector.broadcast %cst_39 : f32 to vector<8x8x16xf32>
    %89 = arith.maximumf %87, %88 : vector<8x8x16xf32>
    %90 = arith.truncf %89 : vector<8x8x16xf32> to vector<8x8x16xbf16>
    %c0_40 = arith.constant 0 : index
    %c0_41 = arith.constant 0 : index
    %c0_42 = arith.constant 0 : index
    %c0_43 = arith.constant 0 : index
    %91 = vector.load %arg5[%c0_40, %c0_41, %c0_42, %c0_43] : memref<1x8x8x16xbf16, #tpu.memory_space<vmem>>, vector<1x8x8x16xbf16>
    %92 = vector.shape_cast %91 : vector<1x8x8x16xbf16> to vector<8x8x16xbf16>
    %93 = vector.shape_cast %90 : vector<8x8x16xbf16> to vector<1x8x8x16xbf16>
    tpu.vector_store %arg5[%c0_40, %c0_41, %c0_42, %c0_43], %93 {strides = array<i32>} : memref<1x8x8x16xbf16, #tpu.memory_space<vmem>>, vector<1x8x8x16xbf16>,
    %c0_i32 = arith.constant 0 : i32
    %94 = arith.cmpi eq, %arg1, %c0_i32 : i32
    %95 = arith.extui %94 : i1 to i32
    %c0_i32_44 = arith.constant 0 : i32
    %96 = arith.cmpi ne, %95, %c0_i32_44 : i32
    scf.if %96 {
      %cst_54 = arith.constant 0.000000e+00 : f32
      %105 = vector.broadcast %cst_54 : f32 to vector<1x1x16xf32>
      %c0_55 = arith.constant 0 : index
      %c0_56 = arith.constant 0 : index
      %c0_57 = arith.constant 0 : index
      %106 = vector.load %arg6[%c0_55, %c0_56, %c0_57] : memref<1x1x16xf32, #tpu.memory_space<vmem>>, vector<1x1x16xf32>
      tpu.vector_store %arg6[%c0_55, %c0_56, %c0_57], %105 {strides = array<i32>} : memref<1x1x16xf32, #tpu.memory_space<vmem>>, vector<1x1x16xf32>,
    } else {
    }
    %c0_45 = arith.constant 0 : index
    %c0_46 = arith.constant 0 : index
    %c0_47 = arith.constant 0 : index
    %97 = vector.load %arg6[%c0_45, %c0_46, %c0_47] : memref<1x1x16xf32, #tpu.memory_space<vmem>>, vector<1x1x16xf32>
    %cst_48 = arith.constant dense<0.000000e+00> : vector<16xf32>
    %98 = vector.multi_reduction <add>, %89, %cst_48 [0, 1] : vector<8x8x16xf32> to vector<16xf32>
    %99 = vector.shape_cast %98 : vector<16xf32> to vector<1x1x16xf32>
    %100 = arith.addf %97, %99 : vector<1x1x16xf32>
    %c0_49 = arith.constant 0 : index
    %c0_50 = arith.constant 0 : index
    %c0_51 = arith.constant 0 : index
    %101 = vector.load %arg6[%c0_49, %c0_50, %c0_51] : memref<1x1x16xf32, #tpu.memory_space<vmem>>, vector<1x1x16xf32>
    tpu.vector_store %arg6[%c0_49, %c0_50, %c0_51], %100 {strides = array<i32>} : memref<1x1x16xf32, #tpu.memory_space<vmem>>, vector<1x1x16xf32>,
    %c0_i32_52 = arith.constant 0 : i32
    %102 = arith.cmpi eq, %arg1, %c0_i32_52 : i32
    %103 = arith.extui %102 : i1 to i32
    %c0_i32_53 = arith.constant 0 : i32
    %104 = arith.cmpi ne, %103, %c0_i32_53 : i32
    scf.if %104 {
      %c0_54 = arith.constant 0 : index
      %c0_55 = arith.constant 0 : index
      %c0_56 = arith.constant 0 : index
      %105 = vector.load %arg6[%c0_54, %c0_55, %c0_56] : memref<1x1x16xf32, #tpu.memory_space<vmem>>, vector<1x1x16xf32>
      %cst_57 = arith.constant 1.562500e-02 : f32
      %106 = vector.broadcast %cst_57 : f32 to vector<1x1x16xf32>
      %107 = arith.mulf %105, %106 : vector<1x1x16xf32>
      %c0_58 = arith.constant 0 : index
      %c0_59 = arith.constant 0 : index
      %c0_60 = arith.constant 0 : index
      %108 = vector.load %arg6[%c0_58, %c0_59, %c0_60] : memref<1x1x16xf32, #tpu.memory_space<vmem>>, vector<1x1x16xf32>
      tpu.vector_store %arg6[%c0_58, %c0_59, %c0_60], %107 {strides = array<i32>} : memref<1x1x16xf32, #tpu.memory_space<vmem>>, vector<1x1x16xf32>,
    } else {
    }
    return
  }
  func.func @transform_0(%arg0: i32, %arg1: i32) -> (i32, i32, i32, i32) {
    %c1_i32 = arith.constant 1 : i32
    %0 = arith.muli %arg0, %c1_i32 : i32
    %1 = arith.addi %0, %arg1 : i32
    %c0_i32 = arith.constant 0 : i32
    %c0_i32_0 = arith.constant 0 : i32
    %c0_i32_1 = arith.constant 0 : i32
    %c0_i32_2 = arith.constant 0 : i32
    return %1, %c0_i32, %c0_i32_0, %c0_i32_1 : i32, i32, i32, i32
  }
  func.func @transform_1(%arg0: i32, %arg1: i32) -> (i32, i32, i32) {
    %c0_i32 = arith.constant 0 : i32
    %c0_i32_0 = arith.constant 0 : i32
    %c0_i32_1 = arith.constant 0 : i32
    %c0_i32_2 = arith.constant 0 : i32
    return %c0_i32, %c0_i32_0, %c0_i32_1 : i32, i32, i32
  }
  func.func @transform_2(%arg0: i32, %arg1: i32) -> (i32, i32, i32) {
    %c0_i32 = arith.constant 0 : i32
    %c0_i32_0 = arith.constant 0 : i32
    %c0_i32_1 = arith.constant 0 : i32
    %c0_i32_2 = arith.constant 0 : i32
    return %c0_i32, %c0_i32_0, %c0_i32_1 : i32, i32, i32
  }
  func.func @transform_3(%arg0: i32, %arg1: i32) -> (i32, i32, i32, i32) {
    %c0_i32 = arith.constant 0 : i32
    %c0_i32_0 = arith.constant 0 : i32
    %c0_i32_1 = arith.constant 0 : i32
    return %arg0, %arg1, %c0_i32, %c0_i32_0 : i32, i32, i32, i32
  }
  func.func @transform_4(%arg0: i32, %arg1: i32) -> (i32, i32, i32) {
    %c0_i32 = arith.constant 0 : i32
    %c0_i32_0 = arith.constant 0 : i32
    %c0_i32_1 = arith.constant 0 : i32
    return %arg0, %c0_i32, %c0_i32_0 : i32, i32, i32
  }
}

module attributes {stable_mosaic.version = 11 : i64} {
  func.func @_conv3_id_kernel(%arg0: i32, %arg1: i32, %arg2: memref<1x64x16xbf16, #tpu.memory_space<vmem>>, %arg3: memref<1x1x16xf32, #tpu.memory_space<vmem>>, %arg4: memref<16x16xbf16, #tpu.memory_space<vmem>>, %arg5: memref<1x16xf32, #tpu.memory_space<vmem>>, %arg6: memref<1x64x16xbf16, #tpu.memory_space<vmem>>, %arg7: memref<1x64x16xbf16, #tpu.memory_space<vmem>>) attributes {dimension_semantics = [#tpu.dimension_semantics<parallel>, #tpu.dimension_semantics<parallel>], iteration_bounds = array<i64: 2, 1>, scalar_prefetch = 0 : i64, scratch_operands = 0 : i64, tpu.core_type = #tpu.core_type<tc>, window_params = [{transform_indices = @transform_0, window_bounds = array<i64: 1, 64, 16>}, {transform_indices = @transform_1, window_bounds = array<i64: 1, 1, 16>}, {pipeline_mode = #tpu.pipeline_mode<synchronous>, transform_indices = @transform_2, window_bounds = array<i64: 16, 16>}, {pipeline_mode = #tpu.pipeline_mode<synchronous>, transform_indices = @transform_3, window_bounds = array<i64: 1, 16>}, {transform_indices = @transform_4, window_bounds = array<i64: 1, 64, 16>}, {transform_indices = @transform_5, window_bounds = array<i64: 1, 64, 16>}]} {
    %c0 = arith.constant 0 : index
    %c0_0 = arith.constant 0 : index
    %c0_1 = arith.constant 0 : index
    %0 = vector.load %arg2[%c0, %c0_0, %c0_1] : memref<1x64x16xbf16, #tpu.memory_space<vmem>>, vector<1x64x16xbf16>
    %1 = vector.shape_cast %0 : vector<1x64x16xbf16> to vector<64x16xbf16>
    %2 = arith.extf %1 : vector<64x16xbf16> to vector<64x16xf32>
    %c0_2 = arith.constant 0 : index
    %c0_3 = arith.constant 0 : index
    %c0_4 = arith.constant 0 : index
    %3 = vector.load %arg3[%c0_2, %c0_3, %c0_4] : memref<1x1x16xf32, #tpu.memory_space<vmem>>, vector<1x1x16xf32>
    %4 = vector.shape_cast %3 : vector<1x1x16xf32> to vector<1x16xf32>
    %5 = vector.broadcast %4 : vector<1x16xf32> to vector<64x16xf32>
    %6 = arith.mulf %2, %5 : vector<64x16xf32>
    %7 = arith.truncf %6 : vector<64x16xf32> to vector<64x16xbf16>
    %c0_5 = arith.constant 0 : index
    %c0_6 = arith.constant 0 : index
    %8 = vector.load %arg4[%c0_5, %c0_6] : memref<16x16xbf16, #tpu.memory_space<vmem>>, vector<16x16xbf16>
    %cst = arith.constant dense<0.000000e+00> : vector<64x16xf32>
    %9 = tpu.matmul %7, %8, %cst {dimension_numbers = #tpu.dot_dimension_numbers<[1], [0], [0], [1], [0, 0, 1, 1], [], []>} : vector<64x16xbf16>, vector<16x16xbf16>, vector<64x16xf32> -> vector<64x16xf32>
    %c0_7 = arith.constant 0 : index
    %c0_8 = arith.constant 0 : index
    %10 = vector.load %arg5[%c0_7, %c0_8] : memref<1x16xf32, #tpu.memory_space<vmem>>, vector<1x16xf32>
    %11 = vector.broadcast %10 : vector<1x16xf32> to vector<64x16xf32>
    %12 = arith.addf %9, %11 : vector<64x16xf32>
    %c0_9 = arith.constant 0 : index
    %c0_10 = arith.constant 0 : index
    %c0_11 = arith.constant 0 : index
    %13 = vector.load %arg6[%c0_9, %c0_10, %c0_11] : memref<1x64x16xbf16, #tpu.memory_space<vmem>>, vector<1x64x16xbf16>
    %14 = vector.shape_cast %13 : vector<1x64x16xbf16> to vector<64x16xbf16>
    %15 = arith.extf %14 : vector<64x16xbf16> to vector<64x16xf32>
    %16 = arith.addf %12, %15 : vector<64x16xf32>
    %cst_12 = arith.constant 0.000000e+00 : f32
    %17 = vector.broadcast %cst_12 : f32 to vector<64x16xf32>
    %18 = arith.maximumf %16, %17 : vector<64x16xf32>
    %19 = arith.truncf %18 : vector<64x16xf32> to vector<64x16xbf16>
    %c0_13 = arith.constant 0 : index
    %c0_14 = arith.constant 0 : index
    %c0_15 = arith.constant 0 : index
    %20 = vector.load %arg7[%c0_13, %c0_14, %c0_15] : memref<1x64x16xbf16, #tpu.memory_space<vmem>>, vector<1x64x16xbf16>
    %21 = vector.shape_cast %20 : vector<1x64x16xbf16> to vector<64x16xbf16>
    %22 = vector.shape_cast %19 : vector<64x16xbf16> to vector<1x64x16xbf16>
    tpu.vector_store %arg7[%c0_13, %c0_14, %c0_15], %22 {strides = array<i32>} : memref<1x64x16xbf16, #tpu.memory_space<vmem>>, vector<1x64x16xbf16>,
    return
  }
  func.func @transform_0(%arg0: i32, %arg1: i32) -> (i32, i32, i32) {
    %c0_i32 = arith.constant 0 : i32
    %c0_i32_0 = arith.constant 0 : i32
    return %arg0, %arg1, %c0_i32 : i32, i32, i32
  }
  func.func @transform_1(%arg0: i32, %arg1: i32) -> (i32, i32, i32) {
    %c0_i32 = arith.constant 0 : i32
    %c0_i32_0 = arith.constant 0 : i32
    %c0_i32_1 = arith.constant 0 : i32
    return %arg0, %c0_i32, %c0_i32_0 : i32, i32, i32
  }
  func.func @transform_2(%arg0: i32, %arg1: i32) -> (i32, i32) {
    %c0_i32 = arith.constant 0 : i32
    %c0_i32_0 = arith.constant 0 : i32
    %c0_i32_1 = arith.constant 0 : i32
    return %c0_i32, %c0_i32_0 : i32, i32
  }
  func.func @transform_3(%arg0: i32, %arg1: i32) -> (i32, i32) {
    %c0_i32 = arith.constant 0 : i32
    %c0_i32_0 = arith.constant 0 : i32
    %c0_i32_1 = arith.constant 0 : i32
    return %c0_i32, %c0_i32_0 : i32, i32
  }
  func.func @transform_4(%arg0: i32, %arg1: i32) -> (i32, i32, i32) {
    %c0_i32 = arith.constant 0 : i32
    %c0_i32_0 = arith.constant 0 : i32
    return %arg0, %arg1, %c0_i32 : i32, i32, i32
  }
  func.func @transform_5(%arg0: i32, %arg1: i32) -> (i32, i32, i32) {
    %c0_i32 = arith.constant 0 : i32
    %c0_i32_0 = arith.constant 0 : i32
    return %arg0, %arg1, %c0_i32 : i32, i32, i32
  }
}

module attributes {stable_mosaic.version = 11 : i64} {
  func.func @_se_kernel(%arg0: i32, %arg1: memref<2x16xf32, #tpu.memory_space<vmem>>, %arg2: memref<16x4xf32, #tpu.memory_space<vmem>>, %arg3: memref<1x4xf32, #tpu.memory_space<vmem>>, %arg4: memref<4x16xf32, #tpu.memory_space<vmem>>, %arg5: memref<1x16xf32, #tpu.memory_space<vmem>>, %arg6: memref<2x16xf32, #tpu.memory_space<vmem>>) attributes {dimension_semantics = [#tpu.dimension_semantics<arbitrary>], iteration_bounds = array<i64: 1>, scalar_prefetch = 0 : i64, scratch_operands = 0 : i64, tpu.core_type = #tpu.core_type<tc>, window_params = [{pipeline_mode = #tpu.pipeline_mode<synchronous>, transform_indices = @transform_0, window_bounds = array<i64: 2, 16>}, {pipeline_mode = #tpu.pipeline_mode<synchronous>, transform_indices = @transform_1, window_bounds = array<i64: 16, 4>}, {pipeline_mode = #tpu.pipeline_mode<synchronous>, transform_indices = @transform_2, window_bounds = array<i64: 1, 4>}, {pipeline_mode = #tpu.pipeline_mode<synchronous>, transform_indices = @transform_3, window_bounds = array<i64: 4, 16>}, {pipeline_mode = #tpu.pipeline_mode<synchronous>, transform_indices = @transform_4, window_bounds = array<i64: 1, 16>}, {pipeline_mode = #tpu.pipeline_mode<synchronous>, transform_indices = @transform_5, window_bounds = array<i64: 2, 16>}]} {
    %c0 = arith.constant 0 : index
    %c0_0 = arith.constant 0 : index
    %0 = vector.load %arg1[%c0, %c0_0] : memref<2x16xf32, #tpu.memory_space<vmem>>, vector<2x16xf32>
    %c0_1 = arith.constant 0 : index
    %c0_2 = arith.constant 0 : index
    %1 = vector.load %arg2[%c0_1, %c0_2] : memref<16x4xf32, #tpu.memory_space<vmem>>, vector<16x4xf32>
    %cst = arith.constant dense<0.000000e+00> : vector<2x4xf32>
    %2 = tpu.matmul %0, %1, %cst {dimension_numbers = #tpu.dot_dimension_numbers<[1], [0], [0], [1], [0, 0, 1, 1], [], []>} : vector<2x16xf32>, vector<16x4xf32>, vector<2x4xf32> -> vector<2x4xf32>
    %c0_3 = arith.constant 0 : index
    %c0_4 = arith.constant 0 : index
    %3 = vector.load %arg3[%c0_3, %c0_4] : memref<1x4xf32, #tpu.memory_space<vmem>>, vector<1x4xf32>
    %4 = vector.broadcast %3 : vector<1x4xf32> to vector<2x4xf32>
    %5 = arith.addf %2, %4 : vector<2x4xf32>
    %cst_5 = arith.constant 0.000000e+00 : f32
    %6 = vector.broadcast %cst_5 : f32 to vector<2x4xf32>
    %7 = arith.maximumf %5, %6 : vector<2x4xf32>
    %c0_6 = arith.constant 0 : index
    %c0_7 = arith.constant 0 : index
    %8 = vector.load %arg4[%c0_6, %c0_7] : memref<4x16xf32, #tpu.memory_space<vmem>>, vector<4x16xf32>
    %cst_8 = arith.constant dense<0.000000e+00> : vector<2x16xf32>
    %9 = tpu.matmul %7, %8, %cst_8 {dimension_numbers = #tpu.dot_dimension_numbers<[1], [0], [0], [1], [0, 0, 1, 1], [], []>} : vector<2x4xf32>, vector<4x16xf32>, vector<2x16xf32> -> vector<2x16xf32>
    %c0_9 = arith.constant 0 : index
    %c0_10 = arith.constant 0 : index
    %10 = vector.load %arg5[%c0_9, %c0_10] : memref<1x16xf32, #tpu.memory_space<vmem>>, vector<1x16xf32>
    %11 = vector.broadcast %10 : vector<1x16xf32> to vector<2x16xf32>
    %12 = arith.addf %9, %11 : vector<2x16xf32>
    %13 = arith.negf %12 : vector<2x16xf32>
    %14 = math.exp %13 : vector<2x16xf32>
    %cst_11 = arith.constant 1.000000e+00 : f32
    %15 = vector.broadcast %cst_11 : f32 to vector<2x16xf32>
    %16 = arith.addf %15, %14 : vector<2x16xf32>
    %17 = arith.divf %15, %16 : vector<2x16xf32>
    %c0_12 = arith.constant 0 : index
    %c0_13 = arith.constant 0 : index
    %18 = vector.load %arg6[%c0_12, %c0_13] : memref<2x16xf32, #tpu.memory_space<vmem>>, vector<2x16xf32>
    tpu.vector_store %arg6[%c0_12, %c0_13], %17 {strides = array<i32>} : memref<2x16xf32, #tpu.memory_space<vmem>>, vector<2x16xf32>,
    return
  }
  func.func @transform_0(%arg0: i32) -> (i32, i32) {
    %c0_i32 = arith.constant 0 : i32
    %c0_i32_0 = arith.constant 0 : i32
    %c0_i32_1 = arith.constant 0 : i32
    return %c0_i32, %c0_i32_0 : i32, i32
  }
  func.func @transform_1(%arg0: i32) -> (i32, i32) {
    %c0_i32 = arith.constant 0 : i32
    %c0_i32_0 = arith.constant 0 : i32
    %c0_i32_1 = arith.constant 0 : i32
    return %c0_i32, %c0_i32_0 : i32, i32
  }
  func.func @transform_2(%arg0: i32) -> (i32, i32) {
    %c0_i32 = arith.constant 0 : i32
    %c0_i32_0 = arith.constant 0 : i32
    %c0_i32_1 = arith.constant 0 : i32
    return %c0_i32, %c0_i32_0 : i32, i32
  }
  func.func @transform_3(%arg0: i32) -> (i32, i32) {
    %c0_i32 = arith.constant 0 : i32
    %c0_i32_0 = arith.constant 0 : i32
    %c0_i32_1 = arith.constant 0 : i32
    return %c0_i32, %c0_i32_0 : i32, i32
  }
  func.func @transform_4(%arg0: i32) -> (i32, i32) {
    %c0_i32 = arith.constant 0 : i32
    %c0_i32_0 = arith.constant 0 : i32
    %c0_i32_1 = arith.constant 0 : i32
    return %c0_i32, %c0_i32_0 : i32, i32
  }
  func.func @transform_5(%arg0: i32) -> (i32, i32) {
    %c0_i32 = arith.constant 0 : i32
    %c0_i32_0 = arith.constant 0 : i32
    %c0_i32_1 = arith.constant 0 : i32
    return %c0_i32, %c0_i32_0 : i32, i32
  }
}

</mosaic_0001>

<llo_original>
// kernel: regstage_forward.8
$region0: #{regstage_forward.8}
  #allocation0 [shape = 'u32[]', space=smem, size = 0x4, offset = 0x4, fixed_abs, tag = 'smem constant byte address 0x4 - core index']
  #allocation1 [shape = 'u32[72,128]{1,0:T(1,128)}', space=vmem, size = 0x9000, scoped, tag = 'internal scratch']
  %s0 = inlined_call_operand.vmem [shape: bf16[512,8], index: 0, kind: input, shape index: {}]
  %s1 = inlined_call_operand.vmem [shape: bf16[8,16], index: 1, kind: input, shape index: {}]
  %s2 = inlined_call_operand.vmem [shape: f32[1,16], index: 2, kind: input, shape index: {}]
  %s3 = inlined_call_operand.vmem [shape: bf16[512,16], index: 3, kind: output, shape index: {}]
  %s4 = sld [smem:[#allocation0]]
  $region22: #{regstage_forward.8} parent=0
    _
  %s6 = ssub.s32 1, %s4
  %s7 = scalar_select 0, %s6, %s4
  // Predicated region
  $region2: #{regstage_forward.8} parent=0 // pred_check
    _
  $region3: #{regstage_forward.8} parent=0 // pred_check_branch
    %9 = sbr.rel (0) target = $region5
  $region4: #{regstage_forward.8} parent=0 // pred_region
    _
  $region5: #{regstage_forward.8} parent=0 // pred_fallthru
    _
  // Predicated region
  $region6: #{regstage_forward.8} parent=0 // pred_check
    _
  $region7: #{regstage_forward.8} parent=0 // pred_check_branch
    %11 = sbr.rel (0) target = $region9
  $region8: #{regstage_forward.8} parent=0 // pred_region
    _
  $region9: #{regstage_forward.8} parent=0 // pred_fallthru
    _
  // Predicated region
  $region10: #{regstage_forward.8} parent=0 // pred_check
    _
  $region11: #{regstage_forward.8} parent=0 // pred_check_branch
    %13 = sbr.rel (0) target = $region13
  $region12: #{regstage_forward.8} parent=0 // pred_region
    _
  $region13: #{regstage_forward.8} parent=0 // pred_fallthru
    _
  %v15 = vld [vmem:[%s0] sm:$0xf]
  %v16 = vld [vmem:[%s0 + $0x4] sm:$0xf]
  %v17 = vld [vmem:[%s0 + $0x8] sm:$0xf]
  %v18 = vld [vmem:[%s0 + $0xc] sm:$0xf]
  %v19 = vld [vmem:[%s0 + $0x10] sm:$0xf]
  %v20 = vld [vmem:[%s0 + $0x14] sm:$0xf]
  %v21 = vld [vmem:[%s0 + $0x18] sm:$0xf]
  %v22 = vld [vmem:[%s0 + $0x1c] sm:$0xf]
  %v23 = vld [vmem:[%s0 + $0x20] sm:$0xf]
  %v24 = vld [vmem:[%s0 + $0x24] sm:$0xf]
  %v25 = vld [vmem:[%s0 + $0x28] sm:$0xf]
  %v26 = vld [vmem:[%s0 + $0x2c] sm:$0xf]
  %v27 = vld [vmem:[%s0 + $0x30] sm:$0xf]
  %v28 = vld [vmem:[%s0 + $0x34] sm:$0xf]
  %v29 = vld [vmem:[%s0 + $0x38] sm:$0xf]
  %v30 = vld [vmem:[%s0 + $0x3c] sm:$0xf]
  %v31 = vld [vmem:[%s0 + $0x40] sm:$0xf]
  %v32 = vld [vmem:[%s0 + $0x44] sm:$0xf]
  %v33 = vld [vmem:[%s0 + $0x48] sm:$0xf]
  %v34 = vld [vmem:[%s0 + $0x4c] sm:$0xf]
  %v35 = vld [vmem:[%s0 + $0x50] sm:$0xf]
  %v36 = vld [vmem:[%s0 + $0x54] sm:$0xf]
  %v37 = vld [vmem:[%s0 + $0x58] sm:$0xf]
  %v38 = vld [vmem:[%s0 + $0x5c] sm:$0xf]
  %v39 = vld [vmem:[%s0 + $0x60] sm:$0xf]
  %v40 = vld [vmem:[%s0 + $0x64] sm:$0xf]
  %v41 = vld [vmem:[%s0 + $0x68] sm:$0xf]
  %v42 = vld [vmem:[%s0 + $0x6c] sm:$0xf]
  %v43 = vld [vmem:[%s0 + $0x70] sm:$0xf]
  %v44 = vld [vmem:[%s0 + $0x74] sm:$0xf]
  %v45 = vld [vmem:[%s0 + $0x78] sm:$0xf]
  %v46 = vld [vmem:[%s0 + $0x7c] sm:$0xf]
  %v47 = vld [vmem:[%s0 + $0x80] sm:$0xf]
  %v48 = vld [vmem:[%s0 + $0x84] sm:$0xf]
  %v49 = vld [vmem:[%s0 + $0x88] sm:$0xf]
  %v50 = vld [vmem:[%s0 + $0x8c] sm:$0xf]
  %v51 = vld [vmem:[%s0 + $0x90] sm:$0xf]
  %v52 = vld [vmem:[%s0 + $0x94] sm:$0xf]
  %v53 = vld [vmem:[%s0 + $0x98] sm:$0xf]
  %v54 = vld [vmem:[%s0 + $0x9c] sm:$0xf]
  %v55 = vld [vmem:[%s0 + $0xa0] sm:$0xf]
  %v56 = vld [vmem:[%s0 + $0xa4] sm:$0xf]
  %v57 = vld [vmem:[%s0 + $0xa8] sm:$0xf]
  %v58 = vld [vmem:[%s0 + $0xac] sm:$0xf]
  %v59 = vld [vmem:[%s0 + $0xb0] sm:$0xf]
  %v60 = vld [vmem:[%s0 + $0xb4] sm:$0xf]
  %v61 = vld [vmem:[%s0 + $0xb8] sm:$0xf]
  %v62 = vld [vmem:[%s0 + $0xbc] sm:$0xf]
  %v63 = vld [vmem:[%s0 + $0xc0] sm:$0xf]
  %v64 = vld [vmem:[%s0 + $0xc4] sm:$0xf]
  %v65 = vld [vmem:[%s0 + $0xc8] sm:$0xf]
  %v66 = vld [vmem:[%s0 + $0xcc] sm:$0xf]
  %v67 = vld [vmem:[%s0 + $0xd0] sm:$0xf]
  %v68 = vld [vmem:[%s0 + $0xd4] sm:$0xf]
  %v69 = vld [vmem:[%s0 + $0xd8] sm:$0xf]
  %v70 = vld [vmem:[%s0 + $0xdc] sm:$0xf]
  %v71 = vld [vmem:[%s0 + $0xe0] sm:$0xf]
  %v72 = vld [vmem:[%s0 + $0xe4] sm:$0xf]
  %v73 = vld [vmem:[%s0 + $0xe8] sm:$0xf]
  %v74 = vld [vmem:[%s0 + $0xec] sm:$0xf]
  %v75 = vld [vmem:[%s0 + $0xf0] sm:$0xf]
  %v76 = vld [vmem:[%s0 + $0xf4] sm:$0xf]
  %v77 = vld [vmem:[%s0 + $0xf8] sm:$0xf]
  %v78 = vld [vmem:[%s0 + $0xfc] sm:$0xf]
  %v79 = vld [vmem:[%s1] sm:$0xf]
  %v80 = vld [vmem:[%s2] sm:$0x1]
  %v82 = vperm.slane %v80, 0
  %v148 = vunpack.c.l.b16 %v15
  %v149 = vunpack.c.l.b16 %v16
  %v150 = vunpack.c.l.b16 %v17
  %v151 = vunpack.c.l.b16 %v18
  %v152 = vunpack.c.l.b16 %v19
  %v153 = vunpack.c.l.b16 %v20
  %v154 = vunpack.c.l.b16 %v21
  %v155 = vunpack.c.l.b16 %v22
  %v156 = vunpack.c.l.b16 %v23
  %v157 = vunpack.c.l.b16 %v24
  %v158 = vunpack.c.l.b16 %v25
  %v159 = vunpack.c.l.b16 %v26
  %v160 = vunpack.c.l.b16 %v27
  %v161 = vunpack.c.l.b16 %v28
  %v162 = vunpack.c.l.b16 %v29
  %v163 = vunpack.c.l.b16 %v30
  %v164 = vunpack.c.l.b16 %v31
  %v165 = vunpack.c.l.b16 %v32
  %v166 = vunpack.c.l.b16 %v33
  %v167 = vunpack.c.l.b16 %v34
  %v168 = vunpack.c.l.b16 %v35
  %v169 = vunpack.c.l.b16 %v36
  %v170 = vunpack.c.l.b16 %v37
  %v171 = vunpack.c.l.b16 %v38
  %v172 = vunpack.c.l.b16 %v39
  %v173 = vunpack.c.l.b16 %v40
  %v174 = vunpack.c.l.b16 %v41
  %v175 = vunpack.c.l.b16 %v42
  %v176 = vunpack.c.l.b16 %v43
  %v177 = vunpack.c.l.b16 %v44
  %v178 = vunpack.c.l.b16 %v45
  %v179 = vunpack.c.l.b16 %v46
  %v180 = vunpack.c.l.b16 %v47
  %v181 = vunpack.c.l.b16 %v48
  %v182 = vunpack.c.l.b16 %v49
  %v183 = vunpack.c.l.b16 %v50
  %v184 = vunpack.c.l.b16 %v51
  %v185 = vunpack.c.l.b16 %v52
  %v186 = vunpack.c.l.b16 %v53
  %v187 = vunpack.c.l.b16 %v54
  %v188 = vunpack.c.l.b16 %v55
  %v189 = vunpack.c.l.b16 %v56
  %v190 = vunpack.c.l.b16 %v57
  %v191 = vunpack.c.l.b16 %v58
  %v192 = vunpack.c.l.b16 %v59
  %v193 = vunpack.c.l.b16 %v60
  %v194 = vunpack.c.l.b16 %v61
  %v195 = vunpack.c.l.b16 %v62
  %v196 = vunpack.c.l.b16 %v63
  %v197 = vunpack.c.l.b16 %v64
  %v198 = vunpack.c.l.b16 %v65
  %v199 = vunpack.c.l.b16 %v66
  %v200 = vunpack.c.l.b16 %v67
  %v201 = vunpack.c.l.b16 %v68
  %v202 = vunpack.c.l.b16 %v69
  %v203 = vunpack.c.l.b16 %v70
  %v204 = vunpack.c.l.b16 %v71
  %v205 = vunpack.c.l.b16 %v72
  %v206 = vunpack.c.l.b16 %v73
  %v207 = vunpack.c.l.b16 %v74
  %v208 = vunpack.c.l.b16 %v75
  %v209 = vunpack.c.l.b16 %v76
  %v210 = vunpack.c.l.b16 %v77
  %v211 = vunpack.c.l.b16 %v78
  %v212 = vpack.c.b16 %v149, %v148
  %v213 = vpack.c.b16 %v151, %v150
  %v214 = vpack.c.b16 %v153, %v152
  %v215 = vpack.c.b16 %v155, %v154
  %v216 = vpack.c.b16 %v157, %v156
  %v217 = vpack.c.b16 %v159, %v158
  %v218 = vpack.c.b16 %v161, %v160
  %v219 = vpack.c.b16 %v163, %v162
  %v220 = vpack.c.b16 %v165, %v164
  %v221 = vpack.c.b16 %v167, %v166
  %v222 = vpack.c.b16 %v169, %v168
  %v223 = vpack.c.b16 %v171, %v170
  %v224 = vpack.c.b16 %v173, %v172
  %v225 = vpack.c.b16 %v175, %v174
  %v226 = vpack.c.b16 %v177, %v176
  %v227 = vpack.c.b16 %v179, %v178
  %v228 = vpack.c.b16 %v181, %v180
  %v229 = vpack.c.b16 %v183, %v182
  %v230 = vpack.c.b16 %v185, %v184
  %v231 = vpack.c.b16 %v187, %v186
  %v232 = vpack.c.b16 %v189, %v188
  %v233 = vpack.c.b16 %v191, %v190
  %v234 = vpack.c.b16 %v193, %v192
  %v235 = vpack.c.b16 %v195, %v194
  %v236 = vpack.c.b16 %v197, %v196
  %v237 = vpack.c.b16 %v199, %v198
  %v238 = vpack.c.b16 %v201, %v200
  %v239 = vpack.c.b16 %v203, %v202
  %v240 = vpack.c.b16 %v205, %v204
  %v241 = vpack.c.b16 %v207, %v206
  %v242 = vpack.c.b16 %v209, %v208
  %v243 = vpack.c.b16 %v211, %v210
  %vm244 = vcmask 64512
  %v246 = vsel %vm244, %v212, 0
  %v249 = vsel %vm244, %v213, 0
  %v252 = vsel %vm244, %v214, 0
  %v255 = vsel %vm244, %v215, 0
  %v258 = vsel %vm244, %v216, 0
  %v261 = vsel %vm244, %v217, 0
  %v264 = vsel %vm244, %v218, 0
  %v267 = vsel %vm244, %v219, 0
  %v270 = vsel %vm244, %v220, 0
  %v273 = vsel %vm244, %v221, 0
  %v276 = vsel %vm244, %v222, 0
  %v279 = vsel %vm244, %v223, 0
  %v282 = vsel %vm244, %v224, 0
  %v285 = vsel %vm244, %v225, 0
  %v288 = vsel %vm244, %v226, 0
  %v291 = vsel %vm244, %v227, 0
  %v294 = vsel %vm244, %v228, 0
  %v297 = vsel %vm244, %v229, 0
  %v300 = vsel %vm244, %v230, 0
  %v303 = vsel %vm244, %v231, 0
  %v306 = vsel %vm244, %v232, 0
  %v309 = vsel %vm244, %v233, 0
  %v312 = vsel %vm244, %v234, 0
  %v315 = vsel %vm244, %v235, 0
  %v318 = vsel %vm244, %v236, 0
  %v321 = vsel %vm244, %v237, 0
  %v324 = vsel %vm244, %v238, 0
  %v327 = vsel %vm244, %v239, 0
  %v330 = vsel %vm244, %v240, 0
  %v333 = vsel %vm244, %v241, 0
  %v336 = vsel %vm244, %v242, 0
  %v339 = vsel %vm244, %v243, 0
  %vm341 = vcmask 1043456
  %v343 = vsel %vm341, %v79, 0
  %345 = vmatpush.bf16.msra.mxu0 0
  %346 = vmatpush.bf16.msra.mxu0 0
  %347 = vmatpush.bf16.msra.mxu0 0
  %348 = vmatpush.bf16.msra.mxu0 0
  %349 = vmatpush.bf16.msra.mxu0 0
  %350 = vmatpush.bf16.msra.mxu0 0
  %351 = vmatpush.bf16.msra.mxu0 0
  %352 = vmatpush.bf16.msra.mxu0 %v343
  %353 = vmatmul.bf16.gmra.mxu0 %v246
  %v354 = vpop.f32.mrf.mxu0
  %v355 = vadd.f32 %v82, %v354
  %v356 = vpop.f32.mrf.mxu0
  %v357 = vadd.f32 %v82, %v356
  %358 = vmatmul.bf16.gmra.mxu0 %v249
  %v359 = vpop.f32.mrf.mxu0
  %v360 = vadd.f32 %v82, %v359
  %v361 = vpop.f32.mrf.mxu0
  %v362 = vadd.f32 %v82, %v361
  %363 = vmatmul.bf16.gmra.mxu0 %v252
  %v364 = vpop.f32.mrf.mxu0
  %v365 = vadd.f32 %v82, %v364
  %v366 = vpop.f32.mrf.mxu0
  %v367 = vadd.f32 %v82, %v366
  %368 = vmatmul.bf16.gmra.mxu0 %v255
  %v369 = vpop.f32.mrf.mxu0
  %v370 = vadd.f32 %v82, %v369
  %v371 = vpop.f32.mrf.mxu0
  %v372 = vadd.f32 %v82, %v371
  %373 = vmatmul.bf16.gmra.mxu0 %v258
  %v374 = vpop.f32.mrf.mxu0
  %v375 = vadd.f32 %v82, %v374
  %v376 = vpop.f32.mrf.mxu0
  %v377 = vadd.f32 %v82, %v376
  %378 = vmatmul.bf16.gmra.mxu0 %v261
  %v379 = vpop.f32.mrf.mxu0
  %v380 = vadd.f32 %v82, %v379
  %v381 = vpop.f32.mrf.mxu0
  %v382 = vadd.f32 %v82, %v381
  %383 = vmatmul.bf16.gmra.mxu0 %v264
  %v384 = vpop.f32.mrf.mxu0
  %v385 = vadd.f32 %v82, %v384
  %v386 = vpop.f32.mrf.mxu0
  %v387 = vadd.f32 %v82, %v386
  %388 = vmatmul.bf16.gmra.mxu0 %v267
  %v389 = vpop.f32.mrf.mxu0
  %v390 = vadd.f32 %v82, %v389
  %v391 = vpop.f32.mrf.mxu0
  %v392 = vadd.f32 %v82, %v391
  %393 = vmatmul.bf16.gmra.mxu0 %v270
  %v394 = vpop.f32.mrf.mxu0
  %v395 = vadd.f32 %v82, %v394
  %v396 = vpop.f32.mrf.mxu0
  %v397 = vadd.f32 %v82, %v396
  %398 = vmatmul.bf16.gmra.mxu0 %v273
  %v399 = vpop.f32.mrf.mxu0
  %v400 = vadd.f32 %v82, %v399
  %v401 = vpop.f32.mrf.mxu0
  %v402 = vadd.f32 %v82, %v401
  %403 = vmatmul.bf16.gmra.mxu0 %v276
  %v404 = vpop.f32.mrf.mxu0
  %v405 = vadd.f32 %v82, %v404
  %v406 = vpop.f32.mrf.mxu0
  %v407 = vadd.f32 %v82, %v406
  %408 = vmatmul.bf16.gmra.mxu0 %v279
  %v409 = vpop.f32.mrf.mxu0
  %v410 = vadd.f32 %v82, %v409
  %v411 = vpop.f32.mrf.mxu0
  %v412 = vadd.f32 %v82, %v411
  %413 = vmatmul.bf16.gmra.mxu0 %v282
  %v414 = vpop.f32.mrf.mxu0
  %v415 = vadd.f32 %v82, %v414
  %v416 = vpop.f32.mrf.mxu0
  %v417 = vadd.f32 %v82, %v416
  %418 = vmatmul.bf16.gmra.mxu0 %v285
  %v419 = vpop.f32.mrf.mxu0
  %v420 = vadd.f32 %v82, %v419
  %v421 = vpop.f32.mrf.mxu0
  %v422 = vadd.f32 %v82, %v421
  %423 = vmatmul.bf16.gmra.mxu0 %v288
  %v424 = vpop.f32.mrf.mxu0
  %v425 = vadd.f32 %v82, %v424
  %v426 = vpop.f32.mrf.mxu0
  %v427 = vadd.f32 %v82, %v426
  %428 = vmatmul.bf16.gmra.mxu0 %v291
  %v429 = vpop.f32.mrf.mxu0
  %v430 = vadd.f32 %v82, %v429
  %v431 = vpop.f32.mrf.mxu0
  %v432 = vadd.f32 %v82, %v431
  %433 = vmatmul.bf16.gmra.mxu0 %v294
  %v434 = vpop.f32.mrf.mxu0
  %v435 = vadd.f32 %v82, %v434
  %v436 = vpop.f32.mrf.mxu0
  %v437 = vadd.f32 %v82, %v436
  %438 = vmatmul.bf16.gmra.mxu0 %v297
  %v439 = vpop.f32.mrf.mxu0
  %v440 = vadd.f32 %v82, %v439
  %v441 = vpop.f32.mrf.mxu0
  %v442 = vadd.f32 %v82, %v441
  %443 = vmatmul.bf16.gmra.mxu0 %v300
  %v444 = vpop.f32.mrf.mxu0
  %v445 = vadd.f32 %v82, %v444
  %v446 = vpop.f32.mrf.mxu0
  %v447 = vadd.f32 %v82, %v446
  %448 = vmatmul.bf16.gmra.mxu0 %v303
  %v449 = vpop.f32.mrf.mxu0
  %v450 = vadd.f32 %v82, %v449
  %v451 = vpop.f32.mrf.mxu0
  %v452 = vadd.f32 %v82, %v451
  %453 = vmatmul.bf16.gmra.mxu0 %v306
  %v454 = vpop.f32.mrf.mxu0
  %v455 = vadd.f32 %v82, %v454
  %v456 = vpop.f32.mrf.mxu0
  %v457 = vadd.f32 %v82, %v456
  %458 = vmatmul.bf16.gmra.mxu0 %v309
  %v459 = vpop.f32.mrf.mxu0
  %v460 = vadd.f32 %v82, %v459
  %v461 = vpop.f32.mrf.mxu0
  %v462 = vadd.f32 %v82, %v461
  %463 = vmatmul.bf16.gmra.mxu0 %v312
  %v464 = vpop.f32.mrf.mxu0
  %v465 = vadd.f32 %v82, %v464
  %v466 = vpop.f32.mrf.mxu0
  %v467 = vadd.f32 %v82, %v466
  %468 = vmatmul.bf16.gmra.mxu0 %v315
  %v469 = vpop.f32.mrf.mxu0
  %v470 = vadd.f32 %v82, %v469
  %v471 = vpop.f32.mrf.mxu0
  %v472 = vadd.f32 %v82, %v471
  %473 = vmatmul.bf16.gmra.mxu0 %v318
  %v474 = vpop.f32.mrf.mxu0
  %v475 = vadd.f32 %v82, %v474
  %v476 = vpop.f32.mrf.mxu0
  %v477 = vadd.f32 %v82, %v476
  %478 = vmatmul.bf16.gmra.mxu0 %v321
  %v479 = vpop.f32.mrf.mxu0
  %v480 = vadd.f32 %v82, %v479
  %v481 = vpop.f32.mrf.mxu0
  %v482 = vadd.f32 %v82, %v481
  %483 = vmatmul.bf16.gmra.mxu0 %v324
  %v484 = vpop.f32.mrf.mxu0
  %v485 = vadd.f32 %v82, %v484
  %v486 = vpop.f32.mrf.mxu0
  %v487 = vadd.f32 %v82, %v486
  %488 = vmatmul.bf16.gmra.mxu0 %v327
  %v489 = vpop.f32.mrf.mxu0
  %v490 = vadd.f32 %v82, %v489
  %v491 = vpop.f32.mrf.mxu0
  %v492 = vadd.f32 %v82, %v491
  %493 = vmatmul.bf16.gmra.mxu0 %v330
  %v494 = vpop.f32.mrf.mxu0
  %v495 = vadd.f32 %v82, %v494
  %v496 = vpop.f32.mrf.mxu0
  %v497 = vadd.f32 %v82, %v496
  %498 = vmatmul.bf16.gmra.mxu0 %v333
  %v499 = vpop.f32.mrf.mxu0
  %v500 = vadd.f32 %v82, %v499
  %v501 = vpop.f32.mrf.mxu0
  %v502 = vadd.f32 %v82, %v501
  %503 = vmatmul.bf16.gmra.mxu0 %v336
  %v504 = vpop.f32.mrf.mxu0
  %v505 = vadd.f32 %v82, %v504
  %v506 = vpop.f32.mrf.mxu0
  %v507 = vadd.f32 %v82, %v506
  %508 = vmatmul.bf16.gmra.mxu0 %v339
  %v509 = vpop.f32.mrf.mxu0
  %v510 = vadd.f32 %v82, %v509
  %v511 = vpop.f32.mrf.mxu0
  %v512 = vadd.f32 %v82, %v511
  %513 = vdwg.mxu0
  %v514 = vmax.f32 %v355, 0.0
  %v515 = vmax.f32 %v357, 0.0
  %v516 = vmax.f32 %v360, 0.0
  %v517 = vmax.f32 %v362, 0.0
  %v518 = vmax.f32 %v365, 0.0
  %v519 = vmax.f32 %v367, 0.0
  %v520 = vmax.f32 %v370, 0.0
  %v521 = vmax.f32 %v372, 0.0
  %v522 = vmax.f32 %v375, 0.0
  %v523 = vmax.f32 %v377, 0.0
  %v524 = vmax.f32 %v380, 0.0
  %v525 = vmax.f32 %v382, 0.0
  %v526 = vmax.f32 %v385, 0.0
  %v527 = vmax.f32 %v387, 0.0
  %v528 = vmax.f32 %v390, 0.0
  %v529 = vmax.f32 %v392, 0.0
  %v530 = vmax.f32 %v395, 0.0
  %v531 = vmax.f32 %v397, 0.0
  %v532 = vmax.f32 %v400, 0.0
  %v533 = vmax.f32 %v402, 0.0
  %v534 = vmax.f32 %v405, 0.0
  %v535 = vmax.f32 %v407, 0.0
  %v536 = vmax.f32 %v410, 0.0
  %v537 = vmax.f32 %v412, 0.0
  %v538 = vmax.f32 %v415, 0.0
  %v539 = vmax.f32 %v417, 0.0
  %v540 = vmax.f32 %v420, 0.0
  %v541 = vmax.f32 %v422, 0.0
  %v542 = vmax.f32 %v425, 0.0
  %v543 = vmax.f32 %v427, 0.0
  %v544 = vmax.f32 %v430, 0.0
  %v545 = vmax.f32 %v432, 0.0
  %v546 = vmax.f32 %v435, 0.0
  %v547 = vmax.f32 %v437, 0.0
  %v548 = vmax.f32 %v440, 0.0
  %v549 = vmax.f32 %v442, 0.0
  %v550 = vmax.f32 %v445, 0.0
  %v551 = vmax.f32 %v447, 0.0
  %v552 = vmax.f32 %v450, 0.0
  %v553 = vmax.f32 %v452, 0.0
  %v554 = vmax.f32 %v455, 0.0
  %v555 = vmax.f32 %v457, 0.0
  %v556 = vmax.f32 %v460, 0.0
  %v557 = vmax.f32 %v462, 0.0
  %v558 = vmax.f32 %v465, 0.0
  %v559 = vmax.f32 %v467, 0.0
  %v560 = vmax.f32 %v470, 0.0
  %v561 = vmax.f32 %v472, 0.0
  %v562 = vmax.f32 %v475, 0.0
  %v563 = vmax.f32 %v477, 0.0
  %v564 = vmax.f32 %v480, 0.0
  %v565 = vmax.f32 %v482, 0.0
  %v566 = vmax.f32 %v485, 0.0
  %v567 = vmax.f32 %v487, 0.0
  %v568 = vmax.f32 %v490, 0.0
  %v569 = vmax.f32 %v492, 0.0
  %v570 = vmax.f32 %v495, 0.0
  %v571 = vmax.f32 %v497, 0.0
  %v572 = vmax.f32 %v500, 0.0
  %v573 = vmax.f32 %v502, 0.0
  %v574 = vmax.f32 %v505, 0.0
  %v575 = vmax.f32 %v507, 0.0
  %v576 = vmax.f32 %v510, 0.0
  %v577 = vmax.f32 %v512, 0.0
  %v578 = vpack.c.bf16 %v514, %v514
  %v579 = vpack.c.bf16 %v515, %v515
  %v580 = vpack.c.bf16 %v516, %v516
  %v581 = vpack.c.bf16 %v517, %v517
  %v582 = vpack.c.bf16 %v518, %v518
  %v583 = vpack.c.bf16 %v519, %v519
  %v584 = vpack.c.bf16 %v520, %v520
  %v585 = vpack.c.bf16 %v521, %v521
  %v586 = vpack.c.bf16 %v522, %v522
  %v587 = vpack.c.bf16 %v523, %v523
  %v588 = vpack.c.bf16 %v524, %v524
  %v589 = vpack.c.bf16 %v525, %v525
  %v590 = vpack.c.bf16 %v526, %v526
  %v591 = vpack.c.bf16 %v527, %v527
  %v592 = vpack.c.bf16 %v528, %v528
  %v593 = vpack.c.bf16 %v529, %v529
  %v594 = vpack.c.bf16 %v530, %v530
  %v595 = vpack.c.bf16 %v531, %v531
  %v596 = vpack.c.bf16 %v532, %v532
  %v597 = vpack.c.bf16 %v533, %v533
  %v598 = vpack.c.bf16 %v534, %v534
  %v599 = vpack.c.bf16 %v535, %v535
  %v600 = vpack.c.bf16 %v536, %v536
  %v601 = vpack.c.bf16 %v537, %v537
  %v602 = vpack.c.bf16 %v538, %v538
  %v603 = vpack.c.bf16 %v539, %v539
  %v604 = vpack.c.bf16 %v540, %v540
  %v605 = vpack.c.bf16 %v541, %v541
  %v606 = vpack.c.bf16 %v542, %v542
  %v607 = vpack.c.bf16 %v543, %v543
  %v608 = vpack.c.bf16 %v544, %v544
  %v609 = vpack.c.bf16 %v545, %v545
  %v610 = vpack.c.bf16 %v546, %v546
  %v611 = vpack.c.bf16 %v547, %v547
  %v612 = vpack.c.bf16 %v548, %v548
  %v613 = vpack.c.bf16 %v549, %v549
  %v614 = vpack.c.bf16 %v550, %v550
  %v615 = vpack.c.bf16 %v551, %v551
  %v616 = vpack.c.bf16 %v552, %v552
  %v617 = vpack.c.bf16 %v553, %v553
  %v618 = vpack.c.bf16 %v554, %v554
  %v619 = vpack.c.bf16 %v555, %v555
  %v620 = vpack.c.bf16 %v556, %v556
  %v621 = vpack.c.bf16 %v557, %v557
  %v622 = vpack.c.bf16 %v558, %v558
  %v623 = vpack.c.bf16 %v559, %v559
  %v624 = vpack.c.bf16 %v560, %v560
  %v625 = vpack.c.bf16 %v561, %v561
  %v626 = vpack.c.bf16 %v562, %v562
  %v627 = vpack.c.bf16 %v563, %v563
  %v628 = vpack.c.bf16 %v564, %v564
  %v629 = vpack.c.bf16 %v565, %v565
  %v630 = vpack.c.bf16 %v566, %v566
  %v631 = vpack.c.bf16 %v567, %v567
  %v632 = vpack.c.bf16 %v568, %v568
  %v633 = vpack.c.bf16 %v569, %v569
  %v634 = vpack.c.bf16 %v570, %v570
  %v635 = vpack.c.bf16 %v571, %v571
  %v636 = vpack.c.bf16 %v572, %v572
  %v637 = vpack.c.bf16 %v573, %v573
  %v638 = vpack.c.bf16 %v574, %v574
  %v639 = vpack.c.bf16 %v575, %v575
  %v640 = vpack.c.bf16 %v576, %v576
  %v641 = vpack.c.bf16 %v577, %v577
  %vm642 = vcmask 125952
  %643 = vst.msk [vmem:[%s3] sm:$0xf] %vm642, %v578
  %644 = vst.msk [vmem:[%s3 + $0x4] sm:$0xf] %vm642, %v579
  %645 = vst.msk [vmem:[%s3 + $0x8] sm:$0xf] %vm642, %v580
  %646 = vst.msk [vmem:[%s3 + $0xc] sm:$0xf] %vm642, %v581
  %647 = vst.msk [vmem:[%s3 + $0x10] sm:$0xf] %vm642, %v582
  %648 = vst.msk [vmem:[%s3 + $0x14] sm:$0xf] %vm642, %v583
  %649 = vst.msk [vmem:[%s3 + $0x18] sm:$0xf] %vm642, %v584
  %650 = vst.msk [vmem:[%s3 + $0x1c] sm:$0xf] %vm642, %v585
  %651 = vst.msk [vmem:[%s3 + $0x20] sm:$0xf] %vm642, %v586
  %652 = vst.msk [vmem:[%s3 + $0x24] sm:$0xf] %vm642, %v587
  %653 = vst.msk [vmem:[%s3 + $0x28] sm:$0xf] %vm642, %v588
  %654 = vst.msk [vmem:[%s3 + $0x2c] sm:$0xf] %vm642, %v589
  %655 = vst.msk [vmem:[%s3 + $0x30] sm:$0xf] %vm642, %v590
  %656 = vst.msk [vmem:[%s3 + $0x34] sm:$0xf] %vm642, %v591
  %657 = vst.msk [vmem:[%s3 + $0x38] sm:$0xf] %vm642, %v592
  %658 = vst.msk [vmem:[%s3 + $0x3c] sm:$0xf] %vm642, %v593
  %659 = vst.msk [vmem:[%s3 + $0x40] sm:$0xf] %vm642, %v594
  %660 = vst.msk [vmem:[%s3 + $0x44] sm:$0xf] %vm642, %v595
  %661 = vst.msk [vmem:[%s3 + $0x48] sm:$0xf] %vm642, %v596
  %662 = vst.msk [vmem:[%s3 + $0x4c] sm:$0xf] %vm642, %v597
  %663 = vst.msk [vmem:[%s3 + $0x50] sm:$0xf] %vm642, %v598
  %664 = vst.msk [vmem:[%s3 + $0x54] sm:$0xf] %vm642, %v599
  %665 = vst.msk [vmem:[%s3 + $0x58] sm:$0xf] %vm642, %v600
  %666 = vst.msk [vmem:[%s3 + $0x5c] sm:$0xf] %vm642, %v601
  %667 = vst.msk [vmem:[%s3 + $0x60] sm:$0xf] %vm642, %v602
  %668 = vst.msk [vmem:[%s3 + $0x64] sm:$0xf] %vm642, %v603
  %669 = vst.msk [vmem:[%s3 + $0x68] sm:$0xf] %vm642, %v604
  %670 = vst.msk [vmem:[%s3 + $0x6c] sm:$0xf] %vm642, %v605
  %671 = vst.msk [vmem:[%s3 + $0x70] sm:$0xf] %vm642, %v606
  %672 = vst.msk [vmem:[%s3 + $0x74] sm:$0xf] %vm642, %v607
  %673 = vst.msk [vmem:[%s3 + $0x78] sm:$0xf] %vm642, %v608
  %674 = vst.msk [vmem:[%s3 + $0x7c] sm:$0xf] %vm642, %v609
  %675 = vst.msk [vmem:[%s3 + $0x80] sm:$0xf] %vm642, %v610
  %676 = vst.msk [vmem:[%s3 + $0x84] sm:$0xf] %vm642, %v611
  %677 = vst.msk [vmem:[%s3 + $0x88] sm:$0xf] %vm642, %v612
  %678 = vst.msk [vmem:[%s3 + $0x8c] sm:$0xf] %vm642, %v613
  %679 = vst.msk [vmem:[%s3 + $0x90] sm:$0xf] %vm642, %v614
  %680 = vst.msk [vmem:[%s3 + $0x94] sm:$0xf] %vm642, %v615
  %681 = vst.msk [vmem:[%s3 + $0x98] sm:$0xf] %vm642, %v616
  %682 = vst.msk [vmem:[%s3 + $0x9c] sm:$0xf] %vm642, %v617
  %683 = vst.msk [vmem:[%s3 + $0xa0] sm:$0xf] %vm642, %v618
  %684 = vst.msk [vmem:[%s3 + $0xa4] sm:$0xf] %vm642, %v619
  %685 = vst.msk [vmem:[%s3 + $0xa8] sm:$0xf] %vm642, %v620
  %686 = vst.msk [vmem:[%s3 + $0xac] sm:$0xf] %vm642, %v621
  %687 = vst.msk [vmem:[%s3 + $0xb0] sm:$0xf] %vm642, %v622
  %688 = vst.msk [vmem:[%s3 + $0xb4] sm:$0xf] %vm642, %v623
  %689 = vst.msk [vmem:[%s3 + $0xb8] sm:$0xf] %vm642, %v624
  %690 = vst.msk [vmem:[%s3 + $0xbc] sm:$0xf] %vm642, %v625
  %691 = vst.msk [vmem:[%s3 + $0xc0] sm:$0xf] %vm642, %v626
  %692 = vst.msk [vmem:[%s3 + $0xc4] sm:$0xf] %vm642, %v627
  %693 = vst.msk [vmem:[%s3 + $0xc8] sm:$0xf] %vm642, %v628
  %694 = vst.msk [vmem:[%s3 + $0xcc] sm:$0xf] %vm642, %v629
  %695 = vst.msk [vmem:[%s3 + $0xd0] sm:$0xf] %vm642, %v630
  %696 = vst.msk [vmem:[%s3 + $0xd4] sm:$0xf] %vm642, %v631
  %697 = vst.msk [vmem:[%s3 + $0xd8] sm:$0xf] %vm642, %v632
  %698 = vst.msk [vmem:[%s3 + $0xdc] sm:$0xf] %vm642, %v633
  %699 = vst.msk [vmem:[%s3 + $0xe0] sm:$0xf] %vm642, %v634
  %700 = vst.msk [vmem:[%s3 + $0xe4] sm:$0xf] %vm642, %v635
  %701 = vst.msk [vmem:[%s3 + $0xe8] sm:$0xf] %vm642, %v636
  %702 = vst.msk [vmem:[%s3 + $0xec] sm:$0xf] %vm642, %v637
  %703 = vst.msk [vmem:[%s3 + $0xf0] sm:$0xf] %vm642, %v638
  %704 = vst.msk [vmem:[%s3 + $0xf4] sm:$0xf] %vm642, %v639
  %705 = vst.msk [vmem:[%s3 + $0xf8] sm:$0xf] %vm642, %v640
  %706 = vst.msk [vmem:[%s3 + $0xfc] sm:$0xf] %vm642, %v641
  // Predicated region
  $region14: #{regstage_forward.8} parent=0 // pred_check
    _
  $region15: #{regstage_forward.8} parent=0 // pred_check_branch
    %708 = sbr.rel (0) target = $region17
  $region16: #{regstage_forward.8} parent=0 // pred_region
    _
  $region17: #{regstage_forward.8} parent=0 // pred_fallthru
    _
  // Predicated region
  $region18: #{regstage_forward.8} parent=0 // pred_check
    _
  $region19: #{regstage_forward.8} parent=0 // pred_check_branch
    %710 = sbr.rel (0) target = $region21
  $region20: #{regstage_forward.8} parent=0 // pred_region
    _
  $region21: #{regstage_forward.8} parent=0 // pred_fallthru
    _

// kernel: regstage_forward.10
$region0: #{regstage_forward.10}
  #allocation0 [shape = 'u32[]', space=smem, size = 0x4, offset = 0x4, fixed_abs, tag = 'smem constant byte address 0x4 - core index']
  #allocation1 [shape = 'u32[72,128]{1,0:T(1,128)}', space=vmem, size = 0x9000, scoped, tag = 'internal scratch']
  %s0 = inlined_call_operand.vmem [shape: f32[2,16], index: 0, kind: input, shape index: {}]
  %s1 = inlined_call_operand.vmem [shape: f32[16,2], index: 1, kind: input, shape index: {}]
  %s2 = inlined_call_operand.vmem [shape: f32[1,2], index: 2, kind: input, shape index: {}]
  %s3 = inlined_call_operand.vmem [shape: f32[2,16], index: 3, kind: input, shape index: {}]
  %s4 = inlined_call_operand.vmem [shape: f32[1,16], index: 4, kind: input, shape index: {}]
  %s5 = inlined_call_operand.vmem [shape: f32[2,16], index: 5, kind: output, shape index: {}]
  %s6 = sld [smem:[#allocation0]]
  $region30: #{regstage_forward.10} parent=0
    _
  %s8 = ssub.s32 1, %s6
  %s9 = scalar_select 0, %s8, %s6
  // Predicated region
  $region2: #{regstage_forward.10} parent=0 // pred_check
    _
  $region3: #{regstage_forward.10} parent=0 // pred_check_branch
    %11 = sbr.rel (0) target = $region5
  $region4: #{regstage_forward.10} parent=0 // pred_region
    _
  $region5: #{regstage_forward.10} parent=0 // pred_fallthru
    _
  // Predicated region
  $region6: #{regstage_forward.10} parent=0 // pred_check
    _
  $region7: #{regstage_forward.10} parent=0 // pred_check_branch
    %13 = sbr.rel (0) target = $region9
  $region8: #{regstage_forward.10} parent=0 // pred_region
    _
  $region9: #{regstage_forward.10} parent=0 // pred_fallthru
    _
  // Predicated region
  $region10: #{regstage_forward.10} parent=0 // pred_check
    _
  $region11: #{regstage_forward.10} parent=0 // pred_check_branch
    %15 = sbr.rel (0) target = $region13
  $region12: #{regstage_forward.10} parent=0 // pred_region
    _
  $region13: #{regstage_forward.10} parent=0 // pred_fallthru
    _
  // Predicated region
  $region14: #{regstage_forward.10} parent=0 // pred_check
    _
  $region15: #{regstage_forward.10} parent=0 // pred_check_branch
    %17 = sbr.rel (0) target = $region17
  $region16: #{regstage_forward.10} parent=0 // pred_region
    _
  $region17: #{regstage_forward.10} parent=0 // pred_fallthru
    _
  // Predicated region
  $region18: #{regstage_forward.10} parent=0 // pred_check
    _
  $region19: #{regstage_forward.10} parent=0 // pred_check_branch
    %19 = sbr.rel (0) target = $region21
  $region20: #{regstage_forward.10} parent=0 // pred_region
    _
  $region21: #{regstage_forward.10} parent=0 // pred_fallthru
    _
  %v20 = vld [vmem:[%s0] sm:$0x3]
  %v21 = vld [vmem:[%s1] sm:$0xff]
  %v22 = vld [vmem:[%s1 + $0x8] sm:$0xff]
  %v23 = vld [vmem:[%s2] sm:$0x1]
  %v25 = vperm.slane %v23, 0
  %vm27 = vcmask 130048
  %v29 = vsel %vm27, %v20, 0
  %31 = vmatpush.msra.mxu0 0.0
  %32 = vmatpush.msra.mxu0 0.0
  %33 = vmatpush.msra.mxu0 0.0
  %34 = vmatpush.msra.mxu0 0.0
  %35 = vmatpush.msra.mxu0 0.0
  %36 = vmatpush.msra.mxu0 0.0
  %37 = vmatpush.msra.mxu0 0.0
  %38 = vmatpush.msra.mxu0 0.0
  %39 = vmatpush.msra.mxu0 0.0
  %40 = vmatpush.msra.mxu0 0.0
  %41 = vmatpush.msra.mxu0 0.0
  %42 = vmatpush.msra.mxu0 0.0
  %43 = vmatpush.msra.mxu0 0.0
  %44 = vmatpush.msra.mxu0 0.0
  %45 = vmatpush.msra.mxu0 %v22
  %46 = vmatpush.msra.mxu0 %v21
  %47 = vmatmul.f32.gmra.mxu0 %v29
  %v48 = vpop.f32.mrf.mxu0
  %v49 = vadd.f32 %v25, %v48
  %50 = vdwg.mxu0
  %v51 = vmax.f32 %v49, 0.0
  %v52 = vld [vmem:[%s3] sm:$0x3]
  %v53 = vld [vmem:[%s4] sm:$0x1]
  %v55 = vperm.slane %v53, 0
  %vm57 = vcmask 15360
  %v59 = vsel %vm57, %v51, 0
  %vm61 = vcmask 1041408
  %v63 = vsel %vm61, %v52, 0
  %65 = vmatpush.msra.mxu0 0.0
  %66 = vmatpush.msra.mxu0 0.0
  %67 = vmatpush.msra.mxu0 0.0
  %68 = vmatpush.msra.mxu0 0.0
  %69 = vmatpush.msra.mxu0 0.0
  %70 = vmatpush.msra.mxu0 0.0
  %71 = vmatpush.msra.mxu0 0.0
  %72 = vmatpush.msra.mxu0 0.0
  %73 = vmatpush.msra.mxu0 0.0
  %74 = vmatpush.msra.mxu0 0.0
  %75 = vmatpush.msra.mxu0 0.0
  %76 = vmatpush.msra.mxu0 0.0
  %77 = vmatpush.msra.mxu0 0.0
  %78 = vmatpush.msra.mxu0 0.0
  %79 = vmatpush.msra.mxu0 0.0
  %80 = vmatpush.msra.mxu0 %v63
  %81 = vmatmul.f32.gmra.mxu0 %v59
  %v82 = vpop.f32.mrf.mxu0
  %v83 = vadd.f32 %v55, %v82
  %84 = vdwg.mxu0
  %v85 = vxor.u32 %v83, 2147483648
  %v86 = vmul.f32 %v85, 1.442695
  %v87 = vpow.pop %v86
  %v88 = vadd.f32 %v87, 1.0
  %v89 = vrcp.pop %v88
  %v90 = vmul.f32 %v88, %v89
  %v91 = vsub.f32 1.0, %v90
  %v92 = vmul.f32 %v89, %v91
  %v93 = vadd.f32 %v89, %v92
  %vm94 = vweird.f32 %v88
  %vm95 = vweird.f32 %v89
  %vm96 = vmor %vm94, %vm95
  %v97 = vsel %vm96, %v89, %v93
  %v98 = vand.u32 2147483647, %v88
  %vm99 = vcmp.eq.f32.partialorder %v98, 8.507059e+37
  %v100 = vand.u32 %v88, 2147483648
  %v101 = vor.u32 1.1754944e-38, %v100
  %v102 = vsel %vm99, %v101, %v97
  %v103 = vmul.f32 1.0, %v102
  %vm104 = vcmask 123904
  %105 = vst.msk [vmem:[%s5] sm:$0x3] %vm104, %v103
  // Predicated region
  $region22: #{regstage_forward.10} parent=0 // pred_check
    _
  $region23: #{regstage_forward.10} parent=0 // pred_check_branch
    %107 = sbr.rel (0) target = $region25
  $region24: #{regstage_forward.10} parent=0 // pred_region
    _
  $region25: #{regstage_forward.10} parent=0 // pred_fallthru
    _
  // Predicated region
  $region26: #{regstage_forward.10} parent=0 // pred_check
    _
  $region27: #{regstage_forward.10} parent=0 // pred_check_branch
    %109 = sbr.rel (0) target = $region29
  $region28: #{regstage_forward.10} parent=0 // pred_region
    _
  $region29: #{regstage_forward.10} parent=0 // pred_fallthru
    _

// kernel: regstage_forward.9
$region0: #{regstage_forward.9}
  #allocation0 [shape = 'u32[]', space=smem, size = 0x4, offset = 0x4, fixed_abs, tag = 'smem constant byte address 0x4 - core index']
  #allocation1 [shape = 'u32[72,128]{1,0:T(1,128)}', space=vmem, size = 0x9000, scoped, tag = 'internal scratch']
  %s0 = inlined_call_operand.vmem [shape: bf16[6,8,9,16], index: 0, kind: input, shape index: {}]
  %s1 = inlined_call_operand.vmem [shape: bf16[6,8,8,16], index: 1, kind: input, shape index: {}]
  %s2 = inlined_call_operand.vmem [shape: f32[3,3,16], index: 2, kind: input, shape index: {}]
  %s3 = inlined_call_operand.vmem [shape: f32[1,1,16], index: 3, kind: input, shape index: {}]
  %s4 = inlined_call_operand.vmem [shape: bf16[2,8,8,16], index: 4, kind: output, shape index: {0}]
  %s5 = inlined_call_operand.vmem [shape: f32[2,1,16], index: 5, kind: output, shape index: {1}]
  %6 = xla_tuple %s4, %s5
  %s7 = sld [smem:[#allocation0]]
  $region65: #{regstage_forward.9} parent=0
    _
  %s9 = ssub.s32 1, %s7
  %s10 = scalar_select 0, %s9, %s7
  loop: start=0, step=1, limit=4
  $region2: #{regstage_forward.9} parent=0 // loop_pre_header
    _
  $region3: #{regstage_forward.9} parent=0 // loop_header
    %s12 = sphi 0, %s16
    %p13 = scmp.ge.s32.totalorder %s12, 4
    %s19 = sphi 0, %s31
    %s20 = sphi 0, %s27
    %s21 = sphi 0, %s19
    %s22 = sphi 0, %s20
    %s23 = sphi 0, %s21
    %s24 = sphi 0, %s22
    %s36 = sphi 0, %s38
    %s39 = sphi 0, %s36
    %s40 = sphi 0, %s39
    %s56 = sphi 0, %s40
    %s64 = sphi 0, %s66
    %s67 = sphi 0, %s64
    %s68 = sphi 0, %s67
    %s84 = sphi 0, %s68
    %s88 = sphi 0, %s88
    %s90 = sphi 0, %s88
    %s91 = sphi 0, %s90
    %s105 = sphi 0, %s91
    %s109 = sphi 0, %s109
    %s111 = sphi 0, %s109
    %s112 = sphi 0, %s111
    %s126 = sphi 0, %s112
    %s134 = sphi 0, %s136
    %s137 = sphi 0, %s134
    %s138 = sphi 0, %s137
    %s154 = sphi 0, %s138
    %s160 = sphi 0, %s162
    %s163 = sphi 0, %s160
    %s164 = sphi 0, %s163
    %s180 = sphi 0, %s164
  $region4: #{regstage_forward.9} parent=0 // loop_header_branch
    %15 = sbr.rel (%p13) target = $region8
  $region5: #{regstage_forward.9} parent=0 // loop_body
    %s17 = ssub.s32 %s12, 1
    %s18 = ssub.s32 %s12, 2
    %s25 = sadd.s32 1, %s20
    %p26 = scmp.ge.s32.totalorder %s25, 1
    %s27 = scalar_select %p26, 0, %s25
    %s28 = sadd.s32 1, %s19
    %s29 = scalar_select %p26, %s28, %s19
    %p30 = scmp.ge.s32.totalorder %s29, 2
    %s31 = scalar_select %p30, 0, %s29
    %s32 = ssub.s32 %s19, %s31
    %s33 = ssub.s32 %s20, %s27
    %s34 = sor.u32 %s32, %s33
    %p35 = scmp.eq.s32.totalorder %s34, 0
    %s37 = sadd.s32 %s36, 1
    %s38 = scalar_select %p35, %s36, %s37
    %p41 = pneg %p35
    %p42 = scmp.eq.s32.totalorder %s12, 1
    %p43 = por %p41, %p42
    %p44 = scmp.ne.s32.totalorder %s36, %s39
    %p45 = scmp.eq.s32.totalorder %s12, 0
    %p46 = por %p44, %p45
    %p47 = scmp.ne.s32.totalorder %s36, %s39
    %p48 = scmp.eq.s32.totalorder %s17, 1
    %p49 = por %p47, %p48
    %p50 = scmp.ne.s32.totalorder %s39, %s40
    %p51 = scmp.eq.s32.totalorder %s17, 0
    %p52 = por %p50, %p51
    %p53 = scmp.ne.s32.totalorder %s39, %s40
    %p54 = scmp.eq.s32.totalorder %s18, 1
    %p55 = por %p53, %p54
    %p57 = scmp.ne.s32.totalorder %s40, %s56
    %p58 = scmp.eq.s32.totalorder %s18, 0
    %p59 = por %p57, %p58
    %s60 = ssub.s32 %s19, %s31
    %s61 = ssub.s32 %s20, %s27
    %s62 = sor.u32 %s60, %s61
    %p63 = scmp.eq.s32.totalorder %s62, 0
    %s65 = sadd.s32 %s64, 1
    %s66 = scalar_select %p63, %s64, %s65
    %p69 = pneg %p63
    %p70 = scmp.eq.s32.totalorder %s12, 1
    %p71 = por %p69, %p70
    %p72 = scmp.ne.s32.totalorder %s64, %s67
    %p73 = scmp.eq.s32.totalorder %s12, 0
    %p74 = por %p72, %p73
    %p75 = scmp.ne.s32.totalorder %s64, %s67
    %p76 = scmp.eq.s32.totalorder %s17, 1
    %p77 = por %p75, %p76
    %p78 = scmp.ne.s32.totalorder %s67, %s68
    %p79 = scmp.eq.s32.totalorder %s17, 0
    %p80 = por %p78, %p79
    %p81 = scmp.ne.s32.totalorder %s67, %s68
    %p82 = scmp.eq.s32.totalorder %s18, 1
    %p83 = por %p81, %p82
    %p85 = scmp.ne.s32.totalorder %s68, %s84
    %p86 = scmp.eq.s32.totalorder %s18, 0
    %p87 = por %p85, %p86
    %s89 = sadd.s32 %s88, 1
    %p92 = scmp.eq.s32.totalorder %s12, 1
    %p93 = scmp.ne.s32.totalorder %s88, %s90
    %p94 = scmp.eq.s32.totalorder %s12, 0
    %p95 = por %p93, %p94
    %p96 = scmp.ne.s32.totalorder %s88, %s90
    %p97 = scmp.eq.s32.totalorder %s17, 1
    %p98 = por %p96, %p97
    %p99 = scmp.ne.s32.totalorder %s90, %s91
    %p100 = scmp.eq.s32.totalorder %s17, 0
    %p101 = por %p99, %p100
    %p102 = scmp.ne.s32.totalorder %s90, %s91
    %p103 = scmp.eq.s32.totalorder %s18, 1
    %p104 = por %p102, %p103
    %p106 = scmp.ne.s32.totalorder %s91, %s105
    %p107 = scmp.eq.s32.totalorder %s18, 0
    %p108 = por %p106, %p107
    %s110 = sadd.s32 %s109, 1
    %p113 = scmp.eq.s32.totalorder %s12, 1
    %p114 = scmp.ne.s32.totalorder %s109, %s111
    %p115 = scmp.eq.s32.totalorder %s12, 0
    %p116 = por %p114, %p115
    %p117 = scmp.ne.s32.totalorder %s109, %s111
    %p118 = scmp.eq.s32.totalorder %s17, 1
    %p119 = por %p117, %p118
    %p120 = scmp.ne.s32.totalorder %s111, %s112
    %p121 = scmp.eq.s32.totalorder %s17, 0
    %p122 = por %p120, %p121
    %p123 = scmp.ne.s32.totalorder %s111, %s112
    %p124 = scmp.eq.s32.totalorder %s18, 1
    %p125 = por %p123, %p124
    %p127 = scmp.ne.s32.totalorder %s112, %s126
    %p128 = scmp.eq.s32.totalorder %s18, 0
    %p129 = por %p127, %p128
    %s130 = ssub.s32 %s19, %s31
    %s131 = ssub.s32 %s20, %s27
    %s132 = sor.u32 %s130, %s131
    %p133 = scmp.eq.s32.totalorder %s132, 0
    %s135 = sadd.s32 %s134, 1
    %s136 = scalar_select %p133, %s134, %s135
    %p139 = pneg %p133
    %p140 = scmp.eq.s32.totalorder %s12, 1
    %p141 = por %p139, %p140
    %p142 = scmp.ne.s32.totalorder %s134, %s137
    %p143 = scmp.eq.s32.totalorder %s12, 0
    %p144 = por %p142, %p143
    %p145 = scmp.ne.s32.totalorder %s134, %s137
    %p146 = scmp.eq.s32.totalorder %s17, 1
    %p147 = por %p145, %p146
    %p148 = scmp.ne.s32.totalorder %s137, %s138
    %p149 = scmp.eq.s32.totalorder %s17, 0
    %p150 = por %p148, %p149
    %p151 = scmp.ne.s32.totalorder %s137, %s138
    %p152 = scmp.eq.s32.totalorder %s18, 1
    %p153 = por %p151, %p152
    %p155 = scmp.ne.s32.totalorder %s138, %s154
    %p156 = scmp.eq.s32.totalorder %s18, 0
    %p157 = por %p155, %p156
    %s158 = ssub.s32 %s19, %s31
    %p159 = scmp.eq.s32.totalorder %s158, 0
    %s161 = sadd.s32 %s160, 1
    %s162 = scalar_select %p159, %s160, %s161
    %p165 = pneg %p159
    %p166 = scmp.eq.s32.totalorder %s12, 1
    %p167 = por %p165, %p166
    %p168 = scmp.ne.s32.totalorder %s160, %s163
    %p169 = scmp.eq.s32.totalorder %s12, 0
    %p170 = por %p168, %p169
    %p171 = scmp.ne.s32.totalorder %s160, %s163
    %p172 = scmp.eq.s32.totalorder %s17, 1
    %p173 = por %p171, %p172
    %p174 = scmp.ne.s32.totalorder %s163, %s164
    %p175 = scmp.eq.s32.totalorder %s17, 0
    %p176 = por %p174, %p175
    %p177 = scmp.ne.s32.totalorder %s163, %s164
    %p178 = scmp.eq.s32.totalorder %s18, 1
    %p179 = por %p177, %p178
    %p181 = scmp.ne.s32.totalorder %s164, %s180
    %p182 = scmp.eq.s32.totalorder %s18, 0
    %p183 = por %p181, %p182
    %p184 = scmp.le.s32.totalorder 1, %s12
    %p185 = scmp.lt.s32.totalorder %s12, 3
    %p186 = pnand %p184, %p185
    %p187 = pneg %p186
    // Predicated region
    $region9: #{regstage_forward.9} parent=5 // pred_check
      _
    $region10: #{regstage_forward.9} parent=5 // pred_check_branch
      %189 = sbr.rel (%p186) target = $region12
    $region11: #{regstage_forward.9} parent=5 // pred_region
      %s190 = ssub.s32 %s12, 1
      // Predicated region
      $region13: #{regstage_forward.9} parent=11 // pred_check
        %p191 = pneg %p101
      $region14: #{regstage_forward.9} parent=11 // pred_check_branch
        %193 = sbr.rel (%p191) target = $region16
      $region15: #{regstage_forward.9} parent=11 // pred_region
        _
      $region16: #{regstage_forward.9} parent=11 // pred_fallthru
        _
      // Predicated region
      $region17: #{regstage_forward.9} parent=11 // pred_check
        %p194 = pneg %p122
      $region18: #{regstage_forward.9} parent=11 // pred_check_branch
        %196 = sbr.rel (%p194) target = $region20
      $region19: #{regstage_forward.9} parent=11 // pred_region
        _
      $region20: #{regstage_forward.9} parent=11 // pred_fallthru
        _
    $region12: #{regstage_forward.9} parent=5 // pred_fallthru
      _
    %p197 = scmp.lt.s32.totalorder %s12, 2
    // Predicated region
    $region21: #{regstage_forward.9} parent=5 // pred_check
      %p198 = pneg %p197
    $region22: #{regstage_forward.9} parent=5 // pred_check_branch
      %200 = sbr.rel (%p198) target = $region24
    $region23: #{regstage_forward.9} parent=5 // pred_region
      // Predicated region
      $region25: #{regstage_forward.9} parent=23 // pred_check
        %p201 = pneg %p46
      $region26: #{regstage_forward.9} parent=23 // pred_check_branch
        %203 = sbr.rel (%p201) target = $region28
      $region27: #{regstage_forward.9} parent=23 // pred_region
        %s204 = smul.u32 3, %s19
        %s205 = smul.u32 8, %s20
        %p206 = scmp.lt.s32.totalorder %s204, 5
        %s207 = scalar_select %p206, %s204, 5
        %p208 = scmp.lt.s32.totalorder %s205, 7
        %s209 = scalar_select %p208, %s205, 7
        %s210 = smul.addr %s209, 2
        %s211 = smul.addr %s207, 16
        %s212 = sadd.s32 %s210, %s211
        %s213 = smul.addr %s212, 4
        %s214 = scalar_lea.vmem %s0, %s213
        %s215 = smul.u32 3, %s19
        %s216 = smul.u32 8, %s20
      $region28: #{regstage_forward.9} parent=23 // pred_fallthru
        _
      // Predicated region
      $region29: #{regstage_forward.9} parent=23 // pred_check
        %p217 = pneg %p74
      $region30: #{regstage_forward.9} parent=23 // pred_check_branch
        %219 = sbr.rel (%p217) target = $region32
      $region31: #{regstage_forward.9} parent=23 // pred_region
        %s220 = smul.u32 3, %s19
        %s221 = smul.u32 8, %s20
        %p222 = scmp.lt.s32.totalorder %s220, 5
        %s223 = scalar_select %p222, %s220, 5
        %p224 = scmp.lt.s32.totalorder %s221, 7
        %s225 = scalar_select %p224, %s221, 7
        %s226 = smul.addr %s223, 8
        %s227 = sadd.s32 %s225, %s226
        %s228 = smul.addr %s227, 4
        %s229 = scalar_lea.vmem %s1, %s228
        %s230 = smul.u32 3, %s19
        %s231 = smul.u32 8, %s20
      $region32: #{regstage_forward.9} parent=23 // pred_fallthru
        _
    $region24: #{regstage_forward.9} parent=5 // pred_fallthru
      _
    %p232 = scmp.le.s32.totalorder 1, %s12
    %p233 = scmp.lt.s32.totalorder %s12, 3
    %p234 = pnand %p232, %p233
    %p235 = pneg %p234
    // Predicated region
    $region33: #{regstage_forward.9} parent=5 // pred_check
      _
    $region34: #{regstage_forward.9} parent=5 // pred_check_branch
      %237 = sbr.rel (%p234) target = $region36
    $region35: #{regstage_forward.9} parent=5 // pred_region
      %s238 = ssub.s32 %s12, 1
      %s239 = smul.u32 3, %s21
      %s240 = smul.u32 8, %s22
      %p241 = scmp.lt.s32.totalorder %s239, 5
      %s242 = scalar_select %p241, %s239, 5
      %p243 = scmp.lt.s32.totalorder %s240, 7
      %s244 = scalar_select %p243, %s240, 7
      %s245 = smul.addr %s244, 2
      %s246 = smul.addr %s242, 16
      %s247 = sadd.s32 %s245, %s246
      %s248 = smul.addr %s247, 4
      %s249 = scalar_lea.vmem %s0, %s248
      %p250 = pneg %p52
      %p251 = pneg %p49
      %s252 = smul.u32 3, %s21
      %s253 = smul.u32 8, %s22
      %p254 = scmp.lt.s32.totalorder %s252, 5
      %s255 = scalar_select %p254, %s252, 5
      %p256 = scmp.lt.s32.totalorder %s253, 7
      %s257 = scalar_select %p256, %s253, 7
      %s258 = smul.addr %s255, 8
      %s259 = sadd.s32 %s257, %s258
      %s260 = smul.addr %s259, 4
      %s261 = scalar_lea.vmem %s1, %s260
      %p262 = pneg %p80
      %p263 = pneg %p77
      %p264 = pneg %p101
      %p265 = pneg %p98
      %p266 = pneg %p122
      %p267 = pneg %p119
      %p268 = pneg %p150
      %p269 = pneg %p147
      %s270 = smul.u32 8, %s22
      %p271 = scmp.lt.s32.totalorder %s21, 1
      %s272 = scalar_select %p271, %s21, 1
      %p273 = scmp.lt.s32.totalorder %s270, 7
      %s274 = scalar_select %p273, %s270, 7
      %s275 = smul.addr %s272, 8
      %s276 = sadd.s32 %s274, %s275
      %s277 = smul.addr %s276, 4
      %s278 = scalar_lea.vmem %s4, %s277
      %p279 = pneg %p176
      %p280 = pneg %p173
      %p281 = scmp.lt.s32.totalorder %s21, 1
      %s282 = scalar_select %p281, %s21, 1
      %s283 = scalar_lea.vmem %s5, %s282
      %s284 = smul.u32 3, %s21
      %s285 = smul.u32 8, %s22
      %p286 = scmp.lt.s32.totalorder %s284, 5
      %s287 = scalar_select %p286, %s284, 5
      %p288 = scmp.lt.s32.totalorder %s285, 7
      %s289 = scalar_select %p288, %s285, 7
      %s290 = smul.addr %s289, 2
      %s291 = smul.addr %s287, 16
      %s292 = sadd.s32 %s290, %s291
      %s293 = smul.addr %s292, 4
      %s294 = scalar_lea.vmem %s0, %s293
      %s295 = smul.u32 3, %s21
      %s296 = smul.u32 8, %s22
      %s297 = smul.u32 3, %s21
      %s298 = smul.u32 8, %s22
      %p299 = scmp.lt.s32.totalorder %s297, 5
      %s300 = scalar_select %p299, %s297, 5
      %p301 = scmp.lt.s32.totalorder %s298, 7
      %s302 = scalar_select %p301, %s298, 7
      %s303 = smul.addr %s300, 8
      %s304 = sadd.s32 %s302, %s303
      %s305 = smul.addr %s304, 4
      %s306 = scalar_lea.vmem %s1, %s305
      %s307 = smul.u32 3, %s21
      %s308 = smul.u32 8, %s22
      %s309 = smul.u32 8, %s22
      %p310 = scmp.lt.s32.totalorder %s21, 1
      %s311 = scalar_select %p310, %s21, 1
      %p312 = scmp.lt.s32.totalorder %s309, 7
      %s313 = scalar_select %p312, %s309, 7
      %s314 = smul.addr %s311, 8
      %s315 = sadd.s32 %s313, %s314
      %s316 = smul.addr %s315, 4
      %s317 = scalar_lea.vmem %s4, %s316
      %s318 = smul.u32 8, %s22
      %p319 = scmp.lt.s32.totalorder %s21, 1
      %s320 = scalar_select %p319, %s21, 1
      %s321 = scalar_lea.vmem %s5, %s320
      %v322 = vld [vmem:[%s2] sm:$0x7]
      %v323 = vld [vmem:[%s2 + $0x4] sm:$0x7]
      %v324 = vld [vmem:[%s2 + $0x8] sm:$0x7]
      %v325 = vld [vmem:[%s294] sm:$0xf]
      %v326 = vld [vmem:[%s294 + $0x8] sm:$0xf]
      %v327 = vld [vmem:[%s294 + $0x10] sm:$0xf]
      %v328 = vld [vmem:[%s294 + $0x18] sm:$0xf]
      %v329 = vld [vmem:[%s294 + $0x20] sm:$0xf]
      %v330 = vld [vmem:[%s294 + $0x28] sm:$0xf]
      %v331 = vld [vmem:[%s294 + $0x30] sm:$0xf]
      %v332 = vld [vmem:[%s294 + $0x38] sm:$0xf]
      %v333 = vunpack.c.l.bf16 %v325
      %v334 = vunpack.c.l.bf16 %v326
      %v335 = vunpack.c.l.bf16 %v327
      %v336 = vunpack.c.l.bf16 %v328
      %v337 = vunpack.c.l.bf16 %v329
      %v338 = vunpack.c.l.bf16 %v330
      %v339 = vunpack.c.l.bf16 %v331
      %v340 = vunpack.c.l.bf16 %v332
      %v341 = vperm.slane %v322, 0
      %v342 = vmul.f32 %v333, %v341
      %v343 = vmul.f32 %v334, %v341
      %v344 = vmul.f32 %v335, %v341
      %v345 = vmul.f32 %v336, %v341
      %v346 = vmul.f32 %v337, %v341
      %v347 = vmul.f32 %v338, %v341
      %v348 = vmul.f32 %v339, %v341
      %v349 = vmul.f32 %v340, %v341
      %v350 = vadd.f32 %v342, 0.0
      %v351 = vadd.f32 %v343, 0.0
      %v352 = vadd.f32 %v344, 0.0
      %v353 = vadd.f32 %v345, 0.0
      %v354 = vadd.f32 %v346, 0.0
      %v355 = vadd.f32 %v347, 0.0
      %v356 = vadd.f32 %v348, 0.0
      %v357 = vadd.f32 %v349, 0.0
      %v358 = vld [vmem:[%s306] sm:$0xf]
      %v359 = vld [vmem:[%s306 + $0x4] sm:$0xf]
      %v360 = vld [vmem:[%s306 + $0x8] sm:$0xf]
      %v361 = vld [vmem:[%s306 + $0xc] sm:$0xf]
      %v362 = vld [vmem:[%s306 + $0x10] sm:$0xf]
      %v363 = vld [vmem:[%s306 + $0x14] sm:$0xf]
      %v364 = vld [vmem:[%s306 + $0x18] sm:$0xf]
      %v365 = vld [vmem:[%s306 + $0x1c] sm:$0xf]
      %v366 = vunpack.c.l.bf16 %v358
      %v367 = vunpack.c.l.bf16 %v359
      %v368 = vunpack.c.l.bf16 %v360
      %v369 = vunpack.c.l.bf16 %v361
      %v370 = vunpack.c.l.bf16 %v362
      %v371 = vunpack.c.l.bf16 %v363
      %v372 = vunpack.c.l.bf16 %v364
      %v373 = vunpack.c.l.bf16 %v365
      %v374 = vperm.slane %v322, 1
      %v375 = vmul.f32 %v366, %v374
      %v376 = vmul.f32 %v367, %v374
      %v377 = vmul.f32 %v368, %v374
      %v378 = vmul.f32 %v369, %v374
      %v379 = vmul.f32 %v370, %v374
      %v380 = vmul.f32 %v371, %v374
      %v381 = vmul.f32 %v372, %v374
      %v382 = vmul.f32 %v373, %v374
      %v383 = vadd.f32 %v350, %v375
      %v384 = vadd.f32 %v351, %v376
      %v385 = vadd.f32 %v352, %v377
      %v386 = vadd.f32 %v353, %v378
      %v387 = vadd.f32 %v354, %v379
      %v388 = vadd.f32 %v355, %v380
      %v389 = vadd.f32 %v356, %v381
      %v390 = vadd.f32 %v357, %v382
      %v391 = vld [vmem:[%s294 + $0x4] sm:$0x1]
      %v392 = vld [vmem:[%s294 + $0xc] sm:$0x1]
      %v393 = vld [vmem:[%s294 + $0x14] sm:$0x1]
      %v394 = vld [vmem:[%s294 + $0x1c] sm:$0x1]
      %v395 = vld [vmem:[%s294 + $0x24] sm:$0x1]
      %v396 = vld [vmem:[%s294 + $0x2c] sm:$0x1]
      %v397 = vld [vmem:[%s294 + $0x34] sm:$0x1]
      %v398 = vld [vmem:[%s294 + $0x3c] sm:$0x1]
      %v399 = vunpack.c.l.bf16 %v391
      %v400 = vunpack.c.l.bf16 %v392
      %v401 = vunpack.c.l.bf16 %v393
      %v402 = vunpack.c.l.bf16 %v394
      %v403 = vunpack.c.l.bf16 %v395
      %v404 = vunpack.c.l.bf16 %v396
      %v405 = vunpack.c.l.bf16 %v397
      %v406 = vunpack.c.l.bf16 %v398
      %v407 = vperm.slane %v322, 2
      %v408 = vmul.f32 %v333, %v407
      %v409 = vmul.f32 %v399, %v407
      %v410 = vmul.f32 %v334, %v407
      %v411 = vmul.f32 %v400, %v407
      %v412 = vmul.f32 %v335, %v407
      %v413 = vmul.f32 %v401, %v407
      %v414 = vmul.f32 %v336, %v407
      %v415 = vmul.f32 %v402, %v407
      %v416 = vmul.f32 %v337, %v407
      %v417 = vmul.f32 %v403, %v407
      %v418 = vmul.f32 %v338, %v407
      %v419 = vmul.f32 %v404, %v407
      %v420 = vmul.f32 %v339, %v407
      %v421 = vmul.f32 %v405, %v407
      %v422 = vmul.f32 %v340, %v407
      %v423 = vmul.f32 %v406, %v407
      %vm440 = vcmask 1046528
      %v441 = vrot.slane %v408, 1
      %v442 = vrot.slane %v409, 1
      %v443 = vsel %vm440, %v441, %v442
      %v444 = vrot.slane %v410, 1
      %v445 = vrot.slane %v411, 1
      %v446 = vsel %vm440, %v444, %v445
      %v447 = vrot.slane %v412, 1
      %v448 = vrot.slane %v413, 1
      %v449 = vsel %vm440, %v447, %v448
      %v450 = vrot.slane %v414, 1
      %v451 = vrot.slane %v415, 1
      %v452 = vsel %vm440, %v450, %v451
      %v453 = vrot.slane %v416, 1
      %v454 = vrot.slane %v417, 1
      %v455 = vsel %vm440, %v453, %v454
      %v456 = vrot.slane %v418, 1
      %v457 = vrot.slane %v419, 1
      %v458 = vsel %vm440, %v456, %v457
      %v459 = vrot.slane %v420, 1
      %v460 = vrot.slane %v421, 1
      %v461 = vsel %vm440, %v459, %v460
      %v462 = vrot.slane %v422, 1
      %v463 = vrot.slane %v423, 1
      %v464 = vsel %vm440, %v462, %v463
      %v473 = vadd.f32 %v383, %v443
      %v474 = vadd.f32 %v384, %v446
      %v475 = vadd.f32 %v385, %v449
      %v476 = vadd.f32 %v386, %v452
      %v477 = vadd.f32 %v387, %v455
      %v478 = vadd.f32 %v388, %v458
      %v479 = vadd.f32 %v389, %v461
      %v480 = vadd.f32 %v390, %v464
      %s481 = scalar_lea.vmem %s294, 64
      %v482 = vld [vmem:[%s481] sm:$0xf]
      %v483 = vld [vmem:[%s481 + $0x8] sm:$0xf]
      %v484 = vld [vmem:[%s481 + $0x10] sm:$0xf]
      %v485 = vld [vmem:[%s481 + $0x18] sm:$0xf]
      %v486 = vld [vmem:[%s481 + $0x20] sm:$0xf]
      %v487 = vld [vmem:[%s481 + $0x28] sm:$0xf]
      %v488 = vld [vmem:[%s481 + $0x30] sm:$0xf]
      %v489 = vld [vmem:[%s481 + $0x38] sm:$0xf]
      %v490 = vunpack.c.l.bf16 %v482
      %v491 = vunpack.c.l.bf16 %v483
      %v492 = vunpack.c.l.bf16 %v484
      %v493 = vunpack.c.l.bf16 %v485
      %v494 = vunpack.c.l.bf16 %v486
      %v495 = vunpack.c.l.bf16 %v487
      %v496 = vunpack.c.l.bf16 %v488
      %v497 = vunpack.c.l.bf16 %v489
      %v498 = vperm.slane %v323, 0
      %v499 = vmul.f32 %v490, %v498
      %v500 = vmul.f32 %v491, %v498
      %v501 = vmul.f32 %v492, %v498
      %v502 = vmul.f32 %v493, %v498
      %v503 = vmul.f32 %v494, %v498
      %v504 = vmul.f32 %v495, %v498
      %v505 = vmul.f32 %v496, %v498
      %v506 = vmul.f32 %v497, %v498
      %v507 = vadd.f32 %v473, %v499
      %v508 = vadd.f32 %v474, %v500
      %v509 = vadd.f32 %v475, %v501
      %v510 = vadd.f32 %v476, %v502
      %v511 = vadd.f32 %v477, %v503
      %v512 = vadd.f32 %v478, %v504
      %v513 = vadd.f32 %v479, %v505
      %v514 = vadd.f32 %v480, %v506
      %s515 = scalar_lea.vmem %s306, 32
      %v516 = vld [vmem:[%s515] sm:$0xf]
      %v517 = vld [vmem:[%s515 + $0x4] sm:$0xf]
      %v518 = vld [vmem:[%s515 + $0x8] sm:$0xf]
      %v519 = vld [vmem:[%s515 + $0xc] sm:$0xf]
      %v520 = vld [vmem:[%s515 + $0x10] sm:$0xf]
      %v521 = vld [vmem:[%s515 + $0x14] sm:$0xf]
      %v522 = vld [vmem:[%s515 + $0x18] sm:$0xf]
      %v523 = vld [vmem:[%s515 + $0x1c] sm:$0xf]
      %v524 = vunpack.c.l.bf16 %v516
      %v525 = vunpack.c.l.bf16 %v517
      %v526 = vunpack.c.l.bf16 %v518
      %v527 = vunpack.c.l.bf16 %v519
      %v528 = vunpack.c.l.bf16 %v520
      %v529 = vunpack.c.l.bf16 %v521
      %v530 = vunpack.c.l.bf16 %v522
      %v531 = vunpack.c.l.bf16 %v523
      %v532 = vperm.slane %v323, 1
      %v533 = vmul.f32 %v524, %v532
      %v534 = vmul.f32 %v525, %v532
      %v535 = vmul.f32 %v526, %v532
      %v536 = vmul.f32 %v527, %v532
      %v537 = vmul.f32 %v528, %v532
      %v538 = vmul.f32 %v529, %v532
      %v539 = vmul.f32 %v530, %v532
      %v540 = vmul.f32 %v531, %v532
      %v541 = vadd.f32 %v507, %v533
      %v542 = vadd.f32 %v508, %v534
      %v543 = vadd.f32 %v509, %v535
      %v544 = vadd.f32 %v510, %v536
      %v545 = vadd.f32 %v511, %v537
      %v546 = vadd.f32 %v512, %v538
      %v547 = vadd.f32 %v513, %v539
      %v548 = vadd.f32 %v514, %v540
      %v549 = vld [vmem:[%s481 + $0x4] sm:$0x1]
      %v550 = vld [vmem:[%s481 + $0xc] sm:$0x1]
      %v551 = vld [vmem:[%s481 + $0x14] sm:$0x1]
      %v552 = vld [vmem:[%s481 + $0x1c] sm:$0x1]
      %v553 = vld [vmem:[%s481 + $0x24] sm:$0x1]
      %v554 = vld [vmem:[%s481 + $0x2c] sm:$0x1]
      %v555 = vld [vmem:[%s481 + $0x34] sm:$0x1]
      %v556 = vld [vmem:[%s481 + $0x3c] sm:$0x1]
      %v557 = vunpack.c.l.bf16 %v549
      %v558 = vunpack.c.l.bf16 %v550
      %v559 = vunpack.c.l.bf16 %v551
      %v560 = vunpack.c.l.bf16 %v552
      %v561 = vunpack.c.l.bf16 %v553
      %v562 = vunpack.c.l.bf16 %v554
      %v563 = vunpack.c.l.bf16 %v555
      %v564 = vunpack.c.l.bf16 %v556
      %v565 = vperm.slane %v323, 2
      %v566 = vmul.f32 %v490, %v565
      %v567 = vmul.f32 %v557, %v565
      %v568 = vmul.f32 %v491, %v565
      %v569 = vmul.f32 %v558, %v565
      %v570 = vmul.f32 %v492, %v565
      %v571 = vmul.f32 %v559, %v565
      %v572 = vmul.f32 %v493, %v565
      %v573 = vmul.f32 %v560, %v565
      %v574 = vmul.f32 %v494, %v565
      %v575 = vmul.f32 %v561, %v565
      %v576 = vmul.f32 %v495, %v565
      %v577 = vmul.f32 %v562, %v565
      %v578 = vmul.f32 %v496, %v565
      %v579 = vmul.f32 %v563, %v565
      %v580 = vmul.f32 %v497, %v565
      %v581 = vmul.f32 %v564, %v565
      %v598 = vrot.slane %v566, 1
      %v599 = vrot.slane %v567, 1
      %v600 = vsel %vm440, %v598, %v599
      %v601 = vrot.slane %v568, 1
      %v602 = vrot.slane %v569, 1
      %v603 = vsel %vm440, %v601, %v602
      %v604 = vrot.slane %v570, 1
      %v605 = vrot.slane %v571, 1
      %v606 = vsel %vm440, %v604, %v605
      %v607 = vrot.slane %v572, 1
      %v608 = vrot.slane %v573, 1
      %v609 = vsel %vm440, %v607, %v608
      %v610 = vrot.slane %v574, 1
      %v611 = vrot.slane %v575, 1
      %v612 = vsel %vm440, %v610, %v611
      %v613 = vrot.slane %v576, 1
      %v614 = vrot.slane %v577, 1
      %v615 = vsel %vm440, %v613, %v614
      %v616 = vrot.slane %v578, 1
      %v617 = vrot.slane %v579, 1
      %v618 = vsel %vm440, %v616, %v617
      %v619 = vrot.slane %v580, 1
      %v620 = vrot.slane %v581, 1
      %v621 = vsel %vm440, %v619, %v620
      %v630 = vadd.f32 %v541, %v600
      %v631 = vadd.f32 %v542, %v603
      %v632 = vadd.f32 %v543, %v606
      %v633 = vadd.f32 %v544, %v609
      %v634 = vadd.f32 %v545, %v612
      %v635 = vadd.f32 %v546, %v615
      %v636 = vadd.f32 %v547, %v618
      %v637 = vadd.f32 %v548, %v621
      %s638 = scalar_lea.vmem %s294, 128
      %v639 = vld [vmem:[%s638] sm:$0xf]
      %v640 = vld [vmem:[%s638 + $0x8] sm:$0xf]
      %v641 = vld [vmem:[%s638 + $0x10] sm:$0xf]
      %v642 = vld [vmem:[%s638 + $0x18] sm:$0xf]
      %v643 = vld [vmem:[%s638 + $0x20] sm:$0xf]
      %v644 = vld [vmem:[%s638 + $0x28] sm:$0xf]
      %v645 = vld [vmem:[%s638 + $0x30] sm:$0xf]
      %v646 = vld [vmem:[%s638 + $0x38] sm:$0xf]
      %v647 = vunpack.c.l.bf16 %v639
      %v648 = vunpack.c.l.bf16 %v640
      %v649 = vunpack.c.l.bf16 %v641
      %v650 = vunpack.c.l.bf16 %v642
      %v651 = vunpack.c.l.bf16 %v643
      %v652 = vunpack.c.l.bf16 %v644
      %v653 = vunpack.c.l.bf16 %v645
      %v654 = vunpack.c.l.bf16 %v646
      %v655 = vperm.slane %v324, 0
      %v656 = vmul.f32 %v647, %v655
      %v657 = vmul.f32 %v648, %v655
      %v658 = vmul.f32 %v649, %v655
      %v659 = vmul.f32 %v650, %v655
      %v660 = vmul.f32 %v651, %v655
      %v661 = vmul.f32 %v652, %v655
      %v662 = vmul.f32 %v653, %v655
      %v663 = vmul.f32 %v654, %v655
      %v664 = vadd.f32 %v630, %v656
      %v665 = vadd.f32 %v631, %v657
      %v666 = vadd.f32 %v632, %v658
      %v667 = vadd.f32 %v633, %v659
      %v668 = vadd.f32 %v634, %v660
      %v669 = vadd.f32 %v635, %v661
      %v670 = vadd.f32 %v636, %v662
      %v671 = vadd.f32 %v637, %v663
      %s672 = scalar_lea.vmem %s306, 64
      %v673 = vld [vmem:[%s672] sm:$0xf]
      %v674 = vld [vmem:[%s672 + $0x4] sm:$0xf]
      %v675 = vld [vmem:[%s672 + $0x8] sm:$0xf]
      %v676 = vld [vmem:[%s672 + $0xc] sm:$0xf]
      %v677 = vld [vmem:[%s672 + $0x10] sm:$0xf]
      %v678 = vld [vmem:[%s672 + $0x14] sm:$0xf]
      %v679 = vld [vmem:[%s672 + $0x18] sm:$0xf]
      %v680 = vld [vmem:[%s672 + $0x1c] sm:$0xf]
      %v681 = vunpack.c.l.bf16 %v673
      %v682 = vunpack.c.l.bf16 %v674
      %v683 = vunpack.c.l.bf16 %v675
      %v684 = vunpack.c.l.bf16 %v676
      %v685 = vunpack.c.l.bf16 %v677
      %v686 = vunpack.c.l.bf16 %v678
      %v687 = vunpack.c.l.bf16 %v679
      %v688 = vunpack.c.l.bf16 %v680
      %v689 = vperm.slane %v324, 1
      %v690 = vmul.f32 %v681, %v689
      %v691 = vmul.f32 %v682, %v689
      %v692 = vmul.f32 %v683, %v689
      %v693 = vmul.f32 %v684, %v689
      %v694 = vmul.f32 %v685, %v689
      %v695 = vmul.f32 %v686, %v689
      %v696 = vmul.f32 %v687, %v689
      %v697 = vmul.f32 %v688, %v689
      %v698 = vadd.f32 %v664, %v690
      %v699 = vadd.f32 %v665, %v691
      %v700 = vadd.f32 %v666, %v692
      %v701 = vadd.f32 %v667, %v693
      %v702 = vadd.f32 %v668, %v694
      %v703 = vadd.f32 %v669, %v695
      %v704 = vadd.f32 %v670, %v696
      %v705 = vadd.f32 %v671, %v697
      %v706 = vld [vmem:[%s638 + $0x4] sm:$0x1]
      %v707 = vld [vmem:[%s638 + $0xc] sm:$0x1]
      %v708 = vld [vmem:[%s638 + $0x14] sm:$0x1]
      %v709 = vld [vmem:[%s638 + $0x1c] sm:$0x1]
      %v710 = vld [vmem:[%s638 + $0x24] sm:$0x1]
      %v711 = vld [vmem:[%s638 + $0x2c] sm:$0x1]
      %v712 = vld [vmem:[%s638 + $0x34] sm:$0x1]
      %v713 = vld [vmem:[%s638 + $0x3c] sm:$0x1]
      %v714 = vunpack.c.l.bf16 %v706
      %v715 = vunpack.c.l.bf16 %v707
      %v716 = vunpack.c.l.bf16 %v708
      %v717 = vunpack.c.l.bf16 %v709
      %v718 = vunpack.c.l.bf16 %v710
      %v719 = vunpack.c.l.bf16 %v711
      %v720 = vunpack.c.l.bf16 %v712
      %v721 = vunpack.c.l.bf16 %v713
      %v722 = vperm.slane %v324, 2
      %v723 = vmul.f32 %v647, %v722
      %v724 = vmul.f32 %v714, %v722
      %v725 = vmul.f32 %v648, %v722
      %v726 = vmul.f32 %v715, %v722
      %v727 = vmul.f32 %v649, %v722
      %v728 = vmul.f32 %v716, %v722
      %v729 = vmul.f32 %v650, %v722
      %v730 = vmul.f32 %v717, %v722
      %v731 = vmul.f32 %v651, %v722
      %v732 = vmul.f32 %v718, %v722
      %v733 = vmul.f32 %v652, %v722
      %v734 = vmul.f32 %v719, %v722
      %v735 = vmul.f32 %v653, %v722
      %v736 = vmul.f32 %v720, %v722
      %v737 = vmul.f32 %v654, %v722
      %v738 = vmul.f32 %v721, %v722
      %v755 = vrot.slane %v723, 1
      %v756 = vrot.slane %v724, 1
      %v757 = vsel %vm440, %v755, %v756
      %v758 = vrot.slane %v725, 1
      %v759 = vrot.slane %v726, 1
      %v760 = vsel %vm440, %v758, %v759
      %v761 = vrot.slane %v727, 1
      %v762 = vrot.slane %v728, 1
      %v763 = vsel %vm440, %v761, %v762
      %v764 = vrot.slane %v729, 1
      %v765 = vrot.slane %v730, 1
      %v766 = vsel %vm440, %v764, %v765
      %v767 = vrot.slane %v731, 1
      %v768 = vrot.slane %v732, 1
      %v769 = vsel %vm440, %v767, %v768
      %v770 = vrot.slane %v733, 1
      %v771 = vrot.slane %v734, 1
      %v772 = vsel %vm440, %v770, %v771
      %v773 = vrot.slane %v735, 1
      %v774 = vrot.slane %v736, 1
      %v775 = vsel %vm440, %v773, %v774
      %v776 = vrot.slane %v737, 1
      %v777 = vrot.slane %v738, 1
      %v778 = vsel %vm440, %v776, %v777
      %v787 = vadd.f32 %v698, %v757
      %v788 = vadd.f32 %v699, %v760
      %v789 = vadd.f32 %v700, %v763
      %v790 = vadd.f32 %v701, %v766
      %v791 = vadd.f32 %v702, %v769
      %v792 = vadd.f32 %v703, %v772
      %v793 = vadd.f32 %v704, %v775
      %v794 = vadd.f32 %v705, %v778
      %v795 = vld [vmem:[%s3] sm:$0x1]
      %v797 = vperm.slane %v795, 0
      %v799 = vadd.f32 %v787, %v797
      %v800 = vadd.f32 %v788, %v797
      %v801 = vadd.f32 %v789, %v797
      %v802 = vadd.f32 %v790, %v797
      %v803 = vadd.f32 %v791, %v797
      %v804 = vadd.f32 %v792, %v797
      %v805 = vadd.f32 %v793, %v797
      %v806 = vadd.f32 %v794, %v797
      %v807 = vmax.f32 %v799, 0.0
      %v808 = vmax.f32 %v800, 0.0
      %v809 = vmax.f32 %v801, 0.0
      %v810 = vmax.f32 %v802, 0.0
      %v811 = vmax.f32 %v803, 0.0
      %v812 = vmax.f32 %v804, 0.0
      %v813 = vmax.f32 %v805, 0.0
      %v814 = vmax.f32 %v806, 0.0
      %v815 = vpack.c.bf16 %v807, %v807
      %v816 = vpack.c.bf16 %v808, %v808
      %v817 = vpack.c.bf16 %v809, %v809
      %v818 = vpack.c.bf16 %v810, %v810
      %v819 = vpack.c.bf16 %v811, %v811
      %v820 = vpack.c.bf16 %v812, %v812
      %v821 = vpack.c.bf16 %v813, %v813
      %v822 = vpack.c.bf16 %v814, %v814
      %vm823 = vcmask 125952
      %824 = vst.msk [vmem:[%s317] sm:$0xf] %vm823, %v815
      %825 = vst.msk [vmem:[%s317 + $0x4] sm:$0xf] %vm823, %v816
      %826 = vst.msk [vmem:[%s317 + $0x8] sm:$0xf] %vm823, %v817
      %827 = vst.msk [vmem:[%s317 + $0xc] sm:$0xf] %vm823, %v818
      %828 = vst.msk [vmem:[%s317 + $0x10] sm:$0xf] %vm823, %v819
      %829 = vst.msk [vmem:[%s317 + $0x14] sm:$0xf] %vm823, %v820
      %830 = vst.msk [vmem:[%s317 + $0x18] sm:$0xf] %vm823, %v821
      %831 = vst.msk [vmem:[%s317 + $0x1c] sm:$0xf] %vm823, %v822
      %p832 = scmp.eq.s32.totalorder %s22, 0
      // Predicated region
      $region37: #{regstage_forward.9} parent=35 // pred_check
        %p833 = pneg %p832
      $region38: #{regstage_forward.9} parent=35 // pred_check_branch
        %835 = sbr.rel (%p833) target = $region40
      $region39: #{regstage_forward.9} parent=35 // pred_region
        %vm836 = vcmask 122880
        %837 = vst.msk [vmem:[%s321] sm:$0x1] %vm836, 0.0
      $region40: #{regstage_forward.9} parent=35 // pred_fallthru
        _
      %v838 = vld [vmem:[%s321] sm:$0x1]
      %vm839 = vcmask 130048
      %v840 = vsel %vm839, %v807, 0.0
      %v841 = vsel %vm839, %v808, 0.0
      %v842 = vadd.f32 %v840, %v841
      %v843 = vsel %vm839, %v809, 0.0
      %v844 = vadd.f32 %v842, %v843
      %v845 = vsel %vm839, %v810, 0.0
      %v846 = vadd.f32 %v844, %v845
      %v847 = vsel %vm839, %v811, 0.0
      %v848 = vadd.f32 %v846, %v847
      %v849 = vsel %vm839, %v812, 0.0
      %v850 = vadd.f32 %v848, %v849
      %v851 = vsel %vm839, %v813, 0.0
      %v852 = vadd.f32 %v850, %v851
      %v853 = vsel %vm839, %v814, 0.0
      %v854 = vadd.f32 %v852, %v853
      %v855 = vrot.slane %v854, 4
      %v856 = vadd.f32 %v854, %v855
      %v857 = vrot.slane %v856, 2
      %v858 = vadd.f32 %v856, %v857
      %v859 = vrot.slane %v858, 1
      %v860 = vadd.f32 %v858, %v859
      %v861 = vadd.f32 %v838, %v860
      %vm862 = vcmask 122880
      %863 = vst.msk [vmem:[%s321] sm:$0x1] %vm862, %v861
      // Predicated region
      $region41: #{regstage_forward.9} parent=35 // pred_check
        %p864 = pneg %p832
      $region42: #{regstage_forward.9} parent=35 // pred_check_branch
        %866 = sbr.rel (%p864) target = $region44
      $region43: #{regstage_forward.9} parent=35 // pred_region
        %v867 = vld [vmem:[%s321] sm:$0x1]
        %v868 = vmul.f32 %v867, 0.015625
        %869 = vst.msk [vmem:[%s321] sm:$0x1] %vm862, %v868
      $region44: #{regstage_forward.9} parent=35 // pred_fallthru
        _
      %s870 = smul.u32 8, %s22
      %p871 = scmp.lt.s32.totalorder %s21, 1
      %s872 = scalar_select %p871, %s21, 1
      %p873 = scmp.lt.s32.totalorder %s870, 7
      %s874 = scalar_select %p873, %s870, 7
      %s875 = smul.addr %s872, 8
      %s876 = sadd.s32 %s874, %s875
      %s877 = smul.addr %s876, 4
      %s878 = scalar_lea.vmem %s4, %s877
      %p879 = scmp.lt.s32.totalorder %s21, 1
      %s880 = scalar_select %p879, %s21, 1
      %s881 = scalar_lea.vmem %s5, %s880
      // Predicated region
      $region45: #{regstage_forward.9} parent=35 // pred_check
        %p882 = pneg %p147
      $region46: #{regstage_forward.9} parent=35 // pred_check_branch
        %884 = sbr.rel (%p882) target = $region48
      $region47: #{regstage_forward.9} parent=35 // pred_region
        %s885 = smul.u32 8, %s22
      $region48: #{regstage_forward.9} parent=35 // pred_fallthru
        _
      // Predicated region
      $region49: #{regstage_forward.9} parent=35 // pred_check
        %p886 = pneg %p173
      $region50: #{regstage_forward.9} parent=35 // pred_check_branch
        %888 = sbr.rel (%p886) target = $region52
      $region51: #{regstage_forward.9} parent=35 // pred_region
        _
      $region52: #{regstage_forward.9} parent=35 // pred_fallthru
        _
    $region36: #{regstage_forward.9} parent=5 // pred_fallthru
      _
    %p889 = scmp.le.s32.totalorder 2, %s12
    // Predicated region
    $region53: #{regstage_forward.9} parent=5 // pred_check
      %p890 = pneg %p889
    $region54: #{regstage_forward.9} parent=5 // pred_check_branch
      %892 = sbr.rel (%p890) target = $region56
    $region55: #{regstage_forward.9} parent=5 // pred_region
      %s893 = ssub.s32 %s12, 2
      // Predicated region
      $region57: #{regstage_forward.9} parent=55 // pred_check
        %p894 = pneg %p153
      $region58: #{regstage_forward.9} parent=55 // pred_check_branch
        %896 = sbr.rel (%p894) target = $region60
      $region59: #{regstage_forward.9} parent=55 // pred_region
        %s897 = smul.u32 8, %s24
        %p898 = scmp.lt.s32.totalorder %s23, 1
        %s899 = scalar_select %p898, %s23, 1
        %p900 = scmp.lt.s32.totalorder %s897, 7
        %s901 = scalar_select %p900, %s897, 7
        %s902 = smul.addr %s899, 8
        %s903 = sadd.s32 %s901, %s902
        %s904 = smul.addr %s903, 4
        %s905 = scalar_lea.vmem %s4, %s904
      $region60: #{regstage_forward.9} parent=55 // pred_fallthru
        _
      // Predicated region
      $region61: #{regstage_forward.9} parent=55 // pred_check
        %p906 = pneg %p179
      $region62: #{regstage_forward.9} parent=55 // pred_check_branch
        %908 = sbr.rel (%p906) target = $region64
      $region63: #{regstage_forward.9} parent=55 // pred_region
        %p909 = scmp.lt.s32.totalorder %s23, 1
        %s910 = scalar_select %p909, %s23, 1
        %s911 = scalar_lea.vmem %s5, %s910
      $region64: #{regstage_forward.9} parent=55 // pred_fallthru
        _
    $region56: #{regstage_forward.9} parent=5 // pred_fallthru
      _
  $region6: #{regstage_forward.9} parent=0 // loop_footer
    %s16 = sadd.s32 1, %s12
  $region7: #{regstage_forward.9} parent=0 // loop_footer_branch
    %11 = sbr.rel target = $region3
  $region8: #{regstage_forward.9} parent=0 // loop_exit
    _

// kernel: regstage_forward.11
$region0: #{regstage_forward.11}
  #allocation0 [shape = 'u32[]', space=smem, size = 0x4, offset = 0x4, fixed_abs, tag = 'smem constant byte address 0x4 - core index']
  #allocation1 [shape = 'u32[72,128]{1,0:T(1,128)}', space=vmem, size = 0x9000, scoped, tag = 'internal scratch']
  %s0 = inlined_call_operand.vmem [shape: bf16[2,64,16], index: 0, kind: input, shape index: {}]
  %s1 = inlined_call_operand.vmem [shape: f32[2,1,16], index: 1, kind: input, shape index: {}]
  %s2 = inlined_call_operand.vmem [shape: bf16[16,16], index: 2, kind: input, shape index: {}]
  %s3 = inlined_call_operand.vmem [shape: f32[1,16], index: 3, kind: input, shape index: {}]
  %s4 = inlined_call_operand.vmem [shape: bf16[2,64,8], index: 4, kind: input, shape index: {}]
  %s5 = inlined_call_operand.vmem [shape: bf16[8,16], index: 5, kind: input, shape index: {}]
  %s6 = inlined_call_operand.vmem [shape: f32[1,16], index: 6, kind: input, shape index: {}]
  %s7 = inlined_call_operand.vmem [shape: bf16[2,64,16], index: 7, kind: output, shape index: {}]
  %s8 = sld [smem:[#allocation0]]
  $region61: #{regstage_forward.11} parent=0
    _
  %s10 = ssub.s32 1, %s8
  %s11 = scalar_select 0, %s10, %s8
  loop: start=0, step=1, limit=4
  $region2: #{regstage_forward.11} parent=0 // loop_pre_header
    _
  $region3: #{regstage_forward.11} parent=0 // loop_header
    %s13 = sphi 0, %s17
    %p14 = scmp.ge.s32.totalorder %s13, 4
    %s20 = sphi 0, %s32
    %s21 = sphi 0, %s28
    %s22 = sphi 0, %s20
    %s23 = sphi 0, %s21
    %s24 = sphi 0, %s22
    %s25 = sphi 0, %s23
    %s37 = sphi 0, %s39
    %s40 = sphi 0, %s37
    %s41 = sphi 0, %s40
    %s57 = sphi 0, %s41
    %s63 = sphi 0, %s65
    %s66 = sphi 0, %s63
    %s67 = sphi 0, %s66
    %s83 = sphi 0, %s67
    %s87 = sphi 0, %s87
    %s89 = sphi 0, %s87
    %s90 = sphi 0, %s89
    %s104 = sphi 0, %s90
    %s108 = sphi 0, %s108
    %s110 = sphi 0, %s108
    %s111 = sphi 0, %s110
    %s125 = sphi 0, %s111
    %s133 = sphi 0, %s135
    %s136 = sphi 0, %s133
    %s137 = sphi 0, %s136
    %s153 = sphi 0, %s137
    %s157 = sphi 0, %s157
    %s159 = sphi 0, %s157
    %s160 = sphi 0, %s159
    %s174 = sphi 0, %s160
    %s178 = sphi 0, %s178
    %s180 = sphi 0, %s178
    %s181 = sphi 0, %s180
    %s195 = sphi 0, %s181
    %s203 = sphi 0, %s205
    %s206 = sphi 0, %s203
    %s207 = sphi 0, %s206
    %s223 = sphi 0, %s207
  $region4: #{regstage_forward.11} parent=0 // loop_header_branch
    %16 = sbr.rel (%p14) target = $region8
  $region5: #{regstage_forward.11} parent=0 // loop_body
    %s18 = ssub.s32 %s13, 1
    %s19 = ssub.s32 %s13, 2
    %s26 = sadd.s32 1, %s21
    %p27 = scmp.ge.s32.totalorder %s26, 1
    %s28 = scalar_select %p27, 0, %s26
    %s29 = sadd.s32 1, %s20
    %s30 = scalar_select %p27, %s29, %s20
    %p31 = scmp.ge.s32.totalorder %s30, 2
    %s32 = scalar_select %p31, 0, %s30
    %s33 = ssub.s32 %s20, %s32
    %s34 = ssub.s32 %s21, %s28
    %s35 = sor.u32 %s33, %s34
    %p36 = scmp.eq.s32.totalorder %s35, 0
    %s38 = sadd.s32 %s37, 1
    %s39 = scalar_select %p36, %s37, %s38
    %p42 = pneg %p36
    %p43 = scmp.eq.s32.totalorder %s13, 1
    %p44 = por %p42, %p43
    %p45 = scmp.ne.s32.totalorder %s37, %s40
    %p46 = scmp.eq.s32.totalorder %s13, 0
    %p47 = por %p45, %p46
    %p48 = scmp.ne.s32.totalorder %s37, %s40
    %p49 = scmp.eq.s32.totalorder %s18, 1
    %p50 = por %p48, %p49
    %p51 = scmp.ne.s32.totalorder %s40, %s41
    %p52 = scmp.eq.s32.totalorder %s18, 0
    %p53 = por %p51, %p52
    %p54 = scmp.ne.s32.totalorder %s40, %s41
    %p55 = scmp.eq.s32.totalorder %s19, 1
    %p56 = por %p54, %p55
    %p58 = scmp.ne.s32.totalorder %s41, %s57
    %p59 = scmp.eq.s32.totalorder %s19, 0
    %p60 = por %p58, %p59
    %s61 = ssub.s32 %s20, %s32
    %p62 = scmp.eq.s32.totalorder %s61, 0
    %s64 = sadd.s32 %s63, 1
    %s65 = scalar_select %p62, %s63, %s64
    %p68 = pneg %p62
    %p69 = scmp.eq.s32.totalorder %s13, 1
    %p70 = por %p68, %p69
    %p71 = scmp.ne.s32.totalorder %s63, %s66
    %p72 = scmp.eq.s32.totalorder %s13, 0
    %p73 = por %p71, %p72
    %p74 = scmp.ne.s32.totalorder %s63, %s66
    %p75 = scmp.eq.s32.totalorder %s18, 1
    %p76 = por %p74, %p75
    %p77 = scmp.ne.s32.totalorder %s66, %s67
    %p78 = scmp.eq.s32.totalorder %s18, 0
    %p79 = por %p77, %p78
    %p80 = scmp.ne.s32.totalorder %s66, %s67
    %p81 = scmp.eq.s32.totalorder %s19, 1
    %p82 = por %p80, %p81
    %p84 = scmp.ne.s32.totalorder %s67, %s83
    %p85 = scmp.eq.s32.totalorder %s19, 0
    %p86 = por %p84, %p85
    %s88 = sadd.s32 %s87, 1
    %p91 = scmp.eq.s32.totalorder %s13, 1
    %p92 = scmp.ne.s32.totalorder %s87, %s89
    %p93 = scmp.eq.s32.totalorder %s13, 0
    %p94 = por %p92, %p93
    %p95 = scmp.ne.s32.totalorder %s87, %s89
    %p96 = scmp.eq.s32.totalorder %s18, 1
    %p97 = por %p95, %p96
    %p98 = scmp.ne.s32.totalorder %s89, %s90
    %p99 = scmp.eq.s32.totalorder %s18, 0
    %p100 = por %p98, %p99
    %p101 = scmp.ne.s32.totalorder %s89, %s90
    %p102 = scmp.eq.s32.totalorder %s19, 1
    %p103 = por %p101, %p102
    %p105 = scmp.ne.s32.totalorder %s90, %s104
    %p106 = scmp.eq.s32.totalorder %s19, 0
    %p107 = por %p105, %p106
    %s109 = sadd.s32 %s108, 1
    %p112 = scmp.eq.s32.totalorder %s13, 1
    %p113 = scmp.ne.s32.totalorder %s108, %s110
    %p114 = scmp.eq.s32.totalorder %s13, 0
    %p115 = por %p113, %p114
    %p116 = scmp.ne.s32.totalorder %s108, %s110
    %p117 = scmp.eq.s32.totalorder %s18, 1
    %p118 = por %p116, %p117
    %p119 = scmp.ne.s32.totalorder %s110, %s111
    %p120 = scmp.eq.s32.totalorder %s18, 0
    %p121 = por %p119, %p120
    %p122 = scmp.ne.s32.totalorder %s110, %s111
    %p123 = scmp.eq.s32.totalorder %s19, 1
    %p124 = por %p122, %p123
    %p126 = scmp.ne.s32.totalorder %s111, %s125
    %p127 = scmp.eq.s32.totalorder %s19, 0
    %p128 = por %p126, %p127
    %s129 = ssub.s32 %s20, %s32
    %s130 = ssub.s32 %s21, %s28
    %s131 = sor.u32 %s129, %s130
    %p132 = scmp.eq.s32.totalorder %s131, 0
    %s134 = sadd.s32 %s133, 1
    %s135 = scalar_select %p132, %s133, %s134
    %p138 = pneg %p132
    %p139 = scmp.eq.s32.totalorder %s13, 1
    %p140 = por %p138, %p139
    %p141 = scmp.ne.s32.totalorder %s133, %s136
    %p142 = scmp.eq.s32.totalorder %s13, 0
    %p143 = por %p141, %p142
    %p144 = scmp.ne.s32.totalorder %s133, %s136
    %p145 = scmp.eq.s32.totalorder %s18, 1
    %p146 = por %p144, %p145
    %p147 = scmp.ne.s32.totalorder %s136, %s137
    %p148 = scmp.eq.s32.totalorder %s18, 0
    %p149 = por %p147, %p148
    %p150 = scmp.ne.s32.totalorder %s136, %s137
    %p151 = scmp.eq.s32.totalorder %s19, 1
    %p152 = por %p150, %p151
    %p154 = scmp.ne.s32.totalorder %s137, %s153
    %p155 = scmp.eq.s32.totalorder %s19, 0
    %p156 = por %p154, %p155
    %s158 = sadd.s32 %s157, 1
    %p161 = scmp.eq.s32.totalorder %s13, 1
    %p162 = scmp.ne.s32.totalorder %s157, %s159
    %p163 = scmp.eq.s32.totalorder %s13, 0
    %p164 = por %p162, %p163
    %p165 = scmp.ne.s32.totalorder %s157, %s159
    %p166 = scmp.eq.s32.totalorder %s18, 1
    %p167 = por %p165, %p166
    %p168 = scmp.ne.s32.totalorder %s159, %s160
    %p169 = scmp.eq.s32.totalorder %s18, 0
    %p170 = por %p168, %p169
    %p171 = scmp.ne.s32.totalorder %s159, %s160
    %p172 = scmp.eq.s32.totalorder %s19, 1
    %p173 = por %p171, %p172
    %p175 = scmp.ne.s32.totalorder %s160, %s174
    %p176 = scmp.eq.s32.totalorder %s19, 0
    %p177 = por %p175, %p176
    %s179 = sadd.s32 %s178, 1
    %p182 = scmp.eq.s32.totalorder %s13, 1
    %p183 = scmp.ne.s32.totalorder %s178, %s180
    %p184 = scmp.eq.s32.totalorder %s13, 0
    %p185 = por %p183, %p184
    %p186 = scmp.ne.s32.totalorder %s178, %s180
    %p187 = scmp.eq.s32.totalorder %s18, 1
    %p188 = por %p186, %p187
    %p189 = scmp.ne.s32.totalorder %s180, %s181
    %p190 = scmp.eq.s32.totalorder %s18, 0
    %p191 = por %p189, %p190
    %p192 = scmp.ne.s32.totalorder %s180, %s181
    %p193 = scmp.eq.s32.totalorder %s19, 1
    %p194 = por %p192, %p193
    %p196 = scmp.ne.s32.totalorder %s181, %s195
    %p197 = scmp.eq.s32.totalorder %s19, 0
    %p198 = por %p196, %p197
    %s199 = ssub.s32 %s20, %s32
    %s200 = ssub.s32 %s21, %s28
    %s201 = sor.u32 %s199, %s200
    %p202 = scmp.eq.s32.totalorder %s201, 0
    %s204 = sadd.s32 %s203, 1
    %s205 = scalar_select %p202, %s203, %s204
    %p208 = pneg %p202
    %p209 = scmp.eq.s32.totalorder %s13, 1
    %p210 = por %p208, %p209
    %p211 = scmp.ne.s32.totalorder %s203, %s206
    %p212 = scmp.eq.s32.totalorder %s13, 0
    %p213 = por %p211, %p212
    %p214 = scmp.ne.s32.totalorder %s203, %s206
    %p215 = scmp.eq.s32.totalorder %s18, 1
    %p216 = por %p214, %p215
    %p217 = scmp.ne.s32.totalorder %s206, %s207
    %p218 = scmp.eq.s32.totalorder %s18, 0
    %p219 = por %p217, %p218
    %p220 = scmp.ne.s32.totalorder %s206, %s207
    %p221 = scmp.eq.s32.totalorder %s19, 1
    %p222 = por %p220, %p221
    %p224 = scmp.ne.s32.totalorder %s207, %s223
    %p225 = scmp.eq.s32.totalorder %s19, 0
    %p226 = por %p224, %p225
    %p227 = scmp.le.s32.totalorder 1, %s13
    %p228 = scmp.lt.s32.totalorder %s13, 3
    %p229 = pnand %p227, %p228
    %p230 = pneg %p229
    // Predicated region
    $region9: #{regstage_forward.11} parent=5 // pred_check
      _
    $region10: #{regstage_forward.11} parent=5 // pred_check_branch
      %232 = sbr.rel (%p229) target = $region12
    $region11: #{regstage_forward.11} parent=5 // pred_region
      %s233 = ssub.s32 %s13, 1
      // Predicated region
      $region13: #{regstage_forward.11} parent=11 // pred_check
        %p234 = pneg %p100
      $region14: #{regstage_forward.11} parent=11 // pred_check_branch
        %236 = sbr.rel (%p234) target = $region16
      $region15: #{regstage_forward.11} parent=11 // pred_region
        _
      $region16: #{regstage_forward.11} parent=11 // pred_fallthru
        _
      // Predicated region
      $region17: #{regstage_forward.11} parent=11 // pred_check
        %p237 = pneg %p121
      $region18: #{regstage_forward.11} parent=11 // pred_check_branch
        %239 = sbr.rel (%p237) target = $region20
      $region19: #{regstage_forward.11} parent=11 // pred_region
        _
      $region20: #{regstage_forward.11} parent=11 // pred_fallthru
        _
      // Predicated region
      $region21: #{regstage_forward.11} parent=11 // pred_check
        %p240 = pneg %p170
      $region22: #{regstage_forward.11} parent=11 // pred_check_branch
        %242 = sbr.rel (%p240) target = $region24
      $region23: #{regstage_forward.11} parent=11 // pred_region
        _
      $region24: #{regstage_forward.11} parent=11 // pred_fallthru
        _
      // Predicated region
      $region25: #{regstage_forward.11} parent=11 // pred_check
        %p243 = pneg %p191
      $region26: #{regstage_forward.11} parent=11 // pred_check_branch
        %245 = sbr.rel (%p243) target = $region28
      $region27: #{regstage_forward.11} parent=11 // pred_region
        _
      $region28: #{regstage_forward.11} parent=11 // pred_fallthru
        _
    $region12: #{regstage_forward.11} parent=5 // pred_fallthru
      _
    %p246 = scmp.lt.s32.totalorder %s13, 2
    // Predicated region
    $region29: #{regstage_forward.11} parent=5 // pred_check
      %p247 = pneg %p246
    $region30: #{regstage_forward.11} parent=5 // pred_check_branch
      %249 = sbr.rel (%p247) target = $region32
    $region31: #{regstage_forward.11} parent=5 // pred_region
      // Predicated region
      $region33: #{regstage_forward.11} parent=31 // pred_check
        %p250 = pneg %p47
      $region34: #{regstage_forward.11} parent=31 // pred_check_branch
        %252 = sbr.rel (%p250) target = $region36
      $region35: #{regstage_forward.11} parent=31 // pred_region
        %s253 = smul.u32 8, %s21
        %p254 = scmp.lt.s32.totalorder %s20, 1
        %s255 = scalar_select %p254, %s20, 1
        %p256 = scmp.lt.s32.totalorder %s253, 7
        %s257 = scalar_select %p256, %s253, 7
        %s258 = smul.addr %s255, 8
        %s259 = sadd.s32 %s257, %s258
        %s260 = smul.addr %s259, 4
        %s261 = scalar_lea.vmem %s0, %s260
        %s262 = smul.u32 8, %s21
      $region36: #{regstage_forward.11} parent=31 // pred_fallthru
        _
      // Predicated region
      $region37: #{regstage_forward.11} parent=31 // pred_check
        %p263 = pneg %p73
      $region38: #{regstage_forward.11} parent=31 // pred_check_branch
        %265 = sbr.rel (%p263) target = $region40
      $region39: #{regstage_forward.11} parent=31 // pred_region
        %p266 = scmp.lt.s32.totalorder %s20, 1
        %s267 = scalar_select %p266, %s20, 1
        %s268 = scalar_lea.vmem %s1, %s267
      $region40: #{regstage_forward.11} parent=31 // pred_fallthru
        _
      // Predicated region
      $region41: #{regstage_forward.11} parent=31 // pred_check
        %p269 = pneg %p143
      $region42: #{regstage_forward.11} parent=31 // pred_check_branch
        %271 = sbr.rel (%p269) target = $region44
      $region43: #{regstage_forward.11} parent=31 // pred_region
        %s272 = smul.u32 8, %s21
        %p273 = scmp.lt.s32.totalorder %s20, 1
        %s274 = scalar_select %p273, %s20, 1
        %p275 = scmp.lt.s32.totalorder %s272, 7
        %s276 = scalar_select %p275, %s272, 7
        %s277 = smul.addr %s274, 8
        %s278 = sadd.s32 %s276, %s277
        %s279 = smul.addr %s278, 4
        %s280 = scalar_lea.vmem %s4, %s279
        %s281 = smul.u32 8, %s21
      $region44: #{regstage_forward.11} parent=31 // pred_fallthru
        _
    $region32: #{regstage_forward.11} parent=5 // pred_fallthru
      _
    %p282 = scmp.le.s32.totalorder 1, %s13
    %p283 = scmp.lt.s32.totalorder %s13, 3
    %p284 = pnand %p282, %p283
    %p285 = pneg %p284
    // Predicated region
    $region45: #{regstage_forward.11} parent=5 // pred_check
      _
    $region46: #{regstage_forward.11} parent=5 // pred_check_branch
      %287 = sbr.rel (%p284) target = $region48
    $region47: #{regstage_forward.11} parent=5 // pred_region
      %s288 = ssub.s32 %s13, 1
      %s289 = smul.u32 8, %s23
      %p290 = scmp.lt.s32.totalorder %s22, 1
      %s291 = scalar_select %p290, %s22, 1
      %p292 = scmp.lt.s32.totalorder %s289, 7
      %s293 = scalar_select %p292, %s289, 7
      %s294 = smul.addr %s291, 8
      %s295 = sadd.s32 %s293, %s294
      %s296 = smul.addr %s295, 4
      %s297 = scalar_lea.vmem %s0, %s296
      %p298 = pneg %p53
      %p299 = pneg %p50
      %p300 = scmp.lt.s32.totalorder %s22, 1
      %s301 = scalar_select %p300, %s22, 1
      %s302 = scalar_lea.vmem %s1, %s301
      %p303 = pneg %p79
      %p304 = pneg %p76
      %p305 = pneg %p100
      %p306 = pneg %p97
      %p307 = pneg %p121
      %p308 = pneg %p118
      %s309 = smul.u32 8, %s23
      %p310 = scmp.lt.s32.totalorder %s22, 1
      %s311 = scalar_select %p310, %s22, 1
      %p312 = scmp.lt.s32.totalorder %s309, 7
      %s313 = scalar_select %p312, %s309, 7
      %s314 = smul.addr %s311, 8
      %s315 = sadd.s32 %s313, %s314
      %s316 = smul.addr %s315, 4
      %s317 = scalar_lea.vmem %s4, %s316
      %p318 = pneg %p149
      %p319 = pneg %p146
      %p320 = pneg %p170
      %p321 = pneg %p167
      %p322 = pneg %p191
      %p323 = pneg %p188
      %p324 = pneg %p219
      %p325 = pneg %p216
      %s326 = smul.u32 8, %s23
      %p327 = scmp.lt.s32.totalorder %s22, 1
      %s328 = scalar_select %p327, %s22, 1
      %p329 = scmp.lt.s32.totalorder %s326, 7
      %s330 = scalar_select %p329, %s326, 7
      %s331 = smul.addr %s328, 8
      %s332 = sadd.s32 %s330, %s331
      %s333 = smul.addr %s332, 4
      %s334 = scalar_lea.vmem %s7, %s333
      %s335 = smul.u32 8, %s23
      %p336 = scmp.lt.s32.totalorder %s22, 1
      %s337 = scalar_select %p336, %s22, 1
      %p338 = scmp.lt.s32.totalorder %s335, 7
      %s339 = scalar_select %p338, %s335, 7
      %s340 = smul.addr %s337, 8
      %s341 = sadd.s32 %s339, %s340
      %s342 = smul.addr %s341, 4
      %s343 = scalar_lea.vmem %s0, %s342
      %s344 = smul.u32 8, %s23
      %p345 = scmp.lt.s32.totalorder %s22, 1
      %s346 = scalar_select %p345, %s22, 1
      %s347 = scalar_lea.vmem %s1, %s346
      %s348 = smul.u32 8, %s23
      %p349 = scmp.lt.s32.totalorder %s22, 1
      %s350 = scalar_select %p349, %s22, 1
      %p351 = scmp.lt.s32.totalorder %s348, 7
      %s352 = scalar_select %p351, %s348, 7
      %s353 = smul.addr %s350, 8
      %s354 = sadd.s32 %s352, %s353
      %s355 = smul.addr %s354, 4
      %s356 = scalar_lea.vmem %s4, %s355
      %s357 = smul.u32 8, %s23
      %s358 = smul.u32 8, %s23
      %p359 = scmp.lt.s32.totalorder %s22, 1
      %s360 = scalar_select %p359, %s22, 1
      %p361 = scmp.lt.s32.totalorder %s358, 7
      %s362 = scalar_select %p361, %s358, 7
      %s363 = smul.addr %s360, 8
      %s364 = sadd.s32 %s362, %s363
      %s365 = smul.addr %s364, 4
      %s366 = scalar_lea.vmem %s7, %s365
      %s367 = smul.u32 8, %s23
      %v369 = vld [vmem:[%s343] sm:$0xf]
      %v370 = vld [vmem:[%s343 + $0x4] sm:$0xf]
      %v371 = vld [vmem:[%s343 + $0x8] sm:$0xf]
      %v372 = vld [vmem:[%s343 + $0xc] sm:$0xf]
      %v373 = vld [vmem:[%s343 + $0x10] sm:$0xf]
      %v374 = vld [vmem:[%s343 + $0x14] sm:$0xf]
      %v375 = vld [vmem:[%s343 + $0x18] sm:$0xf]
      %v376 = vld [vmem:[%s343 + $0x1c] sm:$0xf]
      %v377 = vunpack.c.l.bf16 %v369
      %v378 = vunpack.c.l.bf16 %v370
      %v379 = vunpack.c.l.bf16 %v371
      %v380 = vunpack.c.l.bf16 %v372
      %v381 = vunpack.c.l.bf16 %v373
      %v382 = vunpack.c.l.bf16 %v374
      %v383 = vunpack.c.l.bf16 %v375
      %v384 = vunpack.c.l.bf16 %v376
      %v385 = vld [vmem:[%s347] sm:$0x1]
      %v387 = vperm.slane %v385, 0
      %v389 = vmul.f32 %v377, %v387
      %v390 = vmul.f32 %v378, %v387
      %v391 = vmul.f32 %v379, %v387
      %v392 = vmul.f32 %v380, %v387
      %v393 = vmul.f32 %v381, %v387
      %v394 = vmul.f32 %v382, %v387
      %v395 = vmul.f32 %v383, %v387
      %v396 = vmul.f32 %v384, %v387
      %v397 = vpack.c.bf16 %v390, %v389
      %v398 = vpack.c.bf16 %v392, %v391
      %v399 = vpack.c.bf16 %v394, %v393
      %v400 = vpack.c.bf16 %v396, %v395
      %v401 = vld [vmem:[%s2] sm:$0xf]
      %v402 = vld [vmem:[%s2 + $0x4] sm:$0xf]
      %v403 = vld [vmem:[%s3] sm:$0x1]
      %v405 = vperm.slane %v403, 0
      %v409 = vunpack.c.l.b16 %v401
      %v410 = vunpack.c.l.b16 %v402
      %v411 = vpack.c.b16 %v410, %v409
      %vm413 = vcmask 130048
      %v415 = vsel %vm413, %v397, 0
      %v418 = vsel %vm413, %v398, 0
      %v421 = vsel %vm413, %v399, 0
      %v424 = vsel %vm413, %v400, 0
      %426 = vmatpush.bf16.msra.mxu0 0
      %427 = vmatpush.bf16.msra.mxu0 0
      %428 = vmatpush.bf16.msra.mxu0 0
      %429 = vmatpush.bf16.msra.mxu0 0
      %430 = vmatpush.bf16.msra.mxu0 0
      %431 = vmatpush.bf16.msra.mxu0 0
      %432 = vmatpush.bf16.msra.mxu0 0
      %433 = vmatpush.bf16.msra.mxu0 %v411
      %434 = vmatmul.bf16.gmra.mxu0 %v415
      %v435 = vpop.f32.mrf.mxu0
      %v436 = vadd.f32 %v405, %v435
      %v437 = vpop.f32.mrf.mxu0
      %v438 = vadd.f32 %v405, %v437
      %439 = vmatmul.bf16.gmra.mxu0 %v418
      %v440 = vpop.f32.mrf.mxu0
      %v441 = vadd.f32 %v405, %v440
      %v442 = vpop.f32.mrf.mxu0
      %v443 = vadd.f32 %v405, %v442
      %444 = vmatmul.bf16.gmra.mxu0 %v421
      %v445 = vpop.f32.mrf.mxu0
      %v446 = vadd.f32 %v405, %v445
      %v447 = vpop.f32.mrf.mxu0
      %v448 = vadd.f32 %v405, %v447
      %449 = vmatmul.bf16.gmra.mxu0 %v424
      %v450 = vpop.f32.mrf.mxu0
      %v451 = vadd.f32 %v405, %v450
      %v452 = vpop.f32.mrf.mxu0
      %v453 = vadd.f32 %v405, %v452
      %454 = vdwg.mxu0
      %v455 = vld [vmem:[%s356] sm:$0xf]
      %v456 = vld [vmem:[%s356 + $0x4] sm:$0xf]
      %v457 = vld [vmem:[%s356 + $0x8] sm:$0xf]
      %v458 = vld [vmem:[%s356 + $0xc] sm:$0xf]
      %v459 = vld [vmem:[%s356 + $0x10] sm:$0xf]
      %v460 = vld [vmem:[%s356 + $0x14] sm:$0xf]
      %v461 = vld [vmem:[%s356 + $0x18] sm:$0xf]
      %v462 = vld [vmem:[%s356 + $0x1c] sm:$0xf]
      %v463 = vld [vmem:[%s5] sm:$0xf]
      %v464 = vld [vmem:[%s6] sm:$0x1]
      %v466 = vperm.slane %v464, 0
      %v476 = vunpack.c.l.b16 %v455
      %v477 = vunpack.c.l.b16 %v456
      %v478 = vunpack.c.l.b16 %v457
      %v479 = vunpack.c.l.b16 %v458
      %v480 = vunpack.c.l.b16 %v459
      %v481 = vunpack.c.l.b16 %v460
      %v482 = vunpack.c.l.b16 %v461
      %v483 = vunpack.c.l.b16 %v462
      %v484 = vpack.c.b16 %v477, %v476
      %v485 = vpack.c.b16 %v479, %v478
      %v486 = vpack.c.b16 %v481, %v480
      %v487 = vpack.c.b16 %v483, %v482
      %vm488 = vcmask 64512
      %v490 = vsel %vm488, %v484, 0
      %v493 = vsel %vm488, %v485, 0
      %v496 = vsel %vm488, %v486, 0
      %v499 = vsel %vm488, %v487, 0
      %vm501 = vcmask 1043456
      %v503 = vsel %vm501, %v463, 0
      %505 = vmatpush.bf16.msra.mxu0 0
      %506 = vmatpush.bf16.msra.mxu0 0
      %507 = vmatpush.bf16.msra.mxu0 0
      %508 = vmatpush.bf16.msra.mxu0 0
      %509 = vmatpush.bf16.msra.mxu0 0
      %510 = vmatpush.bf16.msra.mxu0 0
      %511 = vmatpush.bf16.msra.mxu0 0
      %512 = vmatpush.bf16.msra.mxu0 %v503
      %513 = vmatmul.bf16.gmra.mxu0 %v490
      %v514 = vpop.f32.mrf.mxu0
      %v515 = vadd.f32 %v466, %v514
      %v516 = vpop.f32.mrf.mxu0
      %v517 = vadd.f32 %v466, %v516
      %518 = vmatmul.bf16.gmra.mxu0 %v493
      %v519 = vpop.f32.mrf.mxu0
      %v520 = vadd.f32 %v466, %v519
      %v521 = vpop.f32.mrf.mxu0
      %v522 = vadd.f32 %v466, %v521
      %523 = vmatmul.bf16.gmra.mxu0 %v496
      %v524 = vpop.f32.mrf.mxu0
      %v525 = vadd.f32 %v466, %v524
      %v526 = vpop.f32.mrf.mxu0
      %v527 = vadd.f32 %v466, %v526
      %528 = vmatmul.bf16.gmra.mxu0 %v499
      %v529 = vpop.f32.mrf.mxu0
      %v530 = vadd.f32 %v466, %v529
      %v531 = vpop.f32.mrf.mxu0
      %v532 = vadd.f32 %v466, %v531
      %533 = vdwg.mxu0
      %v534 = vadd.f32 %v436, %v515
      %v535 = vadd.f32 %v438, %v517
      %v536 = vadd.f32 %v441, %v520
      %v537 = vadd.f32 %v443, %v522
      %v538 = vadd.f32 %v446, %v525
      %v539 = vadd.f32 %v448, %v527
      %v540 = vadd.f32 %v451, %v530
      %v541 = vadd.f32 %v453, %v532
      %v542 = vmax.f32 %v534, 0.0
      %v543 = vmax.f32 %v535, 0.0
      %v544 = vmax.f32 %v536, 0.0
      %v545 = vmax.f32 %v537, 0.0
      %v546 = vmax.f32 %v538, 0.0
      %v547 = vmax.f32 %v539, 0.0
      %v548 = vmax.f32 %v540, 0.0
      %v549 = vmax.f32 %v541, 0.0
      %v550 = vpack.c.bf16 %v542, %v542
      %v551 = vpack.c.bf16 %v543, %v543
      %v552 = vpack.c.bf16 %v544, %v544
      %v553 = vpack.c.bf16 %v545, %v545
      %v554 = vpack.c.bf16 %v546, %v546
      %v555 = vpack.c.bf16 %v547, %v547
      %v556 = vpack.c.bf16 %v548, %v548
      %v557 = vpack.c.bf16 %v549, %v549
      %vm558 = vcmask 125952
      %559 = vst.msk [vmem:[%s366] sm:$0xf] %vm558, %v550
      %560 = vst.msk [vmem:[%s366 + $0x4] sm:$0xf] %vm558, %v551
      %561 = vst.msk [vmem:[%s366 + $0x8] sm:$0xf] %vm558, %v552
      %562 = vst.msk [vmem:[%s366 + $0xc] sm:$0xf] %vm558, %v553
      %563 = vst.msk [vmem:[%s366 + $0x10] sm:$0xf] %vm558, %v554
      %564 = vst.msk [vmem:[%s366 + $0x14] sm:$0xf] %vm558, %v555
      %565 = vst.msk [vmem:[%s366 + $0x18] sm:$0xf] %vm558, %v556
      %566 = vst.msk [vmem:[%s366 + $0x1c] sm:$0xf] %vm558, %v557
      %s567 = smul.u32 8, %s23
      %p568 = scmp.lt.s32.totalorder %s22, 1
      %s569 = scalar_select %p568, %s22, 1
      %p570 = scmp.lt.s32.totalorder %s567, 7
      %s571 = scalar_select %p570, %s567, 7
      %s572 = smul.addr %s569, 8
      %s573 = sadd.s32 %s571, %s572
      %s574 = smul.addr %s573, 4
      %s575 = scalar_lea.vmem %s7, %s574
      // Predicated region
      $region49: #{regstage_forward.11} parent=47 // pred_check
        %p576 = pneg %p216
      $region50: #{regstage_forward.11} parent=47 // pred_check_branch
        %578 = sbr.rel (%p576) target = $region52
      $region51: #{regstage_forward.11} parent=47 // pred_region
        %s579 = smul.u32 8, %s23
      $region52: #{regstage_forward.11} parent=47 // pred_fallthru
        _
    $region48: #{regstage_forward.11} parent=5 // pred_fallthru
      _
    %p580 = scmp.le.s32.totalorder 2, %s13
    // Predicated region
    $region53: #{regstage_forward.11} parent=5 // pred_check
      %p581 = pneg %p580
    $region54: #{regstage_forward.11} parent=5 // pred_check_branch
      %583 = sbr.rel (%p581) target = $region56
    $region55: #{regstage_forward.11} parent=5 // pred_region
      %s584 = ssub.s32 %s13, 2
      // Predicated region
      $region57: #{regstage_forward.11} parent=55 // pred_check
        %p585 = pneg %p222
      $region58: #{regstage_forward.11} parent=55 // pred_check_branch
        %587 = sbr.rel (%p585) target = $region60
      $region59: #{regstage_forward.11} parent=55 // pred_region
        %s588 = smul.u32 8, %s25
        %p589 = scmp.lt.s32.totalorder %s24, 1
        %s590 = scalar_select %p589, %s24, 1
        %p591 = scmp.lt.s32.totalorder %s588, 7
        %s592 = scalar_select %p591, %s588, 7
        %s593 = smul.addr %s590, 8
        %s594 = sadd.s32 %s592, %s593
        %s595 = smul.addr %s594, 4
        %s596 = scalar_lea.vmem %s7, %s595
      $region60: #{regstage_forward.11} parent=55 // pred_fallthru
        _
    $region56: #{regstage_forward.11} parent=5 // pred_fallthru
      _
  $region6: #{regstage_forward.11} parent=0 // loop_footer
    %s17 = sadd.s32 1, %s13
  $region7: #{regstage_forward.11} parent=0 // loop_footer_branch
    %12 = sbr.rel target = $region3
  $region8: #{regstage_forward.11} parent=0 // loop_exit
    _

// kernel: regstage_forward.12
$region0: #{regstage_forward.12}
  #allocation0 [shape = 'u32[]', space=smem, size = 0x4, offset = 0x4, fixed_abs, tag = 'smem constant byte address 0x4 - core index']
  #allocation1 [shape = 'u32[72,128]{1,0:T(1,128)}', space=vmem, size = 0x9000, scoped, tag = 'internal scratch']
  %s0 = inlined_call_operand.vmem [shape: bf16[128,16], index: 0, kind: input, shape index: {}]
  %s1 = inlined_call_operand.vmem [shape: bf16[16,16], index: 1, kind: input, shape index: {}]
  %s2 = inlined_call_operand.vmem [shape: f32[1,16], index: 2, kind: input, shape index: {}]
  %s3 = inlined_call_operand.vmem [shape: bf16[128,16], index: 3, kind: output, shape index: {}]
  %s4 = sld [smem:[#allocation0]]
  $region22: #{regstage_forward.12} parent=0
    _
  %s6 = ssub.s32 1, %s4
  %s7 = scalar_select 0, %s6, %s4
  // Predicated region
  $region2: #{regstage_forward.12} parent=0 // pred_check
    _
  $region3: #{regstage_forward.12} parent=0 // pred_check_branch
    %9 = sbr.rel (0) target = $region5
  $region4: #{regstage_forward.12} parent=0 // pred_region
    _
  $region5: #{regstage_forward.12} parent=0 // pred_fallthru
    _
  // Predicated region
  $region6: #{regstage_forward.12} parent=0 // pred_check
    _
  $region7: #{regstage_forward.12} parent=0 // pred_check_branch
    %11 = sbr.rel (0) target = $region9
  $region8: #{regstage_forward.12} parent=0 // pred_region
    _
  $region9: #{regstage_forward.12} parent=0 // pred_fallthru
    _
  // Predicated region
  $region10: #{regstage_forward.12} parent=0 // pred_check
    _
  $region11: #{regstage_forward.12} parent=0 // pred_check_branch
    %13 = sbr.rel (0) target = $region13
  $region12: #{regstage_forward.12} parent=0 // pred_region
    _
  $region13: #{regstage_forward.12} parent=0 // pred_fallthru
    _
  %v15 = vld [vmem:[%s0] sm:$0xf]
  %v16 = vld [vmem:[%s0 + $0x4] sm:$0xf]
  %v17 = vld [vmem:[%s0 + $0x8] sm:$0xf]
  %v18 = vld [vmem:[%s0 + $0xc] sm:$0xf]
  %v19 = vld [vmem:[%s0 + $0x10] sm:$0xf]
  %v20 = vld [vmem:[%s0 + $0x14] sm:$0xf]
  %v21 = vld [vmem:[%s0 + $0x18] sm:$0xf]
  %v22 = vld [vmem:[%s0 + $0x1c] sm:$0xf]
  %v23 = vld [vmem:[%s0 + $0x20] sm:$0xf]
  %v24 = vld [vmem:[%s0 + $0x24] sm:$0xf]
  %v25 = vld [vmem:[%s0 + $0x28] sm:$0xf]
  %v26 = vld [vmem:[%s0 + $0x2c] sm:$0xf]
  %v27 = vld [vmem:[%s0 + $0x30] sm:$0xf]
  %v28 = vld [vmem:[%s0 + $0x34] sm:$0xf]
  %v29 = vld [vmem:[%s0 + $0x38] sm:$0xf]
  %v30 = vld [vmem:[%s0 + $0x3c] sm:$0xf]
  %v31 = vld [vmem:[%s1] sm:$0xf]
  %v32 = vld [vmem:[%s1 + $0x4] sm:$0xf]
  %v33 = vld [vmem:[%s2] sm:$0x1]
  %v35 = vperm.slane %v33, 0
  %v53 = vunpack.c.l.b16 %v15
  %v54 = vunpack.c.l.b16 %v16
  %v55 = vunpack.c.l.b16 %v17
  %v56 = vunpack.c.l.b16 %v18
  %v57 = vunpack.c.l.b16 %v19
  %v58 = vunpack.c.l.b16 %v20
  %v59 = vunpack.c.l.b16 %v21
  %v60 = vunpack.c.l.b16 %v22
  %v61 = vunpack.c.l.b16 %v23
  %v62 = vunpack.c.l.b16 %v24
  %v63 = vunpack.c.l.b16 %v25
  %v64 = vunpack.c.l.b16 %v26
  %v65 = vunpack.c.l.b16 %v27
  %v66 = vunpack.c.l.b16 %v28
  %v67 = vunpack.c.l.b16 %v29
  %v68 = vunpack.c.l.b16 %v30
  %v69 = vpack.c.b16 %v54, %v53
  %v70 = vpack.c.b16 %v56, %v55
  %v71 = vpack.c.b16 %v58, %v57
  %v72 = vpack.c.b16 %v60, %v59
  %v73 = vpack.c.b16 %v62, %v61
  %v74 = vpack.c.b16 %v64, %v63
  %v75 = vpack.c.b16 %v66, %v65
  %v76 = vpack.c.b16 %v68, %v67
  %v79 = vunpack.c.l.b16 %v31
  %v80 = vunpack.c.l.b16 %v32
  %v81 = vpack.c.b16 %v80, %v79
  %vm83 = vcmask 130048
  %v85 = vsel %vm83, %v69, 0
  %v88 = vsel %vm83, %v70, 0
  %v91 = vsel %vm83, %v71, 0
  %v94 = vsel %vm83, %v72, 0
  %v97 = vsel %vm83, %v73, 0
  %v100 = vsel %vm83, %v74, 0
  %v103 = vsel %vm83, %v75, 0
  %v106 = vsel %vm83, %v76, 0
  %108 = vmatpush.bf16.msra.mxu0 0
  %109 = vmatpush.bf16.msra.mxu0 0
  %110 = vmatpush.bf16.msra.mxu0 0
  %111 = vmatpush.bf16.msra.mxu0 0
  %112 = vmatpush.bf16.msra.mxu0 0
  %113 = vmatpush.bf16.msra.mxu0 0
  %114 = vmatpush.bf16.msra.mxu0 0
  %115 = vmatpush.bf16.msra.mxu0 %v81
  %116 = vmatmul.bf16.gmra.mxu0 %v85
  %v117 = vpop.f32.mrf.mxu0
  %v118 = vadd.f32 %v35, %v117
  %v119 = vpop.f32.mrf.mxu0
  %v120 = vadd.f32 %v35, %v119
  %121 = vmatmul.bf16.gmra.mxu0 %v88
  %v122 = vpop.f32.mrf.mxu0
  %v123 = vadd.f32 %v35, %v122
  %v124 = vpop.f32.mrf.mxu0
  %v125 = vadd.f32 %v35, %v124
  %126 = vmatmul.bf16.gmra.mxu0 %v91
  %v127 = vpop.f32.mrf.mxu0
  %v128 = vadd.f32 %v35, %v127
  %v129 = vpop.f32.mrf.mxu0
  %v130 = vadd.f32 %v35, %v129
  %131 = vmatmul.bf16.gmra.mxu0 %v94
  %v132 = vpop.f32.mrf.mxu0
  %v133 = vadd.f32 %v35, %v132
  %v134 = vpop.f32.mrf.mxu0
  %v135 = vadd.f32 %v35, %v134
  %136 = vmatmul.bf16.gmra.mxu0 %v97
  %v137 = vpop.f32.mrf.mxu0
  %v138 = vadd.f32 %v35, %v137
  %v139 = vpop.f32.mrf.mxu0
  %v140 = vadd.f32 %v35, %v139
  %141 = vmatmul.bf16.gmra.mxu0 %v100
  %v142 = vpop.f32.mrf.mxu0
  %v143 = vadd.f32 %v35, %v142
  %v144 = vpop.f32.mrf.mxu0
  %v145 = vadd.f32 %v35, %v144
  %146 = vmatmul.bf16.gmra.mxu0 %v103
  %v147 = vpop.f32.mrf.mxu0
  %v148 = vadd.f32 %v35, %v147
  %v149 = vpop.f32.mrf.mxu0
  %v150 = vadd.f32 %v35, %v149
  %151 = vmatmul.bf16.gmra.mxu0 %v106
  %v152 = vpop.f32.mrf.mxu0
  %v153 = vadd.f32 %v35, %v152
  %v154 = vpop.f32.mrf.mxu0
  %v155 = vadd.f32 %v35, %v154
  %156 = vdwg.mxu0
  %v157 = vmax.f32 %v118, 0.0
  %v158 = vmax.f32 %v120, 0.0
  %v159 = vmax.f32 %v123, 0.0
  %v160 = vmax.f32 %v125, 0.0
  %v161 = vmax.f32 %v128, 0.0
  %v162 = vmax.f32 %v130, 0.0
  %v163 = vmax.f32 %v133, 0.0
  %v164 = vmax.f32 %v135, 0.0
  %v165 = vmax.f32 %v138, 0.0
  %v166 = vmax.f32 %v140, 0.0
  %v167 = vmax.f32 %v143, 0.0
  %v168 = vmax.f32 %v145, 0.0
  %v169 = vmax.f32 %v148, 0.0
  %v170 = vmax.f32 %v150, 0.0
  %v171 = vmax.f32 %v153, 0.0
  %v172 = vmax.f32 %v155, 0.0
  %v173 = vpack.c.bf16 %v157, %v157
  %v174 = vpack.c.bf16 %v158, %v158
  %v175 = vpack.c.bf16 %v159, %v159
  %v176 = vpack.c.bf16 %v160, %v160
  %v177 = vpack.c.bf16 %v161, %v161
  %v178 = vpack.c.bf16 %v162, %v162
  %v179 = vpack.c.bf16 %v163, %v163
  %v180 = vpack.c.bf16 %v164, %v164
  %v181 = vpack.c.bf16 %v165, %v165
  %v182 = vpack.c.bf16 %v166, %v166
  %v183 = vpack.c.bf16 %v167, %v167
  %v184 = vpack.c.bf16 %v168, %v168
  %v185 = vpack.c.bf16 %v169, %v169
  %v186 = vpack.c.bf16 %v170, %v170
  %v187 = vpack.c.bf16 %v171, %v171
  %v188 = vpack.c.bf16 %v172, %v172
  %vm189 = vcmask 125952
  %190 = vst.msk [vmem:[%s3] sm:$0xf] %vm189, %v173
  %191 = vst.msk [vmem:[%s3 + $0x4] sm:$0xf] %vm189, %v174
  %192 = vst.msk [vmem:[%s3 + $0x8] sm:$0xf] %vm189, %v175
  %193 = vst.msk [vmem:[%s3 + $0xc] sm:$0xf] %vm189, %v176
  %194 = vst.msk [vmem:[%s3 + $0x10] sm:$0xf] %vm189, %v177
  %195 = vst.msk [vmem:[%s3 + $0x14] sm:$0xf] %vm189, %v178
  %196 = vst.msk [vmem:[%s3 + $0x18] sm:$0xf] %vm189, %v179
  %197 = vst.msk [vmem:[%s3 + $0x1c] sm:$0xf] %vm189, %v180
  %198 = vst.msk [vmem:[%s3 + $0x20] sm:$0xf] %vm189, %v181
  %199 = vst.msk [vmem:[%s3 + $0x24] sm:$0xf] %vm189, %v182
  %200 = vst.msk [vmem:[%s3 + $0x28] sm:$0xf] %vm189, %v183
  %201 = vst.msk [vmem:[%s3 + $0x2c] sm:$0xf] %vm189, %v184
  %202 = vst.msk [vmem:[%s3 + $0x30] sm:$0xf] %vm189, %v185
  %203 = vst.msk [vmem:[%s3 + $0x34] sm:$0xf] %vm189, %v186
  %204 = vst.msk [vmem:[%s3 + $0x38] sm:$0xf] %vm189, %v187
  %205 = vst.msk [vmem:[%s3 + $0x3c] sm:$0xf] %vm189, %v188
  // Predicated region
  $region14: #{regstage_forward.12} parent=0 // pred_check
    _
  $region15: #{regstage_forward.12} parent=0 // pred_check_branch
    %207 = sbr.rel (0) target = $region17
  $region16: #{regstage_forward.12} parent=0 // pred_region
    _
  $region17: #{regstage_forward.12} parent=0 // pred_fallthru
    _
  // Predicated region
  $region18: #{regstage_forward.12} parent=0 // pred_check
    _
  $region19: #{regstage_forward.12} parent=0 // pred_check_branch
    %209 = sbr.rel (0) target = $region21
  $region20: #{regstage_forward.12} parent=0 // pred_region
    _
  $region21: #{regstage_forward.12} parent=0 // pred_fallthru
    _

// kernel: regstage_forward.14
$region0: #{regstage_forward.14}
  #allocation0 [shape = 'u32[]', space=smem, size = 0x4, offset = 0x4, fixed_abs, tag = 'smem constant byte address 0x4 - core index']
  #allocation1 [shape = 'u32[72,128]{1,0:T(1,128)}', space=vmem, size = 0x9000, scoped, tag = 'internal scratch']
  %s0 = inlined_call_operand.vmem [shape: f32[2,16], index: 0, kind: input, shape index: {}]
  %s1 = inlined_call_operand.vmem [shape: f32[16,4], index: 1, kind: input, shape index: {}]
  %s2 = inlined_call_operand.vmem [shape: f32[1,4], index: 2, kind: input, shape index: {}]
  %s3 = inlined_call_operand.vmem [shape: f32[4,16], index: 3, kind: input, shape index: {}]
  %s4 = inlined_call_operand.vmem [shape: f32[1,16], index: 4, kind: input, shape index: {}]
  %s5 = inlined_call_operand.vmem [shape: f32[2,16], index: 5, kind: output, shape index: {}]
  %s6 = sld [smem:[#allocation0]]
  $region30: #{regstage_forward.14} parent=0
    _
  %s8 = ssub.s32 1, %s6
  %s9 = scalar_select 0, %s8, %s6
  // Predicated region
  $region2: #{regstage_forward.14} parent=0 // pred_check
    _
  $region3: #{regstage_forward.14} parent=0 // pred_check_branch
    %11 = sbr.rel (0) target = $region5
  $region4: #{regstage_forward.14} parent=0 // pred_region
    _
  $region5: #{regstage_forward.14} parent=0 // pred_fallthru
    _
  // Predicated region
  $region6: #{regstage_forward.14} parent=0 // pred_check
    _
  $region7: #{regstage_forward.14} parent=0 // pred_check_branch
    %13 = sbr.rel (0) target = $region9
  $region8: #{regstage_forward.14} parent=0 // pred_region
    _
  $region9: #{regstage_forward.14} parent=0 // pred_fallthru
    _
  // Predicated region
  $region10: #{regstage_forward.14} parent=0 // pred_check
    _
  $region11: #{regstage_forward.14} parent=0 // pred_check_branch
    %15 = sbr.rel (0) target = $region13
  $region12: #{regstage_forward.14} parent=0 // pred_region
    _
  $region13: #{regstage_forward.14} parent=0 // pred_fallthru
    _
  // Predicated region
  $region14: #{regstage_forward.14} parent=0 // pred_check
    _
  $region15: #{regstage_forward.14} parent=0 // pred_check_branch
    %17 = sbr.rel (0) target = $region17
  $region16: #{regstage_forward.14} parent=0 // pred_region
    _
  $region17: #{regstage_forward.14} parent=0 // pred_fallthru
    _
  // Predicated region
  $region18: #{regstage_forward.14} parent=0 // pred_check
    _
  $region19: #{regstage_forward.14} parent=0 // pred_check_branch
    %19 = sbr.rel (0) target = $region21
  $region20: #{regstage_forward.14} parent=0 // pred_region
    _
  $region21: #{regstage_forward.14} parent=0 // pred_fallthru
    _
  %v20 = vld [vmem:[%s0] sm:$0x3]
  %v21 = vld [vmem:[%s1] sm:$0xff]
  %v22 = vld [vmem:[%s1 + $0x8] sm:$0xff]
  %v23 = vld [vmem:[%s2] sm:$0x1]
  %v25 = vperm.slane %v23, 0
  %vm27 = vcmask 130048
  %v29 = vsel %vm27, %v20, 0
  %31 = vmatpush.msra.mxu0 0.0
  %32 = vmatpush.msra.mxu0 0.0
  %33 = vmatpush.msra.mxu0 0.0
  %34 = vmatpush.msra.mxu0 0.0
  %35 = vmatpush.msra.mxu0 0.0
  %36 = vmatpush.msra.mxu0 0.0
  %37 = vmatpush.msra.mxu0 0.0
  %38 = vmatpush.msra.mxu0 0.0
  %39 = vmatpush.msra.mxu0 0.0
  %40 = vmatpush.msra.mxu0 0.0
  %41 = vmatpush.msra.mxu0 0.0
  %42 = vmatpush.msra.mxu0 0.0
  %43 = vmatpush.msra.mxu0 0.0
  %44 = vmatpush.msra.mxu0 0.0
  %45 = vmatpush.msra.mxu0 %v22
  %46 = vmatpush.msra.mxu0 %v21
  %47 = vmatmul.f32.gmra.mxu0 %v29
  %v48 = vpop.f32.mrf.mxu0
  %v49 = vadd.f32 %v25, %v48
  %50 = vdwg.mxu0
  %v51 = vmax.f32 %v49, 0.0
  %v52 = vld [vmem:[%s3] sm:$0xf]
  %v53 = vld [vmem:[%s4] sm:$0x1]
  %v55 = vperm.slane %v53, 0
  %vm57 = vcmask 31744
  %v59 = vsel %vm57, %v51, 0
  %vm61 = vcmask 1043456
  %v63 = vsel %vm61, %v52, 0
  %65 = vmatpush.msra.mxu0 0.0
  %66 = vmatpush.msra.mxu0 0.0
  %67 = vmatpush.msra.mxu0 0.0
  %68 = vmatpush.msra.mxu0 0.0
  %69 = vmatpush.msra.mxu0 0.0
  %70 = vmatpush.msra.mxu0 0.0
  %71 = vmatpush.msra.mxu0 0.0
  %72 = vmatpush.msra.mxu0 0.0
  %73 = vmatpush.msra.mxu0 0.0
  %74 = vmatpush.msra.mxu0 0.0
  %75 = vmatpush.msra.mxu0 0.0
  %76 = vmatpush.msra.mxu0 0.0
  %77 = vmatpush.msra.mxu0 0.0
  %78 = vmatpush.msra.mxu0 0.0
  %79 = vmatpush.msra.mxu0 0.0
  %80 = vmatpush.msra.mxu0 %v63
  %81 = vmatmul.f32.gmra.mxu0 %v59
  %v82 = vpop.f32.mrf.mxu0
  %v83 = vadd.f32 %v55, %v82
  %84 = vdwg.mxu0
  %v85 = vxor.u32 %v83, 2147483648
  %v86 = vmul.f32 %v85, 1.442695
  %v87 = vpow.pop %v86
  %v88 = vadd.f32 %v87, 1.0
  %v89 = vrcp.pop %v88
  %v90 = vmul.f32 %v88, %v89
  %v91 = vsub.f32 1.0, %v90
  %v92 = vmul.f32 %v89, %v91
  %v93 = vadd.f32 %v89, %v92
  %vm94 = vweird.f32 %v88
  %vm95 = vweird.f32 %v89
  %vm96 = vmor %vm94, %vm95
  %v97 = vsel %vm96, %v89, %v93
  %v98 = vand.u32 2147483647, %v88
  %vm99 = vcmp.eq.f32.partialorder %v98, 8.507059e+37
  %v100 = vand.u32 %v88, 2147483648
  %v101 = vor.u32 1.1754944e-38, %v100
  %v102 = vsel %vm99, %v101, %v97
  %v103 = vmul.f32 1.0, %v102
  %vm104 = vcmask 123904
  %105 = vst.msk [vmem:[%s5] sm:$0x3] %vm104, %v103
  // Predicated region
  $region22: #{regstage_forward.14} parent=0 // pred_check
    _
  $region23: #{regstage_forward.14} parent=0 // pred_check_branch
    %107 = sbr.rel (0) target = $region25
  $region24: #{regstage_forward.14} parent=0 // pred_region
    _
  $region25: #{regstage_forward.14} parent=0 // pred_fallthru
    _
  // Predicated region
  $region26: #{regstage_forward.14} parent=0 // pred_check
    _
  $region27: #{regstage_forward.14} parent=0 // pred_check_branch
    %109 = sbr.rel (0) target = $region29
  $region28: #{regstage_forward.14} parent=0 // pred_region
    _
  $region29: #{regstage_forward.14} parent=0 // pred_fallthru
    _

// kernel: regstage_forward.15
$region0: #{regstage_forward.15}
  #allocation0 [shape = 'u32[]', space=smem, size = 0x4, offset = 0x4, fixed_abs, tag = 'smem constant byte address 0x4 - core index']
  #allocation1 [shape = 'u32[72,128]{1,0:T(1,128)}', space=vmem, size = 0x9000, scoped, tag = 'internal scratch']
  %s0 = inlined_call_operand.vmem [shape: bf16[2,64,16], index: 0, kind: input, shape index: {}]
  %s1 = inlined_call_operand.vmem [shape: f32[2,1,16], index: 1, kind: input, shape index: {}]
  %s2 = inlined_call_operand.vmem [shape: bf16[16,16], index: 2, kind: input, shape index: {}]
  %s3 = inlined_call_operand.vmem [shape: f32[1,16], index: 3, kind: input, shape index: {}]
  %s4 = inlined_call_operand.vmem [shape: bf16[2,64,16], index: 4, kind: input, shape index: {}]
  %s5 = inlined_call_operand.vmem [shape: bf16[2,64,16], index: 5, kind: output, shape index: {}]
  %s6 = sld [smem:[#allocation0]]
  $region53: #{regstage_forward.15} parent=0
    _
  %s8 = ssub.s32 1, %s6
  %s9 = scalar_select 0, %s8, %s6
  loop: start=0, step=1, limit=4
  $region2: #{regstage_forward.15} parent=0 // loop_pre_header
    _
  $region3: #{regstage_forward.15} parent=0 // loop_header
    %s11 = sphi 0, %s15
    %p12 = scmp.ge.s32.totalorder %s11, 4
    %s18 = sphi 0, %s30
    %s19 = sphi 0, %s26
    %s20 = sphi 0, %s18
    %s21 = sphi 0, %s19
    %s22 = sphi 0, %s20
    %s23 = sphi 0, %s21
    %s35 = sphi 0, %s37
    %s38 = sphi 0, %s35
    %s39 = sphi 0, %s38
    %s55 = sphi 0, %s39
    %s61 = sphi 0, %s63
    %s64 = sphi 0, %s61
    %s65 = sphi 0, %s64
    %s81 = sphi 0, %s65
    %s85 = sphi 0, %s85
    %s87 = sphi 0, %s85
    %s88 = sphi 0, %s87
    %s102 = sphi 0, %s88
    %s106 = sphi 0, %s106
    %s108 = sphi 0, %s106
    %s109 = sphi 0, %s108
    %s123 = sphi 0, %s109
    %s131 = sphi 0, %s133
    %s134 = sphi 0, %s131
    %s135 = sphi 0, %s134
    %s151 = sphi 0, %s135
    %s159 = sphi 0, %s161
    %s162 = sphi 0, %s159
    %s163 = sphi 0, %s162
    %s179 = sphi 0, %s163
  $region4: #{regstage_forward.15} parent=0 // loop_header_branch
    %14 = sbr.rel (%p12) target = $region8
  $region5: #{regstage_forward.15} parent=0 // loop_body
    %s16 = ssub.s32 %s11, 1
    %s17 = ssub.s32 %s11, 2
    %s24 = sadd.s32 1, %s19
    %p25 = scmp.ge.s32.totalorder %s24, 1
    %s26 = scalar_select %p25, 0, %s24
    %s27 = sadd.s32 1, %s18
    %s28 = scalar_select %p25, %s27, %s18
    %p29 = scmp.ge.s32.totalorder %s28, 2
    %s30 = scalar_select %p29, 0, %s28
    %s31 = ssub.s32 %s18, %s30
    %s32 = ssub.s32 %s19, %s26
    %s33 = sor.u32 %s31, %s32
    %p34 = scmp.eq.s32.totalorder %s33, 0
    %s36 = sadd.s32 %s35, 1
    %s37 = scalar_select %p34, %s35, %s36
    %p40 = pneg %p34
    %p41 = scmp.eq.s32.totalorder %s11, 1
    %p42 = por %p40, %p41
    %p43 = scmp.ne.s32.totalorder %s35, %s38
    %p44 = scmp.eq.s32.totalorder %s11, 0
    %p45 = por %p43, %p44
    %p46 = scmp.ne.s32.totalorder %s35, %s38
    %p47 = scmp.eq.s32.totalorder %s16, 1
    %p48 = por %p46, %p47
    %p49 = scmp.ne.s32.totalorder %s38, %s39
    %p50 = scmp.eq.s32.totalorder %s16, 0
    %p51 = por %p49, %p50
    %p52 = scmp.ne.s32.totalorder %s38, %s39
    %p53 = scmp.eq.s32.totalorder %s17, 1
    %p54 = por %p52, %p53
    %p56 = scmp.ne.s32.totalorder %s39, %s55
    %p57 = scmp.eq.s32.totalorder %s17, 0
    %p58 = por %p56, %p57
    %s59 = ssub.s32 %s18, %s30
    %p60 = scmp.eq.s32.totalorder %s59, 0
    %s62 = sadd.s32 %s61, 1
    %s63 = scalar_select %p60, %s61, %s62
    %p66 = pneg %p60
    %p67 = scmp.eq.s32.totalorder %s11, 1
    %p68 = por %p66, %p67
    %p69 = scmp.ne.s32.totalorder %s61, %s64
    %p70 = scmp.eq.s32.totalorder %s11, 0
    %p71 = por %p69, %p70
    %p72 = scmp.ne.s32.totalorder %s61, %s64
    %p73 = scmp.eq.s32.totalorder %s16, 1
    %p74 = por %p72, %p73
    %p75 = scmp.ne.s32.totalorder %s64, %s65
    %p76 = scmp.eq.s32.totalorder %s16, 0
    %p77 = por %p75, %p76
    %p78 = scmp.ne.s32.totalorder %s64, %s65
    %p79 = scmp.eq.s32.totalorder %s17, 1
    %p80 = por %p78, %p79
    %p82 = scmp.ne.s32.totalorder %s65, %s81
    %p83 = scmp.eq.s32.totalorder %s17, 0
    %p84 = por %p82, %p83
    %s86 = sadd.s32 %s85, 1
    %p89 = scmp.eq.s32.totalorder %s11, 1
    %p90 = scmp.ne.s32.totalorder %s85, %s87
    %p91 = scmp.eq.s32.totalorder %s11, 0
    %p92 = por %p90, %p91
    %p93 = scmp.ne.s32.totalorder %s85, %s87
    %p94 = scmp.eq.s32.totalorder %s16, 1
    %p95 = por %p93, %p94
    %p96 = scmp.ne.s32.totalorder %s87, %s88
    %p97 = scmp.eq.s32.totalorder %s16, 0
    %p98 = por %p96, %p97
    %p99 = scmp.ne.s32.totalorder %s87, %s88
    %p100 = scmp.eq.s32.totalorder %s17, 1
    %p101 = por %p99, %p100
    %p103 = scmp.ne.s32.totalorder %s88, %s102
    %p104 = scmp.eq.s32.totalorder %s17, 0
    %p105 = por %p103, %p104
    %s107 = sadd.s32 %s106, 1
    %p110 = scmp.eq.s32.totalorder %s11, 1
    %p111 = scmp.ne.s32.totalorder %s106, %s108
    %p112 = scmp.eq.s32.totalorder %s11, 0
    %p113 = por %p111, %p112
    %p114 = scmp.ne.s32.totalorder %s106, %s108
    %p115 = scmp.eq.s32.totalorder %s16, 1
    %p116 = por %p114, %p115
    %p117 = scmp.ne.s32.totalorder %s108, %s109
    %p118 = scmp.eq.s32.totalorder %s16, 0
    %p119 = por %p117, %p118
    %p120 = scmp.ne.s32.totalorder %s108, %s109
    %p121 = scmp.eq.s32.totalorder %s17, 1
    %p122 = por %p120, %p121
    %p124 = scmp.ne.s32.totalorder %s109, %s123
    %p125 = scmp.eq.s32.totalorder %s17, 0
    %p126 = por %p124, %p125
    %s127 = ssub.s32 %s18, %s30
    %s128 = ssub.s32 %s19, %s26
    %s129 = sor.u32 %s127, %s128
    %p130 = scmp.eq.s32.totalorder %s129, 0
    %s132 = sadd.s32 %s131, 1
    %s133 = scalar_select %p130, %s131, %s132
    %p136 = pneg %p130
    %p137 = scmp.eq.s32.totalorder %s11, 1
    %p138 = por %p136, %p137
    %p139 = scmp.ne.s32.totalorder %s131, %s134
    %p140 = scmp.eq.s32.totalorder %s11, 0
    %p141 = por %p139, %p140
    %p142 = scmp.ne.s32.totalorder %s131, %s134
    %p143 = scmp.eq.s32.totalorder %s16, 1
    %p144 = por %p142, %p143
    %p145 = scmp.ne.s32.totalorder %s134, %s135
    %p146 = scmp.eq.s32.totalorder %s16, 0
    %p147 = por %p145, %p146
    %p148 = scmp.ne.s32.totalorder %s134, %s135
    %p149 = scmp.eq.s32.totalorder %s17, 1
    %p150 = por %p148, %p149
    %p152 = scmp.ne.s32.totalorder %s135, %s151
    %p153 = scmp.eq.s32.totalorder %s17, 0
    %p154 = por %p152, %p153
    %s155 = ssub.s32 %s18, %s30
    %s156 = ssub.s32 %s19, %s26
    %s157 = sor.u32 %s155, %s156
    %p158 = scmp.eq.s32.totalorder %s157, 0
    %s160 = sadd.s32 %s159, 1
    %s161 = scalar_select %p158, %s159, %s160
    %p164 = pneg %p158
    %p165 = scmp.eq.s32.totalorder %s11, 1
    %p166 = por %p164, %p165
    %p167 = scmp.ne.s32.totalorder %s159, %s162
    %p168 = scmp.eq.s32.totalorder %s11, 0
    %p169 = por %p167, %p168
    %p170 = scmp.ne.s32.totalorder %s159, %s162
    %p171 = scmp.eq.s32.totalorder %s16, 1
    %p172 = por %p170, %p171
    %p173 = scmp.ne.s32.totalorder %s162, %s163
    %p174 = scmp.eq.s32.totalorder %s16, 0
    %p175 = por %p173, %p174
    %p176 = scmp.ne.s32.totalorder %s162, %s163
    %p177 = scmp.eq.s32.totalorder %s17, 1
    %p178 = por %p176, %p177
    %p180 = scmp.ne.s32.totalorder %s163, %s179
    %p181 = scmp.eq.s32.totalorder %s17, 0
    %p182 = por %p180, %p181
    %p183 = scmp.le.s32.totalorder 1, %s11
    %p184 = scmp.lt.s32.totalorder %s11, 3
    %p185 = pnand %p183, %p184
    %p186 = pneg %p185
    // Predicated region
    $region9: #{regstage_forward.15} parent=5 // pred_check
      _
    $region10: #{regstage_forward.15} parent=5 // pred_check_branch
      %188 = sbr.rel (%p185) target = $region12
    $region11: #{regstage_forward.15} parent=5 // pred_region
      %s189 = ssub.s32 %s11, 1
      // Predicated region
      $region13: #{regstage_forward.15} parent=11 // pred_check
        %p190 = pneg %p98
      $region14: #{regstage_forward.15} parent=11 // pred_check_branch
        %192 = sbr.rel (%p190) target = $region16
      $region15: #{regstage_forward.15} parent=11 // pred_region
        _
      $region16: #{regstage_forward.15} parent=11 // pred_fallthru
        _
      // Predicated region
      $region17: #{regstage_forward.15} parent=11 // pred_check
        %p193 = pneg %p119
      $region18: #{regstage_forward.15} parent=11 // pred_check_branch
        %195 = sbr.rel (%p193) target = $region20
      $region19: #{regstage_forward.15} parent=11 // pred_region
        _
      $region20: #{regstage_forward.15} parent=11 // pred_fallthru
        _
    $region12: #{regstage_forward.15} parent=5 // pred_fallthru
      _
    %p196 = scmp.lt.s32.totalorder %s11, 2
    // Predicated region
    $region21: #{regstage_forward.15} parent=5 // pred_check
      %p197 = pneg %p196
    $region22: #{regstage_forward.15} parent=5 // pred_check_branch
      %199 = sbr.rel (%p197) target = $region24
    $region23: #{regstage_forward.15} parent=5 // pred_region
      // Predicated region
      $region25: #{regstage_forward.15} parent=23 // pred_check
        %p200 = pneg %p45
      $region26: #{regstage_forward.15} parent=23 // pred_check_branch
        %202 = sbr.rel (%p200) target = $region28
      $region27: #{regstage_forward.15} parent=23 // pred_region
        %s203 = smul.u32 8, %s19
        %p204 = scmp.lt.s32.totalorder %s18, 1
        %s205 = scalar_select %p204, %s18, 1
        %p206 = scmp.lt.s32.totalorder %s203, 7
        %s207 = scalar_select %p206, %s203, 7
        %s208 = smul.addr %s205, 8
        %s209 = sadd.s32 %s207, %s208
        %s210 = smul.addr %s209, 4
        %s211 = scalar_lea.vmem %s0, %s210
        %s212 = smul.u32 8, %s19
      $region28: #{regstage_forward.15} parent=23 // pred_fallthru
        _
      // Predicated region
      $region29: #{regstage_forward.15} parent=23 // pred_check
        %p213 = pneg %p71
      $region30: #{regstage_forward.15} parent=23 // pred_check_branch
        %215 = sbr.rel (%p213) target = $region32
      $region31: #{regstage_forward.15} parent=23 // pred_region
        %p216 = scmp.lt.s32.totalorder %s18, 1
        %s217 = scalar_select %p216, %s18, 1
        %s218 = scalar_lea.vmem %s1, %s217
      $region32: #{regstage_forward.15} parent=23 // pred_fallthru
        _
      // Predicated region
      $region33: #{regstage_forward.15} parent=23 // pred_check
        %p219 = pneg %p141
      $region34: #{regstage_forward.15} parent=23 // pred_check_branch
        %221 = sbr.rel (%p219) target = $region36
      $region35: #{regstage_forward.15} parent=23 // pred_region
        %s222 = smul.u32 8, %s19
        %p223 = scmp.lt.s32.totalorder %s18, 1
        %s224 = scalar_select %p223, %s18, 1
        %p225 = scmp.lt.s32.totalorder %s222, 7
        %s226 = scalar_select %p225, %s222, 7
        %s227 = smul.addr %s224, 8
        %s228 = sadd.s32 %s226, %s227
        %s229 = smul.addr %s228, 4
        %s230 = scalar_lea.vmem %s4, %s229
        %s231 = smul.u32 8, %s19
      $region36: #{regstage_forward.15} parent=23 // pred_fallthru
        _
    $region24: #{regstage_forward.15} parent=5 // pred_fallthru
      _
    %p232 = scmp.le.s32.totalorder 1, %s11
    %p233 = scmp.lt.s32.totalorder %s11, 3
    %p234 = pnand %p232, %p233
    %p235 = pneg %p234
    // Predicated region
    $region37: #{regstage_forward.15} parent=5 // pred_check
      _
    $region38: #{regstage_forward.15} parent=5 // pred_check_branch
      %237 = sbr.rel (%p234) target = $region40
    $region39: #{regstage_forward.15} parent=5 // pred_region
      %s238 = ssub.s32 %s11, 1
      %s239 = smul.u32 8, %s21
      %p240 = scmp.lt.s32.totalorder %s20, 1
      %s241 = scalar_select %p240, %s20, 1
      %p242 = scmp.lt.s32.totalorder %s239, 7
      %s243 = scalar_select %p242, %s239, 7
      %s244 = smul.addr %s241, 8
      %s245 = sadd.s32 %s243, %s244
      %s246 = smul.addr %s245, 4
      %s247 = scalar_lea.vmem %s0, %s246
      %p248 = pneg %p51
      %p249 = pneg %p48
      %p250 = scmp.lt.s32.totalorder %s20, 1
      %s251 = scalar_select %p250, %s20, 1
      %s252 = scalar_lea.vmem %s1, %s251
      %p253 = pneg %p77
      %p254 = pneg %p74
      %p255 = pneg %p98
      %p256 = pneg %p95
      %p257 = pneg %p119
      %p258 = pneg %p116
      %s259 = smul.u32 8, %s21
      %p260 = scmp.lt.s32.totalorder %s20, 1
      %s261 = scalar_select %p260, %s20, 1
      %p262 = scmp.lt.s32.totalorder %s259, 7
      %s263 = scalar_select %p262, %s259, 7
      %s264 = smul.addr %s261, 8
      %s265 = sadd.s32 %s263, %s264
      %s266 = smul.addr %s265, 4
      %s267 = scalar_lea.vmem %s4, %s266
      %p268 = pneg %p147
      %p269 = pneg %p144
      %p270 = pneg %p175
      %p271 = pneg %p172
      %s272 = smul.u32 8, %s21
      %p273 = scmp.lt.s32.totalorder %s20, 1
      %s274 = scalar_select %p273, %s20, 1
      %p275 = scmp.lt.s32.totalorder %s272, 7
      %s276 = scalar_select %p275, %s272, 7
      %s277 = smul.addr %s274, 8
      %s278 = sadd.s32 %s276, %s277
      %s279 = smul.addr %s278, 4
      %s280 = scalar_lea.vmem %s5, %s279
      %s281 = smul.u32 8, %s21
      %p282 = scmp.lt.s32.totalorder %s20, 1
      %s283 = scalar_select %p282, %s20, 1
      %p284 = scmp.lt.s32.totalorder %s281, 7
      %s285 = scalar_select %p284, %s281, 7
      %s286 = smul.addr %s283, 8
      %s287 = sadd.s32 %s285, %s286
      %s288 = smul.addr %s287, 4
      %s289 = scalar_lea.vmem %s0, %s288
      %s290 = smul.u32 8, %s21
      %p291 = scmp.lt.s32.totalorder %s20, 1
      %s292 = scalar_select %p291, %s20, 1
      %s293 = scalar_lea.vmem %s1, %s292
      %s294 = smul.u32 8, %s21
      %p295 = scmp.lt.s32.totalorder %s20, 1
      %s296 = scalar_select %p295, %s20, 1
      %p297 = scmp.lt.s32.totalorder %s294, 7
      %s298 = scalar_select %p297, %s294, 7
      %s299 = smul.addr %s296, 8
      %s300 = sadd.s32 %s298, %s299
      %s301 = smul.addr %s300, 4
      %s302 = scalar_lea.vmem %s4, %s301
      %s303 = smul.u32 8, %s21
      %s304 = smul.u32 8, %s21
      %p305 = scmp.lt.s32.totalorder %s20, 1
      %s306 = scalar_select %p305, %s20, 1
      %p307 = scmp.lt.s32.totalorder %s304, 7
      %s308 = scalar_select %p307, %s304, 7
      %s309 = smul.addr %s306, 8
      %s310 = sadd.s32 %s308, %s309
      %s311 = smul.addr %s310, 4
      %s312 = scalar_lea.vmem %s5, %s311
      %s313 = smul.u32 8, %s21
      %v315 = vld [vmem:[%s289] sm:$0xf]
      %v316 = vld [vmem:[%s289 + $0x4] sm:$0xf]
      %v317 = vld [vmem:[%s289 + $0x8] sm:$0xf]
      %v318 = vld [vmem:[%s289 + $0xc] sm:$0xf]
      %v319 = vld [vmem:[%s289 + $0x10] sm:$0xf]
      %v320 = vld [vmem:[%s289 + $0x14] sm:$0xf]
      %v321 = vld [vmem:[%s289 + $0x18] sm:$0xf]
      %v322 = vld [vmem:[%s289 + $0x1c] sm:$0xf]
      %v323 = vunpack.c.l.bf16 %v315
      %v324 = vunpack.c.l.bf16 %v316
      %v325 = vunpack.c.l.bf16 %v317
      %v326 = vunpack.c.l.bf16 %v318
      %v327 = vunpack.c.l.bf16 %v319
      %v328 = vunpack.c.l.bf16 %v320
      %v329 = vunpack.c.l.bf16 %v321
      %v330 = vunpack.c.l.bf16 %v322
      %v331 = vld [vmem:[%s293] sm:$0x1]
      %v333 = vperm.slane %v331, 0
      %v335 = vmul.f32 %v323, %v333
      %v336 = vmul.f32 %v324, %v333
      %v337 = vmul.f32 %v325, %v333
      %v338 = vmul.f32 %v326, %v333
      %v339 = vmul.f32 %v327, %v333
      %v340 = vmul.f32 %v328, %v333
      %v341 = vmul.f32 %v329, %v333
      %v342 = vmul.f32 %v330, %v333
      %v343 = vpack.c.bf16 %v336, %v335
      %v344 = vpack.c.bf16 %v338, %v337
      %v345 = vpack.c.bf16 %v340, %v339
      %v346 = vpack.c.bf16 %v342, %v341
      %v347 = vld [vmem:[%s2] sm:$0xf]
      %v348 = vld [vmem:[%s2 + $0x4] sm:$0xf]
      %v349 = vld [vmem:[%s3] sm:$0x1]
      %v351 = vperm.slane %v349, 0
      %v355 = vunpack.c.l.b16 %v347
      %v356 = vunpack.c.l.b16 %v348
      %v357 = vpack.c.b16 %v356, %v355
      %vm359 = vcmask 130048
      %v361 = vsel %vm359, %v343, 0
      %v364 = vsel %vm359, %v344, 0
      %v367 = vsel %vm359, %v345, 0
      %v370 = vsel %vm359, %v346, 0
      %372 = vmatpush.bf16.msra.mxu0 0
      %373 = vmatpush.bf16.msra.mxu0 0
      %374 = vmatpush.bf16.msra.mxu0 0
      %375 = vmatpush.bf16.msra.mxu0 0
      %376 = vmatpush.bf16.msra.mxu0 0
      %377 = vmatpush.bf16.msra.mxu0 0
      %378 = vmatpush.bf16.msra.mxu0 0
      %379 = vmatpush.bf16.msra.mxu0 %v357
      %380 = vmatmul.bf16.gmra.mxu0 %v361
      %v381 = vpop.f32.mrf.mxu0
      %v382 = vadd.f32 %v351, %v381
      %v383 = vpop.f32.mrf.mxu0
      %v384 = vadd.f32 %v351, %v383
      %385 = vmatmul.bf16.gmra.mxu0 %v364
      %v386 = vpop.f32.mrf.mxu0
      %v387 = vadd.f32 %v351, %v386
      %v388 = vpop.f32.mrf.mxu0
      %v389 = vadd.f32 %v351, %v388
      %390 = vmatmul.bf16.gmra.mxu0 %v367
      %v391 = vpop.f32.mrf.mxu0
      %v392 = vadd.f32 %v351, %v391
      %v393 = vpop.f32.mrf.mxu0
      %v394 = vadd.f32 %v351, %v393
      %395 = vmatmul.bf16.gmra.mxu0 %v370
      %v396 = vpop.f32.mrf.mxu0
      %v397 = vadd.f32 %v351, %v396
      %v398 = vpop.f32.mrf.mxu0
      %v399 = vadd.f32 %v351, %v398
      %400 = vdwg.mxu0
      %v401 = vld [vmem:[%s302] sm:$0xf]
      %v402 = vld [vmem:[%s302 + $0x4] sm:$0xf]
      %v403 = vld [vmem:[%s302 + $0x8] sm:$0xf]
      %v404 = vld [vmem:[%s302 + $0xc] sm:$0xf]
      %v405 = vld [vmem:[%s302 + $0x10] sm:$0xf]
      %v406 = vld [vmem:[%s302 + $0x14] sm:$0xf]
      %v407 = vld [vmem:[%s302 + $0x18] sm:$0xf]
      %v408 = vld [vmem:[%s302 + $0x1c] sm:$0xf]
      %v409 = vunpack.c.l.bf16 %v401
      %v410 = vunpack.c.l.bf16 %v402
      %v411 = vunpack.c.l.bf16 %v403
      %v412 = vunpack.c.l.bf16 %v404
      %v413 = vunpack.c.l.bf16 %v405
      %v414 = vunpack.c.l.bf16 %v406
      %v415 = vunpack.c.l.bf16 %v407
      %v416 = vunpack.c.l.bf16 %v408
      %v417 = vadd.f32 %v382, %v409
      %v418 = vadd.f32 %v384, %v410
      %v419 = vadd.f32 %v387, %v411
      %v420 = vadd.f32 %v389, %v412
      %v421 = vadd.f32 %v392, %v413
      %v422 = vadd.f32 %v394, %v414
      %v423 = vadd.f32 %v397, %v415
      %v424 = vadd.f32 %v399, %v416
      %v425 = vmax.f32 %v417, 0.0
      %v426 = vmax.f32 %v418, 0.0
      %v427 = vmax.f32 %v419, 0.0
      %v428 = vmax.f32 %v420, 0.0
      %v429 = vmax.f32 %v421, 0.0
      %v430 = vmax.f32 %v422, 0.0
      %v431 = vmax.f32 %v423, 0.0
      %v432 = vmax.f32 %v424, 0.0
      %v433 = vpack.c.bf16 %v425, %v425
      %v434 = vpack.c.bf16 %v426, %v426
      %v435 = vpack.c.bf16 %v427, %v427
      %v436 = vpack.c.bf16 %v428, %v428
      %v437 = vpack.c.bf16 %v429, %v429
      %v438 = vpack.c.bf16 %v430, %v430
      %v439 = vpack.c.bf16 %v431, %v431
      %v440 = vpack.c.bf16 %v432, %v432
      %vm441 = vcmask 125952
      %442 = vst.msk [vmem:[%s312] sm:$0xf] %vm441, %v433
      %443 = vst.msk [vmem:[%s312 + $0x4] sm:$0xf] %vm441, %v434
      %444 = vst.msk [vmem:[%s312 + $0x8] sm:$0xf] %vm441, %v435
      %445 = vst.msk [vmem:[%s312 + $0xc] sm:$0xf] %vm441, %v436
      %446 = vst.msk [vmem:[%s312 + $0x10] sm:$0xf] %vm441, %v437
      %447 = vst.msk [vmem:[%s312 + $0x14] sm:$0xf] %vm441, %v438
      %448 = vst.msk [vmem:[%s312 + $0x18] sm:$0xf] %vm441, %v439
      %449 = vst.msk [vmem:[%s312 + $0x1c] sm:$0xf] %vm441, %v440
      %s450 = smul.u32 8, %s21
      %p451 = scmp.lt.s32.totalorder %s20, 1
      %s452 = scalar_select %p451, %s20, 1
      %p453 = scmp.lt.s32.totalorder %s450, 7
      %s454 = scalar_select %p453, %s450, 7
      %s455 = smul.addr %s452, 8
      %s456 = sadd.s32 %s454, %s455
      %s457 = smul.addr %s456, 4
      %s458 = scalar_lea.vmem %s5, %s457
      // Predicated region
      $region41: #{regstage_forward.15} parent=39 // pred_check
        %p459 = pneg %p172
      $region42: #{regstage_forward.15} parent=39 // pred_check_branch
        %461 = sbr.rel (%p459) target = $region44
      $region43: #{regstage_forward.15} parent=39 // pred_region
        %s462 = smul.u32 8, %s21
      $region44: #{regstage_forward.15} parent=39 // pred_fallthru
        _
    $region40: #{regstage_forward.15} parent=5 // pred_fallthru
      _
    %p463 = scmp.le.s32.totalorder 2, %s11
    // Predicated region
    $region45: #{regstage_forward.15} parent=5 // pred_check
      %p464 = pneg %p463
    $region46: #{regstage_forward.15} parent=5 // pred_check_branch
      %466 = sbr.rel (%p464) target = $region48
    $region47: #{regstage_forward.15} parent=5 // pred_region
      %s467 = ssub.s32 %s11, 2
      // Predicated region
      $region49: #{regstage_forward.15} parent=47 // pred_check
        %p468 = pneg %p178
      $region50: #{regstage_forward.15} parent=47 // pred_check_branch
        %470 = sbr.rel (%p468) target = $region52
      $region51: #{regstage_forward.15} parent=47 // pred_region
        %s471 = smul.u32 8, %s23
        %p472 = scmp.lt.s32.totalorder %s22, 1
        %s473 = scalar_select %p472, %s22, 1
        %p474 = scmp.lt.s32.totalorder %s471, 7
        %s475 = scalar_select %p474, %s471, 7
        %s476 = smul.addr %s473, 8
        %s477 = sadd.s32 %s475, %s476
        %s478 = smul.addr %s477, 4
        %s479 = scalar_lea.vmem %s5, %s478
      $region52: #{regstage_forward.15} parent=47 // pred_fallthru
        _
    $region48: #{regstage_forward.15} parent=5 // pred_fallthru
      _
  $region6: #{regstage_forward.15} parent=0 // loop_footer
    %s15 = sadd.s32 1, %s11
  $region7: #{regstage_forward.15} parent=0 // loop_footer_branch
    %10 = sbr.rel target = $region3
  $region8: #{regstage_forward.15} parent=0 // loop_exit
    _

// kernel: regstage_forward.13
$region0: #{regstage_forward.13}
  #allocation0 [shape = 'u32[]', space=smem, size = 0x4, offset = 0x4, fixed_abs, tag = 'smem constant byte address 0x4 - core index']
  #allocation1 [shape = 'u32[72,128]{1,0:T(1,128)}', space=vmem, size = 0x9000, scoped, tag = 'internal scratch']
  %s0 = inlined_call_operand.vmem [shape: bf16[2,10,10,16], index: 0, kind: input, shape index: {}]
  %s1 = inlined_call_operand.vmem [shape: f32[3,3,16], index: 1, kind: input, shape index: {}]
  %s2 = inlined_call_operand.vmem [shape: f32[1,1,16], index: 2, kind: input, shape index: {}]
  %s3 = inlined_call_operand.vmem [shape: bf16[2,8,8,16], index: 3, kind: output, shape index: {0}]
  %s4 = inlined_call_operand.vmem [shape: f32[2,1,16], index: 4, kind: output, shape index: {1}]
  %5 = xla_tuple %s3, %s4
  %s6 = sld [smem:[#allocation0]]
  $region61: #{regstage_forward.13} parent=0
    _
  %s8 = ssub.s32 1, %s6
  %s9 = scalar_select 0, %s8, %s6
  loop: start=0, step=1, limit=4
  $region2: #{regstage_forward.13} parent=0 // loop_pre_header
    _
  $region3: #{regstage_forward.13} parent=0 // loop_header
    %s11 = sphi 0, %s15
    %p12 = scmp.ge.s32.totalorder %s11, 4
    %s18 = sphi 0, %s30
    %s19 = sphi 0, %s26
    %s20 = sphi 0, %s18
    %s21 = sphi 0, %s19
    %s22 = sphi 0, %s20
    %s23 = sphi 0, %s21
    %s35 = sphi 0, %s37
    %s38 = sphi 0, %s35
    %s39 = sphi 0, %s38
    %s55 = sphi 0, %s39
    %s59 = sphi 0, %s59
    %s61 = sphi 0, %s59
    %s62 = sphi 0, %s61
    %s76 = sphi 0, %s62
    %s80 = sphi 0, %s80
    %s82 = sphi 0, %s80
    %s83 = sphi 0, %s82
    %s97 = sphi 0, %s83
    %s105 = sphi 0, %s107
    %s108 = sphi 0, %s105
    %s109 = sphi 0, %s108
    %s125 = sphi 0, %s109
    %s131 = sphi 0, %s133
    %s134 = sphi 0, %s131
    %s135 = sphi 0, %s134
    %s151 = sphi 0, %s135
  $region4: #{regstage_forward.13} parent=0 // loop_header_branch
    %14 = sbr.rel (%p12) target = $region8
  $region5: #{regstage_forward.13} parent=0 // loop_body
    %s16 = ssub.s32 %s11, 1
    %s17 = ssub.s32 %s11, 2
    %s24 = sadd.s32 1, %s19
    %p25 = scmp.ge.s32.totalorder %s24, 1
    %s26 = scalar_select %p25, 0, %s24
    %s27 = sadd.s32 1, %s18
    %s28 = scalar_select %p25, %s27, %s18
    %p29 = scmp.ge.s32.totalorder %s28, 2
    %s30 = scalar_select %p29, 0, %s28
    %s31 = sadd.s32 %s18, %s19
    %s32 = sadd.s32 %s30, %s26
    %s33 = ssub.s32 %s31, %s32
    %p34 = scmp.eq.s32.totalorder %s33, 0
    %s36 = sadd.s32 %s35, 1
    %s37 = scalar_select %p34, %s35, %s36
    %p40 = pneg %p34
    %p41 = scmp.eq.s32.totalorder %s11, 1
    %p42 = por %p40, %p41
    %p43 = scmp.ne.s32.totalorder %s35, %s38
    %p44 = scmp.eq.s32.totalorder %s11, 0
    %p45 = por %p43, %p44
    %p46 = scmp.ne.s32.totalorder %s35, %s38
    %p47 = scmp.eq.s32.totalorder %s16, 1
    %p48 = por %p46, %p47
    %p49 = scmp.ne.s32.totalorder %s38, %s39
    %p50 = scmp.eq.s32.totalorder %s16, 0
    %p51 = por %p49, %p50
    %p52 = scmp.ne.s32.totalorder %s38, %s39
    %p53 = scmp.eq.s32.totalorder %s17, 1
    %p54 = por %p52, %p53
    %p56 = scmp.ne.s32.totalorder %s39, %s55
    %p57 = scmp.eq.s32.totalorder %s17, 0
    %p58 = por %p56, %p57
    %s60 = sadd.s32 %s59, 1
    %p63 = scmp.eq.s32.totalorder %s11, 1
    %p64 = scmp.ne.s32.totalorder %s59, %s61
    %p65 = scmp.eq.s32.totalorder %s11, 0
    %p66 = por %p64, %p65
    %p67 = scmp.ne.s32.totalorder %s59, %s61
    %p68 = scmp.eq.s32.totalorder %s16, 1
    %p69 = por %p67, %p68
    %p70 = scmp.ne.s32.totalorder %s61, %s62
    %p71 = scmp.eq.s32.totalorder %s16, 0
    %p72 = por %p70, %p71
    %p73 = scmp.ne.s32.totalorder %s61, %s62
    %p74 = scmp.eq.s32.totalorder %s17, 1
    %p75 = por %p73, %p74
    %p77 = scmp.ne.s32.totalorder %s62, %s76
    %p78 = scmp.eq.s32.totalorder %s17, 0
    %p79 = por %p77, %p78
    %s81 = sadd.s32 %s80, 1
    %p84 = scmp.eq.s32.totalorder %s11, 1
    %p85 = scmp.ne.s32.totalorder %s80, %s82
    %p86 = scmp.eq.s32.totalorder %s11, 0
    %p87 = por %p85, %p86
    %p88 = scmp.ne.s32.totalorder %s80, %s82
    %p89 = scmp.eq.s32.totalorder %s16, 1
    %p90 = por %p88, %p89
    %p91 = scmp.ne.s32.totalorder %s82, %s83
    %p92 = scmp.eq.s32.totalorder %s16, 0
    %p93 = por %p91, %p92
    %p94 = scmp.ne.s32.totalorder %s82, %s83
    %p95 = scmp.eq.s32.totalorder %s17, 1
    %p96 = por %p94, %p95
    %p98 = scmp.ne.s32.totalorder %s83, %s97
    %p99 = scmp.eq.s32.totalorder %s17, 0
    %p100 = por %p98, %p99
    %s101 = ssub.s32 %s18, %s30
    %s102 = ssub.s32 %s19, %s26
    %s103 = sor.u32 %s101, %s102
    %p104 = scmp.eq.s32.totalorder %s103, 0
    %s106 = sadd.s32 %s105, 1
    %s107 = scalar_select %p104, %s105, %s106
    %p110 = pneg %p104
    %p111 = scmp.eq.s32.totalorder %s11, 1
    %p112 = por %p110, %p111
    %p113 = scmp.ne.s32.totalorder %s105, %s108
    %p114 = scmp.eq.s32.totalorder %s11, 0
    %p115 = por %p113, %p114
    %p116 = scmp.ne.s32.totalorder %s105, %s108
    %p117 = scmp.eq.s32.totalorder %s16, 1
    %p118 = por %p116, %p117
    %p119 = scmp.ne.s32.totalorder %s108, %s109
    %p120 = scmp.eq.s32.totalorder %s16, 0
    %p121 = por %p119, %p120
    %p122 = scmp.ne.s32.totalorder %s108, %s109
    %p123 = scmp.eq.s32.totalorder %s17, 1
    %p124 = por %p122, %p123
    %p126 = scmp.ne.s32.totalorder %s109, %s125
    %p127 = scmp.eq.s32.totalorder %s17, 0
    %p128 = por %p126, %p127
    %s129 = ssub.s32 %s18, %s30
    %p130 = scmp.eq.s32.totalorder %s129, 0
    %s132 = sadd.s32 %s131, 1
    %s133 = scalar_select %p130, %s131, %s132
    %p136 = pneg %p130
    %p137 = scmp.eq.s32.totalorder %s11, 1
    %p138 = por %p136, %p137
    %p139 = scmp.ne.s32.totalorder %s131, %s134
    %p140 = scmp.eq.s32.totalorder %s11, 0
    %p141 = por %p139, %p140
    %p142 = scmp.ne.s32.totalorder %s131, %s134
    %p143 = scmp.eq.s32.totalorder %s16, 1
    %p144 = por %p142, %p143
    %p145 = scmp.ne.s32.totalorder %s134, %s135
    %p146 = scmp.eq.s32.totalorder %s16, 0
    %p147 = por %p145, %p146
    %p148 = scmp.ne.s32.totalorder %s134, %s135
    %p149 = scmp.eq.s32.totalorder %s17, 1
    %p150 = por %p148, %p149
    %p152 = scmp.ne.s32.totalorder %s135, %s151
    %p153 = scmp.eq.s32.totalorder %s17, 0
    %p154 = por %p152, %p153
    %p155 = scmp.le.s32.totalorder 1, %s11
    %p156 = scmp.lt.s32.totalorder %s11, 3
    %p157 = pnand %p155, %p156
    %p158 = pneg %p157
    // Predicated region
    $region9: #{regstage_forward.13} parent=5 // pred_check
      _
    $region10: #{regstage_forward.13} parent=5 // pred_check_branch
      %160 = sbr.rel (%p157) target = $region12
    $region11: #{regstage_forward.13} parent=5 // pred_region
      %s161 = ssub.s32 %s11, 1
      // Predicated region
      $region13: #{regstage_forward.13} parent=11 // pred_check
        %p162 = pneg %p72
      $region14: #{regstage_forward.13} parent=11 // pred_check_branch
        %164 = sbr.rel (%p162) target = $region16
      $region15: #{regstage_forward.13} parent=11 // pred_region
        _
      $region16: #{regstage_forward.13} parent=11 // pred_fallthru
        _
      // Predicated region
      $region17: #{regstage_forward.13} parent=11 // pred_check
        %p165 = pneg %p93
      $region18: #{regstage_forward.13} parent=11 // pred_check_branch
        %167 = sbr.rel (%p165) target = $region20
      $region19: #{regstage_forward.13} parent=11 // pred_region
        _
      $region20: #{regstage_forward.13} parent=11 // pred_fallthru
        _
    $region12: #{regstage_forward.13} parent=5 // pred_fallthru
      _
    %p168 = scmp.lt.s32.totalorder %s11, 2
    // Predicated region
    $region21: #{regstage_forward.13} parent=5 // pred_check
      %p169 = pneg %p168
    $region22: #{regstage_forward.13} parent=5 // pred_check_branch
      %171 = sbr.rel (%p169) target = $region24
    $region23: #{regstage_forward.13} parent=5 // pred_region
      // Predicated region
      $region25: #{regstage_forward.13} parent=23 // pred_check
        %p172 = pneg %p45
      $region26: #{regstage_forward.13} parent=23 // pred_check_branch
        %174 = sbr.rel (%p172) target = $region28
      $region27: #{regstage_forward.13} parent=23 // pred_region
        %s175 = sadd.s32 %s18, %s19
        %p176 = scmp.lt.s32.totalorder %s175, 1
        %s177 = scalar_select %p176, %s175, 1
        %s178 = smul.addr %s177, 20
        %s179 = smul.addr %s178, 4
        %s180 = scalar_lea.vmem %s0, %s179
        %s181 = sadd.s32 %s18, %s19
      $region28: #{regstage_forward.13} parent=23 // pred_fallthru
        _
    $region24: #{regstage_forward.13} parent=5 // pred_fallthru
      _
    %p182 = scmp.le.s32.totalorder 1, %s11
    %p183 = scmp.lt.s32.totalorder %s11, 3
    %p184 = pnand %p182, %p183
    %p185 = pneg %p184
    // Predicated region
    $region29: #{regstage_forward.13} parent=5 // pred_check
      _
    $region30: #{regstage_forward.13} parent=5 // pred_check_branch
      %187 = sbr.rel (%p184) target = $region32
    $region31: #{regstage_forward.13} parent=5 // pred_region
      %s188 = ssub.s32 %s11, 1
      %s189 = sadd.s32 %s20, %s21
      %p190 = scmp.lt.s32.totalorder %s189, 1
      %s191 = scalar_select %p190, %s189, 1
      %s192 = smul.addr %s191, 20
      %s193 = smul.addr %s192, 4
      %s194 = scalar_lea.vmem %s0, %s193
      %p195 = pneg %p51
      %p196 = pneg %p48
      %p197 = pneg %p72
      %p198 = pneg %p69
      %p199 = pneg %p93
      %p200 = pneg %p90
      %p201 = pneg %p121
      %p202 = pneg %p118
      %s203 = smul.u32 8, %s21
      %p204 = scmp.lt.s32.totalorder %s20, 1
      %s205 = scalar_select %p204, %s20, 1
      %p206 = scmp.lt.s32.totalorder %s203, 7
      %s207 = scalar_select %p206, %s203, 7
      %s208 = smul.addr %s205, 8
      %s209 = sadd.s32 %s207, %s208
      %s210 = smul.addr %s209, 4
      %s211 = scalar_lea.vmem %s3, %s210
      %p212 = pneg %p147
      %p213 = pneg %p144
      %p214 = scmp.lt.s32.totalorder %s20, 1
      %s215 = scalar_select %p214, %s20, 1
      %s216 = scalar_lea.vmem %s4, %s215
      %s217 = sadd.s32 %s20, %s21
      %p218 = scmp.lt.s32.totalorder %s217, 1
      %s219 = scalar_select %p218, %s217, 1
      %s220 = smul.addr %s219, 20
      %s221 = smul.addr %s220, 4
      %s222 = scalar_lea.vmem %s0, %s221
      %s223 = sadd.s32 %s20, %s21
      %s224 = smul.u32 8, %s21
      %p225 = scmp.lt.s32.totalorder %s20, 1
      %s226 = scalar_select %p225, %s20, 1
      %p227 = scmp.lt.s32.totalorder %s224, 7
      %s228 = scalar_select %p227, %s224, 7
      %s229 = smul.addr %s226, 8
      %s230 = sadd.s32 %s228, %s229
      %s231 = smul.addr %s230, 4
      %s232 = scalar_lea.vmem %s3, %s231
      %s233 = smul.u32 8, %s21
      %p234 = scmp.lt.s32.totalorder %s20, 1
      %s235 = scalar_select %p234, %s20, 1
      %s236 = scalar_lea.vmem %s4, %s235
      %v237 = vld [vmem:[%s1] sm:$0x7]
      %v238 = vld [vmem:[%s1 + $0x4] sm:$0x7]
      %v239 = vld [vmem:[%s1 + $0x8] sm:$0x7]
      %v240 = vld [vmem:[%s222] sm:$0xf]
      %v241 = vld [vmem:[%s222 + $0x8] sm:$0xf]
      %v242 = vld [vmem:[%s222 + $0x10] sm:$0xf]
      %v243 = vld [vmem:[%s222 + $0x18] sm:$0xf]
      %v244 = vld [vmem:[%s222 + $0x20] sm:$0xf]
      %v245 = vld [vmem:[%s222 + $0x28] sm:$0xf]
      %v246 = vld [vmem:[%s222 + $0x30] sm:$0xf]
      %v247 = vld [vmem:[%s222 + $0x38] sm:$0xf]
      %v248 = vunpack.c.l.bf16 %v240
      %v249 = vunpack.c.l.bf16 %v241
      %v250 = vunpack.c.l.bf16 %v242
      %v251 = vunpack.c.l.bf16 %v243
      %v252 = vunpack.c.l.bf16 %v244
      %v253 = vunpack.c.l.bf16 %v245
      %v254 = vunpack.c.l.bf16 %v246
      %v255 = vunpack.c.l.bf16 %v247
      %v256 = vperm.slane %v237, 0
      %v257 = vmul.f32 %v248, %v256
      %v258 = vmul.f32 %v249, %v256
      %v259 = vmul.f32 %v250, %v256
      %v260 = vmul.f32 %v251, %v256
      %v261 = vmul.f32 %v252, %v256
      %v262 = vmul.f32 %v253, %v256
      %v263 = vmul.f32 %v254, %v256
      %v264 = vmul.f32 %v255, %v256
      %v265 = vadd.f32 %v257, 0.0
      %v266 = vadd.f32 %v258, 0.0
      %v267 = vadd.f32 %v259, 0.0
      %v268 = vadd.f32 %v260, 0.0
      %v269 = vadd.f32 %v261, 0.0
      %v270 = vadd.f32 %v262, 0.0
      %v271 = vadd.f32 %v263, 0.0
      %v272 = vadd.f32 %v264, 0.0
      %v273 = vld [vmem:[%s222 + $0x4] sm:$0x1]
      %v274 = vld [vmem:[%s222 + $0xc] sm:$0x1]
      %v275 = vld [vmem:[%s222 + $0x14] sm:$0x1]
      %v276 = vld [vmem:[%s222 + $0x1c] sm:$0x1]
      %v277 = vld [vmem:[%s222 + $0x24] sm:$0x1]
      %v278 = vld [vmem:[%s222 + $0x2c] sm:$0x1]
      %v279 = vld [vmem:[%s222 + $0x34] sm:$0x1]
      %v280 = vld [vmem:[%s222 + $0x3c] sm:$0x1]
      %v281 = vunpack.c.l.bf16 %v273
      %v282 = vunpack.c.l.bf16 %v274
      %v283 = vunpack.c.l.bf16 %v275
      %v284 = vunpack.c.l.bf16 %v276
      %v285 = vunpack.c.l.bf16 %v277
      %v286 = vunpack.c.l.bf16 %v278
      %v287 = vunpack.c.l.bf16 %v279
      %v288 = vunpack.c.l.bf16 %v280
      %v289 = vperm.slane %v237, 1
      %v290 = vmul.f32 %v248, %v289
      %v291 = vmul.f32 %v281, %v289
      %v292 = vmul.f32 %v249, %v289
      %v293 = vmul.f32 %v282, %v289
      %v294 = vmul.f32 %v250, %v289
      %v295 = vmul.f32 %v283, %v289
      %v296 = vmul.f32 %v251, %v289
      %v297 = vmul.f32 %v284, %v289
      %v298 = vmul.f32 %v252, %v289
      %v299 = vmul.f32 %v285, %v289
      %v300 = vmul.f32 %v253, %v289
      %v301 = vmul.f32 %v286, %v289
      %v302 = vmul.f32 %v254, %v289
      %v303 = vmul.f32 %v287, %v289
      %v304 = vmul.f32 %v255, %v289
      %v305 = vmul.f32 %v288, %v289
      %vm322 = vcmask 1046528
      %v323 = vrot.slane %v290, 1
      %v324 = vrot.slane %v291, 1
      %v325 = vsel %vm322, %v323, %v324
      %v326 = vrot.slane %v292, 1
      %v327 = vrot.slane %v293, 1
      %v328 = vsel %vm322, %v326, %v327
      %v329 = vrot.slane %v294, 1
      %v330 = vrot.slane %v295, 1
      %v331 = vsel %vm322, %v329, %v330
      %v332 = vrot.slane %v296, 1
      %v333 = vrot.slane %v297, 1
      %v334 = vsel %vm322, %v332, %v333
      %v335 = vrot.slane %v298, 1
      %v336 = vrot.slane %v299, 1
      %v337 = vsel %vm322, %v335, %v336
      %v338 = vrot.slane %v300, 1
      %v339 = vrot.slane %v301, 1
      %v340 = vsel %vm322, %v338, %v339
      %v341 = vrot.slane %v302, 1
      %v342 = vrot.slane %v303, 1
      %v343 = vsel %vm322, %v341, %v342
      %v344 = vrot.slane %v304, 1
      %v345 = vrot.slane %v305, 1
      %v346 = vsel %vm322, %v344, %v345
      %v355 = vadd.f32 %v265, %v325
      %v356 = vadd.f32 %v266, %v328
      %v357 = vadd.f32 %v267, %v331
      %v358 = vadd.f32 %v268, %v334
      %v359 = vadd.f32 %v269, %v337
      %v360 = vadd.f32 %v270, %v340
      %v361 = vadd.f32 %v271, %v343
      %v362 = vadd.f32 %v272, %v346
      %v363 = vld [vmem:[%s222] sm:$0xe]
      %v364 = vld [vmem:[%s222 + $0x8] sm:$0xe]
      %v365 = vld [vmem:[%s222 + $0x10] sm:$0xe]
      %v366 = vld [vmem:[%s222 + $0x18] sm:$0xe]
      %v367 = vld [vmem:[%s222 + $0x20] sm:$0xe]
      %v368 = vld [vmem:[%s222 + $0x28] sm:$0xe]
      %v369 = vld [vmem:[%s222 + $0x30] sm:$0xe]
      %v370 = vld [vmem:[%s222 + $0x38] sm:$0xe]
      %v371 = vunpack.c.l.bf16 %v363
      %v372 = vunpack.c.l.bf16 %v364
      %v373 = vunpack.c.l.bf16 %v365
      %v374 = vunpack.c.l.bf16 %v366
      %v375 = vunpack.c.l.bf16 %v367
      %v376 = vunpack.c.l.bf16 %v368
      %v377 = vunpack.c.l.bf16 %v369
      %v378 = vunpack.c.l.bf16 %v370
      %v379 = vperm.slane %v237, 2
      %v380 = vmul.f32 %v371, %v379
      %v381 = vmul.f32 %v281, %v379
      %v382 = vmul.f32 %v372, %v379
      %v383 = vmul.f32 %v282, %v379
      %v384 = vmul.f32 %v373, %v379
      %v385 = vmul.f32 %v283, %v379
      %v386 = vmul.f32 %v374, %v379
      %v387 = vmul.f32 %v284, %v379
      %v388 = vmul.f32 %v375, %v379
      %v389 = vmul.f32 %v285, %v379
      %v390 = vmul.f32 %v376, %v379
      %v391 = vmul.f32 %v286, %v379
      %v392 = vmul.f32 %v377, %v379
      %v393 = vmul.f32 %v287, %v379
      %v394 = vmul.f32 %v378, %v379
      %v395 = vmul.f32 %v288, %v379
      %vm412 = vcmask 1045504
      %v413 = vrot.slane %v380, 2
      %v414 = vrot.slane %v381, 2
      %v415 = vsel %vm412, %v413, %v414
      %v416 = vrot.slane %v382, 2
      %v417 = vrot.slane %v383, 2
      %v418 = vsel %vm412, %v416, %v417
      %v419 = vrot.slane %v384, 2
      %v420 = vrot.slane %v385, 2
      %v421 = vsel %vm412, %v419, %v420
      %v422 = vrot.slane %v386, 2
      %v423 = vrot.slane %v387, 2
      %v424 = vsel %vm412, %v422, %v423
      %v425 = vrot.slane %v388, 2
      %v426 = vrot.slane %v389, 2
      %v427 = vsel %vm412, %v425, %v426
      %v428 = vrot.slane %v390, 2
      %v429 = vrot.slane %v391, 2
      %v430 = vsel %vm412, %v428, %v429
      %v431 = vrot.slane %v392, 2
      %v432 = vrot.slane %v393, 2
      %v433 = vsel %vm412, %v431, %v432
      %v434 = vrot.slane %v394, 2
      %v435 = vrot.slane %v395, 2
      %v436 = vsel %vm412, %v434, %v435
      %v445 = vadd.f32 %v355, %v415
      %v446 = vadd.f32 %v356, %v418
      %v447 = vadd.f32 %v357, %v421
      %v448 = vadd.f32 %v358, %v424
      %v449 = vadd.f32 %v359, %v427
      %v450 = vadd.f32 %v360, %v430
      %v451 = vadd.f32 %v361, %v433
      %v452 = vadd.f32 %v362, %v436
      %s453 = scalar_lea.vmem %s222, 8
      %v454 = vld [vmem:[%s453] sm:$0xf]
      %v455 = vld [vmem:[%s453 + $0x8] sm:$0xf]
      %v456 = vld [vmem:[%s453 + $0x10] sm:$0xf]
      %v457 = vld [vmem:[%s453 + $0x18] sm:$0xf]
      %v458 = vld [vmem:[%s453 + $0x20] sm:$0xf]
      %v459 = vld [vmem:[%s453 + $0x28] sm:$0xf]
      %v460 = vld [vmem:[%s453 + $0x30] sm:$0xf]
      %v461 = vld [vmem:[%s453 + $0x38] sm:$0xf]
      %v462 = vunpack.c.l.bf16 %v454
      %v463 = vunpack.c.l.bf16 %v455
      %v464 = vunpack.c.l.bf16 %v456
      %v465 = vunpack.c.l.bf16 %v457
      %v466 = vunpack.c.l.bf16 %v458
      %v467 = vunpack.c.l.bf16 %v459
      %v468 = vunpack.c.l.bf16 %v460
      %v469 = vunpack.c.l.bf16 %v461
      %v470 = vperm.slane %v238, 0
      %v471 = vmul.f32 %v462, %v470
      %v472 = vmul.f32 %v463, %v470
      %v473 = vmul.f32 %v464, %v470
      %v474 = vmul.f32 %v465, %v470
      %v475 = vmul.f32 %v466, %v470
      %v476 = vmul.f32 %v467, %v470
      %v477 = vmul.f32 %v468, %v470
      %v478 = vmul.f32 %v469, %v470
      %v479 = vadd.f32 %v445, %v471
      %v480 = vadd.f32 %v446, %v472
      %v481 = vadd.f32 %v447, %v473
      %v482 = vadd.f32 %v448, %v474
      %v483 = vadd.f32 %v449, %v475
      %v484 = vadd.f32 %v450, %v476
      %v485 = vadd.f32 %v451, %v477
      %v486 = vadd.f32 %v452, %v478
      %v487 = vld [vmem:[%s453 + $0x4] sm:$0x1]
      %v488 = vld [vmem:[%s453 + $0xc] sm:$0x1]
      %v489 = vld [vmem:[%s453 + $0x14] sm:$0x1]
      %v490 = vld [vmem:[%s453 + $0x1c] sm:$0x1]
      %v491 = vld [vmem:[%s453 + $0x24] sm:$0x1]
      %v492 = vld [vmem:[%s453 + $0x2c] sm:$0x1]
      %v493 = vld [vmem:[%s453 + $0x34] sm:$0x1]
      %v494 = vld [vmem:[%s453 + $0x3c] sm:$0x1]
      %v495 = vunpack.c.l.bf16 %v487
      %v496 = vunpack.c.l.bf16 %v488
      %v497 = vunpack.c.l.bf16 %v489
      %v498 = vunpack.c.l.bf16 %v490
      %v499 = vunpack.c.l.bf16 %v491
      %v500 = vunpack.c.l.bf16 %v492
      %v501 = vunpack.c.l.bf16 %v493
      %v502 = vunpack.c.l.bf16 %v494
      %v503 = vperm.slane %v238, 1
      %v504 = vmul.f32 %v462, %v503
      %v505 = vmul.f32 %v495, %v503
      %v506 = vmul.f32 %v463, %v503
      %v507 = vmul.f32 %v496, %v503
      %v508 = vmul.f32 %v464, %v503
      %v509 = vmul.f32 %v497, %v503
      %v510 = vmul.f32 %v465, %v503
      %v511 = vmul.f32 %v498, %v503
      %v512 = vmul.f32 %v466, %v503
      %v513 = vmul.f32 %v499, %v503
      %v514 = vmul.f32 %v467, %v503
      %v515 = vmul.f32 %v500, %v503
      %v516 = vmul.f32 %v468, %v503
      %v517 = vmul.f32 %v501, %v503
      %v518 = vmul.f32 %v469, %v503
      %v519 = vmul.f32 %v502, %v503
      %v536 = vrot.slane %v504, 1
      %v537 = vrot.slane %v505, 1
      %v538 = vsel %vm322, %v536, %v537
      %v539 = vrot.slane %v506, 1
      %v540 = vrot.slane %v507, 1
      %v541 = vsel %vm322, %v539, %v540
      %v542 = vrot.slane %v508, 1
      %v543 = vrot.slane %v509, 1
      %v544 = vsel %vm322, %v542, %v543
      %v545 = vrot.slane %v510, 1
      %v546 = vrot.slane %v511, 1
      %v547 = vsel %vm322, %v545, %v546
      %v548 = vrot.slane %v512, 1
      %v549 = vrot.slane %v513, 1
      %v550 = vsel %vm322, %v548, %v549
      %v551 = vrot.slane %v514, 1
      %v552 = vrot.slane %v515, 1
      %v553 = vsel %vm322, %v551, %v552
      %v554 = vrot.slane %v516, 1
      %v555 = vrot.slane %v517, 1
      %v556 = vsel %vm322, %v554, %v555
      %v557 = vrot.slane %v518, 1
      %v558 = vrot.slane %v519, 1
      %v559 = vsel %vm322, %v557, %v558
      %v568 = vadd.f32 %v479, %v538
      %v569 = vadd.f32 %v480, %v541
      %v570 = vadd.f32 %v481, %v544
      %v571 = vadd.f32 %v482, %v547
      %v572 = vadd.f32 %v483, %v550
      %v573 = vadd.f32 %v484, %v553
      %v574 = vadd.f32 %v485, %v556
      %v575 = vadd.f32 %v486, %v559
      %v576 = vld [vmem:[%s453] sm:$0xe]
      %v577 = vld [vmem:[%s453 + $0x8] sm:$0xe]
      %v578 = vld [vmem:[%s453 + $0x10] sm:$0xe]
      %v579 = vld [vmem:[%s453 + $0x18] sm:$0xe]
      %v580 = vld [vmem:[%s453 + $0x20] sm:$0xe]
      %v581 = vld [vmem:[%s453 + $0x28] sm:$0xe]
      %v582 = vld [vmem:[%s453 + $0x30] sm:$0xe]
      %v583 = vld [vmem:[%s453 + $0x38] sm:$0xe]
      %v584 = vunpack.c.l.bf16 %v576
      %v585 = vunpack.c.l.bf16 %v577
      %v586 = vunpack.c.l.bf16 %v578
      %v587 = vunpack.c.l.bf16 %v579
      %v588 = vunpack.c.l.bf16 %v580
      %v589 = vunpack.c.l.bf16 %v581
      %v590 = vunpack.c.l.bf16 %v582
      %v591 = vunpack.c.l.bf16 %v583
      %v592 = vperm.slane %v238, 2
      %v593 = vmul.f32 %v584, %v592
      %v594 = vmul.f32 %v495, %v592
      %v595 = vmul.f32 %v585, %v592
      %v596 = vmul.f32 %v496, %v592
      %v597 = vmul.f32 %v586, %v592
      %v598 = vmul.f32 %v497, %v592
      %v599 = vmul.f32 %v587, %v592
      %v600 = vmul.f32 %v498, %v592
      %v601 = vmul.f32 %v588, %v592
      %v602 = vmul.f32 %v499, %v592
      %v603 = vmul.f32 %v589, %v592
      %v604 = vmul.f32 %v500, %v592
      %v605 = vmul.f32 %v590, %v592
      %v606 = vmul.f32 %v501, %v592
      %v607 = vmul.f32 %v591, %v592
      %v608 = vmul.f32 %v502, %v592
      %v625 = vrot.slane %v593, 2
      %v626 = vrot.slane %v594, 2
      %v627 = vsel %vm412, %v625, %v626
      %v628 = vrot.slane %v595, 2
      %v629 = vrot.slane %v596, 2
      %v630 = vsel %vm412, %v628, %v629
      %v631 = vrot.slane %v597, 2
      %v632 = vrot.slane %v598, 2
      %v633 = vsel %vm412, %v631, %v632
      %v634 = vrot.slane %v599, 2
      %v635 = vrot.slane %v600, 2
      %v636 = vsel %vm412, %v634, %v635
      %v637 = vrot.slane %v601, 2
      %v638 = vrot.slane %v602, 2
      %v639 = vsel %vm412, %v637, %v638
      %v640 = vrot.slane %v603, 2
      %v641 = vrot.slane %v604, 2
      %v642 = vsel %vm412, %v640, %v641
      %v643 = vrot.slane %v605, 2
      %v644 = vrot.slane %v606, 2
      %v645 = vsel %vm412, %v643, %v644
      %v646 = vrot.slane %v607, 2
      %v647 = vrot.slane %v608, 2
      %v648 = vsel %vm412, %v646, %v647
      %v657 = vadd.f32 %v568, %v627
      %v658 = vadd.f32 %v569, %v630
      %v659 = vadd.f32 %v570, %v633
      %v660 = vadd.f32 %v571, %v636
      %v661 = vadd.f32 %v572, %v639
      %v662 = vadd.f32 %v573, %v642
      %v663 = vadd.f32 %v574, %v645
      %v664 = vadd.f32 %v575, %v648
      %s665 = scalar_lea.vmem %s222, 16
      %v666 = vld [vmem:[%s665] sm:$0xf]
      %v667 = vld [vmem:[%s665 + $0x8] sm:$0xf]
      %v668 = vld [vmem:[%s665 + $0x10] sm:$0xf]
      %v669 = vld [vmem:[%s665 + $0x18] sm:$0xf]
      %v670 = vld [vmem:[%s665 + $0x20] sm:$0xf]
      %v671 = vld [vmem:[%s665 + $0x28] sm:$0xf]
      %v672 = vld [vmem:[%s665 + $0x30] sm:$0xf]
      %v673 = vld [vmem:[%s665 + $0x38] sm:$0xf]
      %v674 = vunpack.c.l.bf16 %v666
      %v675 = vunpack.c.l.bf16 %v667
      %v676 = vunpack.c.l.bf16 %v668
      %v677 = vunpack.c.l.bf16 %v669
      %v678 = vunpack.c.l.bf16 %v670
      %v679 = vunpack.c.l.bf16 %v671
      %v680 = vunpack.c.l.bf16 %v672
      %v681 = vunpack.c.l.bf16 %v673
      %v682 = vperm.slane %v239, 0
      %v683 = vmul.f32 %v674, %v682
      %v684 = vmul.f32 %v675, %v682
      %v685 = vmul.f32 %v676, %v682
      %v686 = vmul.f32 %v677, %v682
      %v687 = vmul.f32 %v678, %v682
      %v688 = vmul.f32 %v679, %v682
      %v689 = vmul.f32 %v680, %v682
      %v690 = vmul.f32 %v681, %v682
      %v691 = vadd.f32 %v657, %v683
      %v692 = vadd.f32 %v658, %v684
      %v693 = vadd.f32 %v659, %v685
      %v694 = vadd.f32 %v660, %v686
      %v695 = vadd.f32 %v661, %v687
      %v696 = vadd.f32 %v662, %v688
      %v697 = vadd.f32 %v663, %v689
      %v698 = vadd.f32 %v664, %v690
      %v699 = vld [vmem:[%s665 + $0x4] sm:$0x1]
      %v700 = vld [vmem:[%s665 + $0xc] sm:$0x1]
      %v701 = vld [vmem:[%s665 + $0x14] sm:$0x1]
      %v702 = vld [vmem:[%s665 + $0x1c] sm:$0x1]
      %v703 = vld [vmem:[%s665 + $0x24] sm:$0x1]
      %v704 = vld [vmem:[%s665 + $0x2c] sm:$0x1]
      %v705 = vld [vmem:[%s665 + $0x34] sm:$0x1]
      %v706 = vld [vmem:[%s665 + $0x3c] sm:$0x1]
      %v707 = vunpack.c.l.bf16 %v699
      %v708 = vunpack.c.l.bf16 %v700
      %v709 = vunpack.c.l.bf16 %v701
      %v710 = vunpack.c.l.bf16 %v702
      %v711 = vunpack.c.l.bf16 %v703
      %v712 = vunpack.c.l.bf16 %v704
      %v713 = vunpack.c.l.bf16 %v705
      %v714 = vunpack.c.l.bf16 %v706
      %v715 = vperm.slane %v239, 1
      %v716 = vmul.f32 %v674, %v715
      %v717 = vmul.f32 %v707, %v715
      %v718 = vmul.f32 %v675, %v715
      %v719 = vmul.f32 %v708, %v715
      %v720 = vmul.f32 %v676, %v715
      %v721 = vmul.f32 %v709, %v715
      %v722 = vmul.f32 %v677, %v715
      %v723 = vmul.f32 %v710, %v715
      %v724 = vmul.f32 %v678, %v715
      %v725 = vmul.f32 %v711, %v715
      %v726 = vmul.f32 %v679, %v715
      %v727 = vmul.f32 %v712, %v715
      %v728 = vmul.f32 %v680, %v715
      %v729 = vmul.f32 %v713, %v715
      %v730 = vmul.f32 %v681, %v715
      %v731 = vmul.f32 %v714, %v715
      %v748 = vrot.slane %v716, 1
      %v749 = vrot.slane %v717, 1
      %v750 = vsel %vm322, %v748, %v749
      %v751 = vrot.slane %v718, 1
      %v752 = vrot.slane %v719, 1
      %v753 = vsel %vm322, %v751, %v752
      %v754 = vrot.slane %v720, 1
      %v755 = vrot.slane %v721, 1
      %v756 = vsel %vm322, %v754, %v755
      %v757 = vrot.slane %v722, 1
      %v758 = vrot.slane %v723, 1
      %v759 = vsel %vm322, %v757, %v758
      %v760 = vrot.slane %v724, 1
      %v761 = vrot.slane %v725, 1
      %v762 = vsel %vm322, %v760, %v761
      %v763 = vrot.slane %v726, 1
      %v764 = vrot.slane %v727, 1
      %v765 = vsel %vm322, %v763, %v764
      %v766 = vrot.slane %v728, 1
      %v767 = vrot.slane %v729, 1
      %v768 = vsel %vm322, %v766, %v767
      %v769 = vrot.slane %v730, 1
      %v770 = vrot.slane %v731, 1
      %v771 = vsel %vm322, %v769, %v770
      %v780 = vadd.f32 %v691, %v750
      %v781 = vadd.f32 %v692, %v753
      %v782 = vadd.f32 %v693, %v756
      %v783 = vadd.f32 %v694, %v759
      %v784 = vadd.f32 %v695, %v762
      %v785 = vadd.f32 %v696, %v765
      %v786 = vadd.f32 %v697, %v768
      %v787 = vadd.f32 %v698, %v771
      %v788 = vld [vmem:[%s665] sm:$0xe]
      %v789 = vld [vmem:[%s665 + $0x8] sm:$0xe]
      %v790 = vld [vmem:[%s665 + $0x10] sm:$0xe]
      %v791 = vld [vmem:[%s665 + $0x18] sm:$0xe]
      %v792 = vld [vmem:[%s665 + $0x20] sm:$0xe]
      %v793 = vld [vmem:[%s665 + $0x28] sm:$0xe]
      %v794 = vld [vmem:[%s665 + $0x30] sm:$0xe]
      %v795 = vld [vmem:[%s665 + $0x38] sm:$0xe]
      %v796 = vunpack.c.l.bf16 %v788
      %v797 = vunpack.c.l.bf16 %v789
      %v798 = vunpack.c.l.bf16 %v790
      %v799 = vunpack.c.l.bf16 %v791
      %v800 = vunpack.c.l.bf16 %v792
      %v801 = vunpack.c.l.bf16 %v793
      %v802 = vunpack.c.l.bf16 %v794
      %v803 = vunpack.c.l.bf16 %v795
      %v804 = vperm.slane %v239, 2
      %v805 = vmul.f32 %v796, %v804
      %v806 = vmul.f32 %v707, %v804
      %v807 = vmul.f32 %v797, %v804
      %v808 = vmul.f32 %v708, %v804
      %v809 = vmul.f32 %v798, %v804
      %v810 = vmul.f32 %v709, %v804
      %v811 = vmul.f32 %v799, %v804
      %v812 = vmul.f32 %v710, %v804
      %v813 = vmul.f32 %v800, %v804
      %v814 = vmul.f32 %v711, %v804
      %v815 = vmul.f32 %v801, %v804
      %v816 = vmul.f32 %v712, %v804
      %v817 = vmul.f32 %v802, %v804
      %v818 = vmul.f32 %v713, %v804
      %v819 = vmul.f32 %v803, %v804
      %v820 = vmul.f32 %v714, %v804
      %v837 = vrot.slane %v805, 2
      %v838 = vrot.slane %v806, 2
      %v839 = vsel %vm412, %v837, %v838
      %v840 = vrot.slane %v807, 2
      %v841 = vrot.slane %v808, 2
      %v842 = vsel %vm412, %v840, %v841
      %v843 = vrot.slane %v809, 2
      %v844 = vrot.slane %v810, 2
      %v845 = vsel %vm412, %v843, %v844
      %v846 = vrot.slane %v811, 2
      %v847 = vrot.slane %v812, 2
      %v848 = vsel %vm412, %v846, %v847
      %v849 = vrot.slane %v813, 2
      %v850 = vrot.slane %v814, 2
      %v851 = vsel %vm412, %v849, %v850
      %v852 = vrot.slane %v815, 2
      %v853 = vrot.slane %v816, 2
      %v854 = vsel %vm412, %v852, %v853
      %v855 = vrot.slane %v817, 2
      %v856 = vrot.slane %v818, 2
      %v857 = vsel %vm412, %v855, %v856
      %v858 = vrot.slane %v819, 2
      %v859 = vrot.slane %v820, 2
      %v860 = vsel %vm412, %v858, %v859
      %v869 = vadd.f32 %v780, %v839
      %v870 = vadd.f32 %v781, %v842
      %v871 = vadd.f32 %v782, %v845
      %v872 = vadd.f32 %v783, %v848
      %v873 = vadd.f32 %v784, %v851
      %v874 = vadd.f32 %v785, %v854
      %v875 = vadd.f32 %v786, %v857
      %v876 = vadd.f32 %v787, %v860
      %v877 = vld [vmem:[%s2] sm:$0x1]
      %v879 = vperm.slane %v877, 0
      %v881 = vadd.f32 %v869, %v879
      %v882 = vadd.f32 %v870, %v879
      %v883 = vadd.f32 %v871, %v879
      %v884 = vadd.f32 %v872, %v879
      %v885 = vadd.f32 %v873, %v879
      %v886 = vadd.f32 %v874, %v879
      %v887 = vadd.f32 %v875, %v879
      %v888 = vadd.f32 %v876, %v879
      %v889 = vmax.f32 %v881, 0.0
      %v890 = vmax.f32 %v882, 0.0
      %v891 = vmax.f32 %v883, 0.0
      %v892 = vmax.f32 %v884, 0.0
      %v893 = vmax.f32 %v885, 0.0
      %v894 = vmax.f32 %v886, 0.0
      %v895 = vmax.f32 %v887, 0.0
      %v896 = vmax.f32 %v888, 0.0
      %v897 = vpack.c.bf16 %v889, %v889
      %v898 = vpack.c.bf16 %v890, %v890
      %v899 = vpack.c.bf16 %v891, %v891
      %v900 = vpack.c.bf16 %v892, %v892
      %v901 = vpack.c.bf16 %v893, %v893
      %v902 = vpack.c.bf16 %v894, %v894
      %v903 = vpack.c.bf16 %v895, %v895
      %v904 = vpack.c.bf16 %v896, %v896
      %vm905 = vcmask 125952
      %906 = vst.msk [vmem:[%s232] sm:$0xf] %vm905, %v897
      %907 = vst.msk [vmem:[%s232 + $0x4] sm:$0xf] %vm905, %v898
      %908 = vst.msk [vmem:[%s232 + $0x8] sm:$0xf] %vm905, %v899
      %909 = vst.msk [vmem:[%s232 + $0xc] sm:$0xf] %vm905, %v900
      %910 = vst.msk [vmem:[%s232 + $0x10] sm:$0xf] %vm905, %v901
      %911 = vst.msk [vmem:[%s232 + $0x14] sm:$0xf] %vm905, %v902
      %912 = vst.msk [vmem:[%s232 + $0x18] sm:$0xf] %vm905, %v903
      %913 = vst.msk [vmem:[%s232 + $0x1c] sm:$0xf] %vm905, %v904
      %p914 = scmp.eq.s32.totalorder %s21, 0
      // Predicated region
      $region33: #{regstage_forward.13} parent=31 // pred_check
        %p915 = pneg %p914
      $region34: #{regstage_forward.13} parent=31 // pred_check_branch
        %917 = sbr.rel (%p915) target = $region36
      $region35: #{regstage_forward.13} parent=31 // pred_region
        %vm918 = vcmask 122880
        %919 = vst.msk [vmem:[%s236] sm:$0x1] %vm918, 0.0
      $region36: #{regstage_forward.13} parent=31 // pred_fallthru
        _
      %v920 = vld [vmem:[%s236] sm:$0x1]
      %vm921 = vcmask 130048
      %v922 = vsel %vm921, %v889, 0.0
      %v923 = vsel %vm921, %v890, 0.0
      %v924 = vadd.f32 %v922, %v923
      %v925 = vsel %vm921, %v891, 0.0
      %v926 = vadd.f32 %v924, %v925
      %v927 = vsel %vm921, %v892, 0.0
      %v928 = vadd.f32 %v926, %v927
      %v929 = vsel %vm921, %v893, 0.0
      %v930 = vadd.f32 %v928, %v929
      %v931 = vsel %vm921, %v894, 0.0
      %v932 = vadd.f32 %v930, %v931
      %v933 = vsel %vm921, %v895, 0.0
      %v934 = vadd.f32 %v932, %v933
      %v935 = vsel %vm921, %v896, 0.0
      %v936 = vadd.f32 %v934, %v935
      %v937 = vrot.slane %v936, 4
      %v938 = vadd.f32 %v936, %v937
      %v939 = vrot.slane %v938, 2
      %v940 = vadd.f32 %v938, %v939
      %v941 = vrot.slane %v940, 1
      %v942 = vadd.f32 %v940, %v941
      %v943 = vadd.f32 %v920, %v942
      %vm944 = vcmask 122880
      %945 = vst.msk [vmem:[%s236] sm:$0x1] %vm944, %v943
      // Predicated region
      $region37: #{regstage_forward.13} parent=31 // pred_check
        %p946 = pneg %p914
      $region38: #{regstage_forward.13} parent=31 // pred_check_branch
        %948 = sbr.rel (%p946) target = $region40
      $region39: #{regstage_forward.13} parent=31 // pred_region
        %v949 = vld [vmem:[%s236] sm:$0x1]
        %v950 = vmul.f32 %v949, 0.015625
        %951 = vst.msk [vmem:[%s236] sm:$0x1] %vm944, %v950
      $region40: #{regstage_forward.13} parent=31 // pred_fallthru
        _
      %s952 = smul.u32 8, %s21
      %p953 = scmp.lt.s32.totalorder %s20, 1
      %s954 = scalar_select %p953, %s20, 1
      %p955 = scmp.lt.s32.totalorder %s952, 7
      %s956 = scalar_select %p955, %s952, 7
      %s957 = smul.addr %s954, 8
      %s958 = sadd.s32 %s956, %s957
      %s959 = smul.addr %s958, 4
      %s960 = scalar_lea.vmem %s3, %s959
      %p961 = scmp.lt.s32.totalorder %s20, 1
      %s962 = scalar_select %p961, %s20, 1
      %s963 = scalar_lea.vmem %s4, %s962
      // Predicated region
      $region41: #{regstage_forward.13} parent=31 // pred_check
        %p964 = pneg %p118
      $region42: #{regstage_forward.13} parent=31 // pred_check_branch
        %966 = sbr.rel (%p964) target = $region44
      $region43: #{regstage_forward.13} parent=31 // pred_region
        %s967 = smul.u32 8, %s21
      $region44: #{regstage_forward.13} parent=31 // pred_fallthru
        _
      // Predicated region
      $region45: #{regstage_forward.13} parent=31 // pred_check
        %p968 = pneg %p144
      $region46: #{regstage_forward.13} parent=31 // pred_check_branch
        %970 = sbr.rel (%p968) target = $region48
      $region47: #{regstage_forward.13} parent=31 // pred_region
        _
      $region48: #{regstage_forward.13} parent=31 // pred_fallthru
        _
    $region32: #{regstage_forward.13} parent=5 // pred_fallthru
      _
    %p971 = scmp.le.s32.totalorder 2, %s11
    // Predicated region
    $region49: #{regstage_forward.13} parent=5 // pred_check
      %p972 = pneg %p971
    $region50: #{regstage_forward.13} parent=5 // pred_check_branch
      %974 = sbr.rel (%p972) target = $region52
    $region51: #{regstage_forward.13} parent=5 // pred_region
      %s975 = ssub.s32 %s11, 2
      // Predicated region
      $region53: #{regstage_forward.13} parent=51 // pred_check
        %p976 = pneg %p124
      $region54: #{regstage_forward.13} parent=51 // pred_check_branch
        %978 = sbr.rel (%p976) target = $region56
      $region55: #{regstage_forward.13} parent=51 // pred_region
        %s979 = smul.u32 8, %s23
        %p980 = scmp.lt.s32.totalorder %s22, 1
        %s981 = scalar_select %p980, %s22, 1
        %p982 = scmp.lt.s32.totalorder %s979, 7
        %s983 = scalar_select %p982, %s979, 7
        %s984 = smul.addr %s981, 8
        %s985 = sadd.s32 %s983, %s984
        %s986 = smul.addr %s985, 4
        %s987 = scalar_lea.vmem %s3, %s986
      $region56: #{regstage_forward.13} parent=51 // pred_fallthru
        _
      // Predicated region
      $region57: #{regstage_forward.13} parent=51 // pred_check
        %p988 = pneg %p150
      $region58: #{regstage_forward.13} parent=51 // pred_check_branch
        %990 = sbr.rel (%p988) target = $region60
      $region59: #{regstage_forward.13} parent=51 // pred_region
        %p991 = scmp.lt.s32.totalorder %s22, 1
        %s992 = scalar_select %p991, %s22, 1
        %s993 = scalar_lea.vmem %s4, %s992
      $region60: #{regstage_forward.13} parent=51 // pred_fallthru
        _
    $region52: #{regstage_forward.13} parent=5 // pred_fallthru
      _
  $region6: #{regstage_forward.13} parent=0 // loop_footer
    %s15 = sadd.s32 1, %s11
  $region7: #{regstage_forward.13} parent=0 // loop_footer_branch
    %10 = sbr.rel target = $region3
  $region8: #{regstage_forward.13} parent=0 // loop_exit
    _

</llo_original>
